<compile_context>
chip_gen: v5e
topology: v5e:2x2
jax: 0.10.0
libtpu: 0.0.40
codegen_flags: <defaults>
</compile_context>

<pallas_src>
import functools

import jax
import jax.numpy as jnp
from jax.experimental import pallas as pl
from jax.experimental.pallas import tpu as pltpu


LANE = 128
SUBLANE = 8


def _round_up(n, m):
    return ((n + m - 1) // m) * m


def gru_forward_kernel(xflat_ref,
                       wih0_ref, whh0_ref, bih0_ref, bhh0_ref,
                       wih1_ref, whh1_ref, bih1_ref, bhh1_ref,
                       fc1w_ref, fc1b_ref, fc2w_ref, fc2b_ref,
                       out_ref, *, hp, seq_len, batch_p):
    """2-layer GRU recurrence + relu(fc1) + fc2, fully resident in VMEM.

    Gate order follows PyTorch nn.GRU ([r, z, n]); each gate block is padded to
    `hp` (lane-aligned) columns so every slice below sits on a 128-lane
    boundary. Matmul operands are bf16 (MXU-native); accumulation and all
    gate/elementwise math are f32.
    """
    Hp = hp
    T = seq_len
    Bp = batch_p

    xflat = xflat_ref[...]                       # (T*Bp, D_in) bf16, row = t*Bp + b
    whh0 = whh0_ref[...]                         # (Hp, 3*Hp) bf16
    wih1 = wih1_ref[...]                         # (Hp, 3*Hp) bf16
    whh1 = whh1_ref[...]                         # (Hp, 3*Hp) bf16

    # --- Hoisted layer-0 input projection: ONE matmul covers all T steps. ---
    gi0_all = (jnp.dot(xflat, wih0_ref[...], preferred_element_type=jnp.float32)
               + bih0_ref[...])                  # (T*Bp, 3*Hp) f32

    # --- Hoisted bias broadcasts (JAX does not CSE broadcast_in_dim). -------
    bhh0_b = jnp.broadcast_to(bhh0_ref[...], (Bp, 3 * Hp))
    bih1_b = jnp.broadcast_to(bih1_ref[...], (Bp, 3 * Hp))
    bhh1_b = jnp.broadcast_to(bhh1_ref[...], (Bp, 3 * Hp))

    def gate_update(gi, gh, h_prev):
        # gi, gh: (Bp, 3*Hp) f32; slice offsets are multiples of Hp (128-aligned).
        r = jax.nn.sigmoid(gi[:, 0:Hp] + gh[:, 0:Hp])
        z = jax.nn.sigmoid(gi[:, Hp:2 * Hp] + gh[:, Hp:2 * Hp])
        n = jnp.tanh(gi[:, 2 * Hp:3 * Hp] + r * gh[:, 2 * Hp:3 * Hp])
        return (1.0 - z) * n + z * h_prev

    h0 = jnp.zeros((Bp, Hp), jnp.float32)
    h1 = jnp.zeros((Bp, Hp), jnp.float32)
    h0_bf = h0.astype(jnp.bfloat16)
    h1_bf = h1.astype(jnp.bfloat16)

    # Fully unrolled static time loop. Only two matmuls per step sit on the
    # serial dependency chain (h0 @ whh0 and h0_new @ wih1); gh1 = h1 @ whh1
    # depends only on previous-step state, so the scheduler can overlap it with
    # the layer-0 work of the same step.
    # TODO(synk): hold whh0/wih1/whh1 MXU-stationary across the unrolled steps
    # via pltpu.matmul_push_rhs / matmul_acc_lhs / matmul_pop to avoid
    # re-staging the same RHS weights 8x each.
    for t in range(T):
        gh1 = (jnp.dot(h1_bf, whh1, preferred_element_type=jnp.float32)
               + bhh1_b)                                            # off-chain
        gi0 = gi0_all[t * Bp:(t + 1) * Bp, :]                       # (Bp, 3*Hp)
        gh0 = (jnp.dot(h0_bf, whh0, preferred_element_type=jnp.float32)
               + bhh0_b)
        h0 = gate_update(gi0, gh0, h0)                              # layer 0
        h0_bf = h0.astype(jnp.bfloat16)

        gi1 = (jnp.dot(h0_bf, wih1, preferred_element_type=jnp.float32)
               + bih1_b)
        h1 = gate_update(gi1, gh1, h1)                              # layer 1
        h1_bf = h1.astype(jnp.bfloat16)

    # Head: relu(fc1) -> fc2 on the lane-padded hidden state (pad lanes are 0),
    # output store is a full (Bp, Op) = (8, 128) tile: unmasked vst.
    hfc = jnp.maximum(
        jnp.dot(h1_bf, fc1w_ref[...], preferred_element_type=jnp.float32)
        + fc1b_ref[...], 0.0)                                       # (Bp, Hp) f32
    out_ref[...] = (jnp.dot(hfc.astype(jnp.bfloat16), fc2w_ref[...],
                            preferred_element_type=jnp.float32)
                    + fc2b_ref[...])                                # (Bp, Op) f32


def _pad_gates(w, H, Hp):
    """(in, 3H) -> (in, 3*Hp): gate g placed at columns [g*Hp, g*Hp + H)."""
    blocks = [jnp.pad(w[:, g * H:(g + 1) * H], ((0, 0), (0, Hp - H)))
              for g in range(3)]
    return jnp.concatenate(blocks, axis=1)


def _pad_rows(w, rows_p):
    return jnp.pad(w, ((0, rows_p - w.shape[0]), (0, 0)))


def _pack_params(params, Hp, Op):
    """Zero-pad weights to lane-aligned gate blocks; weights bf16, biases f32."""
    H = params["whh0"].shape[0]
    O = params["fc2w"].shape[1]
    bf = jnp.bfloat16

    # TODO(synk): on v5e, consider packing the 3 gates contiguously (3H lanes)
    # and extracting r/z/n with XLU rolls/masks instead of per-gate 128 padding
    # to shrink the recurrent matmul output from 3 MXU tiles to 1.
    wih0_p = _pad_gates(params["wih0"], H, Hp).astype(bf)            # (D_in, 3Hp)
    whh0_p = _pad_rows(_pad_gates(params["whh0"], H, Hp), Hp).astype(bf)
    wih1_p = _pad_rows(_pad_gates(params["wih1"], H, Hp), Hp).astype(bf)
    whh1_p = _pad_rows(_pad_gates(params["whh1"], H, Hp), Hp).astype(bf)

    bih0_p = _pad_gates(params["bih0"], H, Hp)                       # f32
    bhh0_p = _pad_gates(params["bhh0"], H, Hp)
    bih1_p = _pad_gates(params["bih1"], H, Hp)
    bhh1_p = _pad_gates(params["bhh1"], H, Hp)

    fc1w_p = jnp.pad(params["fc1w"], ((0, Hp - H), (0, Hp - H))).astype(bf)
    fc1b_p = jnp.pad(params["fc1b"], ((0, 0), (0, Hp - H)))
    fc2w_p = jnp.pad(params["fc2w"], ((0, Hp - H), (0, Op - O))).astype(bf)
    fc2b_p = jnp.pad(params["fc2b"], ((0, 0), (0, Op - O)))

    return (wih0_p, whh0_p, bih0_p, bhh0_p, wih1_p, whh1_p, bih1_p, bhh1_p,
            fc1w_p, fc1b_p, fc2w_p, fc2b_p)


def gru_model_forward(x, symbol_ids, params):
    """Embedding lookup + concat + layout prep in XLA, then one pallas_call."""
    B, T, _ = x.shape
    H = params["whh0"].shape[0]
    O = params["fc2w"].shape[1]
    Hp = _round_up(H, LANE)
    Op = _round_up(O, LANE)
    Bp = _round_up(B, SUBLANE)

    emb = params["embedding"][symbol_ids]                            # (B, E)
    emb = jnp.broadcast_to(emb[:, None, :], (B, T, emb.shape[-1]))
    x_cat = jnp.concatenate([x, emb], axis=-1).astype(jnp.float32)   # (B, T, D_in)
    # Pad batch to a full sublane tile: every per-step row slice inside the
    # kernel then starts on a multiple of 8, and the output store is full-tile.
    x_cat = jnp.pad(x_cat, ((0, Bp - B), (0, 0), (0, 0)))            # (Bp, T, D_in)
    # Time-major, flattened: row index = t*Bp + b. The kernel runs the whole
    # layer-0 input projection as one out-of-loop matmul and slices per-step
    # rows on the leading (sublane-aligned) axis. bf16 for the MXU.
    x_flat = (jnp.transpose(x_cat, (1, 0, 2))
              .reshape(T * Bp, x_cat.shape[-1])
              .astype(jnp.bfloat16))

    inputs = (x_flat,) + _pack_params(params, Hp, Op)

    kernel = functools.partial(gru_forward_kernel, hp=Hp, seq_len=T, batch_p=Bp)
    # Grid-less, fully VMEM-resident (<1 MiB footprint): correct choice on all
    # of v5e/v6e/v7x.
    # TODO(synk): if B grows beyond a few vregs, add a grid over batch tiles
    # with dimension_semantics=("parallel",) so v7x's two TensorCores split the
    # work; if T grows, switch the unrolled loop to lax.fori_loop(unroll=True)
    # or a time grid axis with h0/h1 in VMEM scratch + pl.when init.
    out_p = pl.pallas_call(
        kernel,
        out_shape=jax.ShapeDtypeStruct((Bp, Op), jnp.float32),
        in_specs=[pl.BlockSpec(memory_space=pltpu.MemorySpace.VMEM)] * len(inputs),
        out_specs=pl.BlockSpec(memory_space=pltpu.MemorySpace.VMEM),
    )(*inputs)
    return out_p[:B, :O]


def gru_model_reference(x, symbol_ids, params):
    """Pure-JAX f32 reference matching PyTorch nn.GRU semantics (validation)."""
    emb = params["embedding"][symbol_ids]
    B, T, _ = x.shape
    emb = jnp.broadcast_to(emb[:, None, :], (B, T, emb.shape[-1]))
    xc = jnp.concatenate([x, emb], axis=-1).astype(jnp.float32)
    H = params["whh0"].shape[0]

    def cell(x_t, h, wih, whh, bih, bhh):
        gi = x_t @ wih + bih
        gh = h @ whh + bhh
        r = jax.nn.sigmoid(gi[:, :H] + gh[:, :H])
        z = jax.nn.sigmoid(gi[:, H:2 * H] + gh[:, H:2 * H])
        n = jnp.tanh(gi[:, 2 * H:] + r * gh[:, 2 * H:])
        return (1.0 - z) * n + z * h

    h0 = jnp.zeros((B, H), jnp.float32)
    h1 = jnp.zeros((B, H), jnp.float32)
    for t in range(T):
        h0 = cell(xc[:, t, :], h0, params["wih0"], params["whh0"],
                  params["bih0"], params["bhh0"])
        h1 = cell(h0, h1, params["wih1"], params["whh1"],
                  params["bih1"], params["bhh1"])
    hfc = jnp.maximum(h1 @ params["fc1w"] + params["fc1b"], 0.0)
    return hfc @ params["fc2w"] + params["fc2b"]


def init_params(key, input_dim, hidden_dim, output_dim, embedding_dim, num_symbols):
    """Deterministic synthetic parameters matching the PyTorch module shapes.

    GRU/FC weights are stored pre-transposed as (in_features, out_features);
    biases as (1, F) rows. Gate column order is PyTorch's [r, z, n].
    """
    d_in = input_dim + embedding_dim
    scale = 1.0 / jnp.sqrt(jnp.float32(hidden_dim))
    keys = jax.random.split(key, 16)

    def u(k, shape):
        return jax.random.uniform(k, shape, jnp.float32, -scale, scale)

    return {
        "embedding": jax.random.normal(keys[0], (num_symbols, embedding_dim),
                                       jnp.float32),
        "wih0": u(keys[1], (d_in, 3 * hidden_dim)),
        "whh0": u(keys[2], (hidden_dim, 3 * hidden_dim)),
        "bih0": u(keys[3], (1, 3 * hidden_dim)),
        "bhh0": u(keys[4], (1, 3 * hidden_dim)),
        "wih1": u(keys[5], (hidden_dim, 3 * hidden_dim)),
        "whh1": u(keys[6], (hidden_dim, 3 * hidden_dim)),
        "bih1": u(keys[7], (1, 3 * hidden_dim)),
        "bhh1": u(keys[8], (1, 3 * hidden_dim)),
        "fc1w": u(keys[9], (hidden_dim, hidden_dim)),
        "fc1b": u(keys[10], (1, hidden_dim)),
        "fc2w": u(keys[11], (hidden_dim, output_dim)),
        "fc2b": u(keys[12], (1, output_dim)),
    }


if __name__ == "__main__":
    batch, seq = 2, 8
    input_dim, hidden_dim, output_dim = 16, 32, 4
    embedding_dim, num_symbols = 8, 10

    root = jax.random.PRNGKey(0)
    k_params, k_x, k_sym = jax.random.split(root, 3)

    params = init_params(k_params, input_dim, hidden_dim, output_dim,
                         embedding_dim, num_symbols)
    x = jax.random.normal(k_x, (batch, seq, input_dim), jnp.float32)
    symbol_ids = jax.random.randint(k_sym, (batch,), 0, num_symbols,
                                    dtype=jnp.int32)

    out = jax.jit(gru_model_forward)(x, symbol_ids, params)
    out = jax.block_until_ready(out)
    assert out.shape == (batch, output_dim)

    ref = gru_model_reference(x, symbol_ids, params)
    # bf16 matmul operands (f32 accumulation, f32 gate math) vs. the pure-f32
    # reference: tolerance relaxed from 1e-3 accordingly.
    assert jnp.allclose(out, ref, atol=1e-2, rtol=1e-2), (out, ref)
    print("KERNEL_OK")
</pallas_src>

<mosaic_0001>
module attributes {stable_mosaic.version = 11 : i64} {
  func.func @gru_forward_kernel(%arg0: memref<64x24xbf16, #tpu.memory_space<vmem>>, %arg1: memref<24x384xbf16, #tpu.memory_space<vmem>>, %arg2: memref<128x384xbf16, #tpu.memory_space<vmem>>, %arg3: memref<1x384xf32, #tpu.memory_space<vmem>>, %arg4: memref<1x384xf32, #tpu.memory_space<vmem>>, %arg5: memref<128x384xbf16, #tpu.memory_space<vmem>>, %arg6: memref<128x384xbf16, #tpu.memory_space<vmem>>, %arg7: memref<1x384xf32, #tpu.memory_space<vmem>>, %arg8: memref<1x384xf32, #tpu.memory_space<vmem>>, %arg9: memref<128x128xbf16, #tpu.memory_space<vmem>>, %arg10: memref<1x128xf32, #tpu.memory_space<vmem>>, %arg11: memref<128x128xbf16, #tpu.memory_space<vmem>>, %arg12: memref<1x128xf32, #tpu.memory_space<vmem>>, %arg13: memref<8x128xf32, #tpu.memory_space<vmem>>) attributes {dimension_semantics = [], scalar_prefetch = 0 : i64, scratch_operands = 0 : i64, tpu.core_type = #tpu.core_type<tc>} {
    %c0 = arith.constant 0 : index
    %c0_0 = arith.constant 0 : index
    %0 = vector.load %arg0[%c0, %c0_0] : memref<64x24xbf16, #tpu.memory_space<vmem>>, vector<64x24xbf16>
    %c0_1 = arith.constant 0 : index
    %c0_2 = arith.constant 0 : index
    %1 = vector.load %arg2[%c0_1, %c0_2] : memref<128x384xbf16, #tpu.memory_space<vmem>>, vector<128x384xbf16>
    %c0_3 = arith.constant 0 : index
    %c0_4 = arith.constant 0 : index
    %2 = vector.load %arg5[%c0_3, %c0_4] : memref<128x384xbf16, #tpu.memory_space<vmem>>, vector<128x384xbf16>
    %c0_5 = arith.constant 0 : index
    %c0_6 = arith.constant 0 : index
    %3 = vector.load %arg6[%c0_5, %c0_6] : memref<128x384xbf16, #tpu.memory_space<vmem>>, vector<128x384xbf16>
    %c0_7 = arith.constant 0 : index
    %c0_8 = arith.constant 0 : index
    %4 = vector.load %arg1[%c0_7, %c0_8] : memref<24x384xbf16, #tpu.memory_space<vmem>>, vector<24x384xbf16>
    %cst = arith.constant dense<0.000000e+00> : vector<64x384xf32>
    %5 = tpu.matmul %0, %4, %cst {dimension_numbers = #tpu.dot_dimension_numbers<[1], [0], [0], [1], [0, 0, 1, 1], [], []>} : vector<64x24xbf16>, vector<24x384xbf16>, vector<64x384xf32> -> vector<64x384xf32>
    %c0_9 = arith.constant 0 : index
    %c0_10 = arith.constant 0 : index
    %6 = vector.load %arg3[%c0_9, %c0_10] : memref<1x384xf32, #tpu.memory_space<vmem>>, vector<1x384xf32>
    %7 = vector.broadcast %6 : vector<1x384xf32> to vector<64x384xf32>
    %8 = arith.addf %5, %7 : vector<64x384xf32>
    %c0_11 = arith.constant 0 : index
    %c0_12 = arith.constant 0 : index
    %9 = vector.load %arg4[%c0_11, %c0_12] : memref<1x384xf32, #tpu.memory_space<vmem>>, vector<1x384xf32>
    %10 = vector.shape_cast %9 : vector<1x384xf32> to vector<1x384xf32>
    %11 = vector.broadcast %10 : vector<1x384xf32> to vector<8x384xf32>
    %c0_13 = arith.constant 0 : index
    %c0_14 = arith.constant 0 : index
    %12 = vector.load %arg7[%c0_13, %c0_14] : memref<1x384xf32, #tpu.memory_space<vmem>>, vector<1x384xf32>
    %13 = vector.shape_cast %12 : vector<1x384xf32> to vector<1x384xf32>
    %14 = vector.broadcast %13 : vector<1x384xf32> to vector<8x384xf32>
    %c0_15 = arith.constant 0 : index
    %c0_16 = arith.constant 0 : index
    %15 = vector.load %arg8[%c0_15, %c0_16] : memref<1x384xf32, #tpu.memory_space<vmem>>, vector<1x384xf32>
    %16 = vector.shape_cast %15 : vector<1x384xf32> to vector<1x384xf32>
    %17 = vector.broadcast %16 : vector<1x384xf32> to vector<8x384xf32>
    %cst_17 = arith.constant 0.000000e+00 : f32
    %18 = vector.broadcast %cst_17 : f32 to vector<8x128xf32>
    %cst_18 = arith.constant 0.000000e+00 : f32
    %19 = vector.broadcast %cst_18 : f32 to vector<8x128xf32>
    %20 = arith.truncf %18 : vector<8x128xf32> to vector<8x128xbf16>
    %21 = arith.truncf %19 : vector<8x128xf32> to vector<8x128xbf16>
    %cst_19 = arith.constant dense<0.000000e+00> : vector<8x384xf32>
    %22 = tpu.matmul %21, %3, %cst_19 {dimension_numbers = #tpu.dot_dimension_numbers<[1], [0], [0], [1], [0, 0, 1, 1], [], []>} : vector<8x128xbf16>, vector<128x384xbf16>, vector<8x384xf32> -> vector<8x384xf32>
    %23 = arith.addf %22, %17 : vector<8x384xf32>
    %24 = vector.extract_strided_slice %8 {offsets = [0, 0], sizes = [8, 384], strides = [1, 1]} : vector<64x384xf32> to vector<8x384xf32>
    %cst_20 = arith.constant dense<0.000000e+00> : vector<8x384xf32>
    %25 = tpu.matmul %20, %1, %cst_20 {dimension_numbers = #tpu.dot_dimension_numbers<[1], [0], [0], [1], [0, 0, 1, 1], [], []>} : vector<8x128xbf16>, vector<128x384xbf16>, vector<8x384xf32> -> vector<8x384xf32>
    %26 = arith.addf %25, %11 : vector<8x384xf32>
    %27 = vector.extract_strided_slice %24 {offsets = [0, 0], sizes = [8, 128], strides = [1, 1]} : vector<8x384xf32> to vector<8x128xf32>
    %28 = vector.extract_strided_slice %26 {offsets = [0, 0], sizes = [8, 128], strides = [1, 1]} : vector<8x384xf32> to vector<8x128xf32>
    %29 = arith.addf %27, %28 : vector<8x128xf32>
    %30 = arith.negf %29 : vector<8x128xf32>
    %31 = math.exp %30 : vector<8x128xf32>
    %cst_21 = arith.constant 1.000000e+00 : f32
    %32 = vector.broadcast %cst_21 : f32 to vector<8x128xf32>
    %33 = arith.addf %32, %31 : vector<8x128xf32>
    %34 = arith.divf %32, %33 : vector<8x128xf32>
    %35 = vector.extract_strided_slice %24 {offsets = [0, 128], sizes = [8, 128], strides = [1, 1]} : vector<8x384xf32> to vector<8x128xf32>
    %36 = vector.extract_strided_slice %26 {offsets = [0, 128], sizes = [8, 128], strides = [1, 1]} : vector<8x384xf32> to vector<8x128xf32>
    %37 = arith.addf %35, %36 : vector<8x128xf32>
    %38 = arith.negf %37 : vector<8x128xf32>
    %39 = math.exp %38 : vector<8x128xf32>
    %cst_22 = arith.constant 1.000000e+00 : f32
    %40 = vector.broadcast %cst_22 : f32 to vector<8x128xf32>
    %41 = arith.addf %40, %39 : vector<8x128xf32>
    %42 = arith.divf %40, %41 : vector<8x128xf32>
    %43 = vector.extract_strided_slice %24 {offsets = [0, 256], sizes = [8, 128], strides = [1, 1]} : vector<8x384xf32> to vector<8x128xf32>
    %44 = vector.extract_strided_slice %26 {offsets = [0, 256], sizes = [8, 128], strides = [1, 1]} : vector<8x384xf32> to vector<8x128xf32>
    %45 = arith.mulf %34, %44 : vector<8x128xf32>
    %46 = arith.addf %43, %45 : vector<8x128xf32>
    %47 = math.tanh %46 : vector<8x128xf32>
    %cst_23 = arith.constant 1.000000e+00 : f32
    %48 = vector.broadcast %cst_23 : f32 to vector<8x128xf32>
    %49 = arith.subf %48, %42 : vector<8x128xf32>
    %50 = arith.mulf %49, %47 : vector<8x128xf32>
    %51 = arith.mulf %42, %18 : vector<8x128xf32>
    %52 = arith.addf %50, %51 : vector<8x128xf32>
    %53 = arith.truncf %52 : vector<8x128xf32> to vector<8x128xbf16>
    %cst_24 = arith.constant dense<0.000000e+00> : vector<8x384xf32>
    %54 = tpu.matmul %53, %2, %cst_24 {dimension_numbers = #tpu.dot_dimension_numbers<[1], [0], [0], [1], [0, 0, 1, 1], [], []>} : vector<8x128xbf16>, vector<128x384xbf16>, vector<8x384xf32> -> vector<8x384xf32>
    %55 = arith.addf %54, %14 : vector<8x384xf32>
    %56 = vector.extract_strided_slice %55 {offsets = [0, 0], sizes = [8, 128], strides = [1, 1]} : vector<8x384xf32> to vector<8x128xf32>
    %57 = vector.extract_strided_slice %23 {offsets = [0, 0], sizes = [8, 128], strides = [1, 1]} : vector<8x384xf32> to vector<8x128xf32>
    %58 = arith.addf %56, %57 : vector<8x128xf32>
    %59 = arith.negf %58 : vector<8x128xf32>
    %60 = math.exp %59 : vector<8x128xf32>
    %cst_25 = arith.constant 1.000000e+00 : f32
    %61 = vector.broadcast %cst_25 : f32 to vector<8x128xf32>
    %62 = arith.addf %61, %60 : vector<8x128xf32>
    %63 = arith.divf %61, %62 : vector<8x128xf32>
    %64 = vector.extract_strided_slice %55 {offsets = [0, 128], sizes = [8, 128], strides = [1, 1]} : vector<8x384xf32> to vector<8x128xf32>
    %65 = vector.extract_strided_slice %23 {offsets = [0, 128], sizes = [8, 128], strides = [1, 1]} : vector<8x384xf32> to vector<8x128xf32>
    %66 = arith.addf %64, %65 : vector<8x128xf32>
    %67 = arith.negf %66 : vector<8x128xf32>
    %68 = math.exp %67 : vector<8x128xf32>
    %cst_26 = arith.constant 1.000000e+00 : f32
    %69 = vector.broadcast %cst_26 : f32 to vector<8x128xf32>
    %70 = arith.addf %69, %68 : vector<8x128xf32>
    %71 = arith.divf %69, %70 : vector<8x128xf32>
    %72 = vector.extract_strided_slice %55 {offsets = [0, 256], sizes = [8, 128], strides = [1, 1]} : vector<8x384xf32> to vector<8x128xf32>
    %73 = vector.extract_strided_slice %23 {offsets = [0, 256], sizes = [8, 128], strides = [1, 1]} : vector<8x384xf32> to vector<8x128xf32>
    %74 = arith.mulf %63, %73 : vector<8x128xf32>
    %75 = arith.addf %72, %74 : vector<8x128xf32>
    %76 = math.tanh %75 : vector<8x128xf32>
    %cst_27 = arith.constant 1.000000e+00 : f32
    %77 = vector.broadcast %cst_27 : f32 to vector<8x128xf32>
    %78 = arith.subf %77, %71 : vector<8x128xf32>
    %79 = arith.mulf %78, %76 : vector<8x128xf32>
    %80 = arith.mulf %71, %19 : vector<8x128xf32>
    %81 = arith.addf %79, %80 : vector<8x128xf32>
    %82 = arith.truncf %81 : vector<8x128xf32> to vector<8x128xbf16>
    %cst_28 = arith.constant dense<0.000000e+00> : vector<8x384xf32>
    %83 = tpu.matmul %82, %3, %cst_28 {dimension_numbers = #tpu.dot_dimension_numbers<[1], [0], [0], [1], [0, 0, 1, 1], [], []>} : vector<8x128xbf16>, vector<128x384xbf16>, vector<8x384xf32> -> vector<8x384xf32>
    %84 = arith.addf %83, %17 : vector<8x384xf32>
    %85 = vector.extract_strided_slice %8 {offsets = [8, 0], sizes = [8, 384], strides = [1, 1]} : vector<64x384xf32> to vector<8x384xf32>
    %cst_29 = arith.constant dense<0.000000e+00> : vector<8x384xf32>
    %86 = tpu.matmul %53, %1, %cst_29 {dimension_numbers = #tpu.dot_dimension_numbers<[1], [0], [0], [1], [0, 0, 1, 1], [], []>} : vector<8x128xbf16>, vector<128x384xbf16>, vector<8x384xf32> -> vector<8x384xf32>
    %87 = arith.addf %86, %11 : vector<8x384xf32>
    %88 = vector.extract_strided_slice %85 {offsets = [0, 0], sizes = [8, 128], strides = [1, 1]} : vector<8x384xf32> to vector<8x128xf32>
    %89 = vector.extract_strided_slice %87 {offsets = [0, 0], sizes = [8, 128], strides = [1, 1]} : vector<8x384xf32> to vector<8x128xf32>
    %90 = arith.addf %88, %89 : vector<8x128xf32>
    %91 = arith.negf %90 : vector<8x128xf32>
    %92 = math.exp %91 : vector<8x128xf32>
    %cst_30 = arith.constant 1.000000e+00 : f32
    %93 = vector.broadcast %cst_30 : f32 to vector<8x128xf32>
    %94 = arith.addf %93, %92 : vector<8x128xf32>
    %95 = arith.divf %93, %94 : vector<8x128xf32>
    %96 = vector.extract_strided_slice %85 {offsets = [0, 128], sizes = [8, 128], strides = [1, 1]} : vector<8x384xf32> to vector<8x128xf32>
    %97 = vector.extract_strided_slice %87 {offsets = [0, 128], sizes = [8, 128], strides = [1, 1]} : vector<8x384xf32> to vector<8x128xf32>
    %98 = arith.addf %96, %97 : vector<8x128xf32>
    %99 = arith.negf %98 : vector<8x128xf32>
    %100 = math.exp %99 : vector<8x128xf32>
    %cst_31 = arith.constant 1.000000e+00 : f32
    %101 = vector.broadcast %cst_31 : f32 to vector<8x128xf32>
    %102 = arith.addf %101, %100 : vector<8x128xf32>
    %103 = arith.divf %101, %102 : vector<8x128xf32>
    %104 = vector.extract_strided_slice %85 {offsets = [0, 256], sizes = [8, 128], strides = [1, 1]} : vector<8x384xf32> to vector<8x128xf32>
    %105 = vector.extract_strided_slice %87 {offsets = [0, 256], sizes = [8, 128], strides = [1, 1]} : vector<8x384xf32> to vector<8x128xf32>
    %106 = arith.mulf %95, %105 : vector<8x128xf32>
    %107 = arith.addf %104, %106 : vector<8x128xf32>
    %108 = math.tanh %107 : vector<8x128xf32>
    %cst_32 = arith.constant 1.000000e+00 : f32
    %109 = vector.broadcast %cst_32 : f32 to vector<8x128xf32>
    %110 = arith.subf %109, %103 : vector<8x128xf32>
    %111 = arith.mulf %110, %108 : vector<8x128xf32>
    %112 = arith.mulf %103, %52 : vector<8x128xf32>
    %113 = arith.addf %111, %112 : vector<8x128xf32>
    %114 = arith.truncf %113 : vector<8x128xf32> to vector<8x128xbf16>
    %cst_33 = arith.constant dense<0.000000e+00> : vector<8x384xf32>
    %115 = tpu.matmul %114, %2, %cst_33 {dimension_numbers = #tpu.dot_dimension_numbers<[1], [0], [0], [1], [0, 0, 1, 1], [], []>} : vector<8x128xbf16>, vector<128x384xbf16>, vector<8x384xf32> -> vector<8x384xf32>
    %116 = arith.addf %115, %14 : vector<8x384xf32>
    %117 = vector.extract_strided_slice %116 {offsets = [0, 0], sizes = [8, 128], strides = [1, 1]} : vector<8x384xf32> to vector<8x128xf32>
    %118 = vector.extract_strided_slice %84 {offsets = [0, 0], sizes = [8, 128], strides = [1, 1]} : vector<8x384xf32> to vector<8x128xf32>
    %119 = arith.addf %117, %118 : vector<8x128xf32>
    %120 = arith.negf %119 : vector<8x128xf32>
    %121 = math.exp %120 : vector<8x128xf32>
    %cst_34 = arith.constant 1.000000e+00 : f32
    %122 = vector.broadcast %cst_34 : f32 to vector<8x128xf32>
    %123 = arith.addf %122, %121 : vector<8x128xf32>
    %124 = arith.divf %122, %123 : vector<8x128xf32>
    %125 = vector.extract_strided_slice %116 {offsets = [0, 128], sizes = [8, 128], strides = [1, 1]} : vector<8x384xf32> to vector<8x128xf32>
    %126 = vector.extract_strided_slice %84 {offsets = [0, 128], sizes = [8, 128], strides = [1, 1]} : vector<8x384xf32> to vector<8x128xf32>
    %127 = arith.addf %125, %126 : vector<8x128xf32>
    %128 = arith.negf %127 : vector<8x128xf32>
    %129 = math.exp %128 : vector<8x128xf32>
    %cst_35 = arith.constant 1.000000e+00 : f32
    %130 = vector.broadcast %cst_35 : f32 to vector<8x128xf32>
    %131 = arith.addf %130, %129 : vector<8x128xf32>
    %132 = arith.divf %130, %131 : vector<8x128xf32>
    %133 = vector.extract_strided_slice %116 {offsets = [0, 256], sizes = [8, 128], strides = [1, 1]} : vector<8x384xf32> to vector<8x128xf32>
    %134 = vector.extract_strided_slice %84 {offsets = [0, 256], sizes = [8, 128], strides = [1, 1]} : vector<8x384xf32> to vector<8x128xf32>
    %135 = arith.mulf %124, %134 : vector<8x128xf32>
    %136 = arith.addf %133, %135 : vector<8x128xf32>
    %137 = math.tanh %136 : vector<8x128xf32>
    %cst_36 = arith.constant 1.000000e+00 : f32
    %138 = vector.broadcast %cst_36 : f32 to vector<8x128xf32>
    %139 = arith.subf %138, %132 : vector<8x128xf32>
    %140 = arith.mulf %139, %137 : vector<8x128xf32>
    %141 = arith.mulf %132, %81 : vector<8x128xf32>
    %142 = arith.addf %140, %141 : vector<8x128xf32>
    %143 = arith.truncf %142 : vector<8x128xf32> to vector<8x128xbf16>
    %cst_37 = arith.constant dense<0.000000e+00> : vector<8x384xf32>
    %144 = tpu.matmul %143, %3, %cst_37 {dimension_numbers = #tpu.dot_dimension_numbers<[1], [0], [0], [1], [0, 0, 1, 1], [], []>} : vector<8x128xbf16>, vector<128x384xbf16>, vector<8x384xf32> -> vector<8x384xf32>
    %145 = arith.addf %144, %17 : vector<8x384xf32>
    %146 = vector.extract_strided_slice %8 {offsets = [16, 0], sizes = [8, 384], strides = [1, 1]} : vector<64x384xf32> to vector<8x384xf32>
    %cst_38 = arith.constant dense<0.000000e+00> : vector<8x384xf32>
    %147 = tpu.matmul %114, %1, %cst_38 {dimension_numbers = #tpu.dot_dimension_numbers<[1], [0], [0], [1], [0, 0, 1, 1], [], []>} : vector<8x128xbf16>, vector<128x384xbf16>, vector<8x384xf32> -> vector<8x384xf32>
    %148 = arith.addf %147, %11 : vector<8x384xf32>
    %149 = vector.extract_strided_slice %146 {offsets = [0, 0], sizes = [8, 128], strides = [1, 1]} : vector<8x384xf32> to vector<8x128xf32>
    %150 = vector.extract_strided_slice %148 {offsets = [0, 0], sizes = [8, 128], strides = [1, 1]} : vector<8x384xf32> to vector<8x128xf32>
    %151 = arith.addf %149, %150 : vector<8x128xf32>
    %152 = arith.negf %151 : vector<8x128xf32>
    %153 = math.exp %152 : vector<8x128xf32>
    %cst_39 = arith.constant 1.000000e+00 : f32
    %154 = vector.broadcast %cst_39 : f32 to vector<8x128xf32>
    %155 = arith.addf %154, %153 : vector<8x128xf32>
    %156 = arith.divf %154, %155 : vector<8x128xf32>
    %157 = vector.extract_strided_slice %146 {offsets = [0, 128], sizes = [8, 128], strides = [1, 1]} : vector<8x384xf32> to vector<8x128xf32>
    %158 = vector.extract_strided_slice %148 {offsets = [0, 128], sizes = [8, 128], strides = [1, 1]} : vector<8x384xf32> to vector<8x128xf32>
    %159 = arith.addf %157, %158 : vector<8x128xf32>
    %160 = arith.negf %159 : vector<8x128xf32>
    %161 = math.exp %160 : vector<8x128xf32>
    %cst_40 = arith.constant 1.000000e+00 : f32
    %162 = vector.broadcast %cst_40 : f32 to vector<8x128xf32>
    %163 = arith.addf %162, %161 : vector<8x128xf32>
    %164 = arith.divf %162, %163 : vector<8x128xf32>
    %165 = vector.extract_strided_slice %146 {offsets = [0, 256], sizes = [8, 128], strides = [1, 1]} : vector<8x384xf32> to vector<8x128xf32>
    %166 = vector.extract_strided_slice %148 {offsets = [0, 256], sizes = [8, 128], strides = [1, 1]} : vector<8x384xf32> to vector<8x128xf32>
    %167 = arith.mulf %156, %166 : vector<8x128xf32>
    %168 = arith.addf %165, %167 : vector<8x128xf32>
    %169 = math.tanh %168 : vector<8x128xf32>
    %cst_41 = arith.constant 1.000000e+00 : f32
    %170 = vector.broadcast %cst_41 : f32 to vector<8x128xf32>
    %171 = arith.subf %170, %164 : vector<8x128xf32>
    %172 = arith.mulf %171, %169 : vector<8x128xf32>
    %173 = arith.mulf %164, %113 : vector<8x128xf32>
    %174 = arith.addf %172, %173 : vector<8x128xf32>
    %175 = arith.truncf %174 : vector<8x128xf32> to vector<8x128xbf16>
    %cst_42 = arith.constant dense<0.000000e+00> : vector<8x384xf32>
    %176 = tpu.matmul %175, %2, %cst_42 {dimension_numbers = #tpu.dot_dimension_numbers<[1], [0], [0], [1], [0, 0, 1, 1], [], []>} : vector<8x128xbf16>, vector<128x384xbf16>, vector<8x384xf32> -> vector<8x384xf32>
    %177 = arith.addf %176, %14 : vector<8x384xf32>
    %178 = vector.extract_strided_slice %177 {offsets = [0, 0], sizes = [8, 128], strides = [1, 1]} : vector<8x384xf32> to vector<8x128xf32>
    %179 = vector.extract_strided_slice %145 {offsets = [0, 0], sizes = [8, 128], strides = [1, 1]} : vector<8x384xf32> to vector<8x128xf32>
    %180 = arith.addf %178, %179 : vector<8x128xf32>
    %181 = arith.negf %180 : vector<8x128xf32>
    %182 = math.exp %181 : vector<8x128xf32>
    %cst_43 = arith.constant 1.000000e+00 : f32
    %183 = vector.broadcast %cst_43 : f32 to vector<8x128xf32>
    %184 = arith.addf %183, %182 : vector<8x128xf32>
    %185 = arith.divf %183, %184 : vector<8x128xf32>
    %186 = vector.extract_strided_slice %177 {offsets = [0, 128], sizes = [8, 128], strides = [1, 1]} : vector<8x384xf32> to vector<8x128xf32>
    %187 = vector.extract_strided_slice %145 {offsets = [0, 128], sizes = [8, 128], strides = [1, 1]} : vector<8x384xf32> to vector<8x128xf32>
    %188 = arith.addf %186, %187 : vector<8x128xf32>
    %189 = arith.negf %188 : vector<8x128xf32>
    %190 = math.exp %189 : vector<8x128xf32>
    %cst_44 = arith.constant 1.000000e+00 : f32
    %191 = vector.broadcast %cst_44 : f32 to vector<8x128xf32>
    %192 = arith.addf %191, %190 : vector<8x128xf32>
    %193 = arith.divf %191, %192 : vector<8x128xf32>
    %194 = vector.extract_strided_slice %177 {offsets = [0, 256], sizes = [8, 128], strides = [1, 1]} : vector<8x384xf32> to vector<8x128xf32>
    %195 = vector.extract_strided_slice %145 {offsets = [0, 256], sizes = [8, 128], strides = [1, 1]} : vector<8x384xf32> to vector<8x128xf32>
    %196 = arith.mulf %185, %195 : vector<8x128xf32>
    %197 = arith.addf %194, %196 : vector<8x128xf32>
    %198 = math.tanh %197 : vector<8x128xf32>
    %cst_45 = arith.constant 1.000000e+00 : f32
    %199 = vector.broadcast %cst_45 : f32 to vector<8x128xf32>
    %200 = arith.subf %199, %193 : vector<8x128xf32>
    %201 = arith.mulf %200, %198 : vector<8x128xf32>
    %202 = arith.mulf %193, %142 : vector<8x128xf32>
    %203 = arith.addf %201, %202 : vector<8x128xf32>
    %204 = arith.truncf %203 : vector<8x128xf32> to vector<8x128xbf16>
    %cst_46 = arith.constant dense<0.000000e+00> : vector<8x384xf32>
    %205 = tpu.matmul %204, %3, %cst_46 {dimension_numbers = #tpu.dot_dimension_numbers<[1], [0], [0], [1], [0, 0, 1, 1], [], []>} : vector<8x128xbf16>, vector<128x384xbf16>, vector<8x384xf32> -> vector<8x384xf32>
    %206 = arith.addf %205, %17 : vector<8x384xf32>
    %207 = vector.extract_strided_slice %8 {offsets = [24, 0], sizes = [8, 384], strides = [1, 1]} : vector<64x384xf32> to vector<8x384xf32>
    %cst_47 = arith.constant dense<0.000000e+00> : vector<8x384xf32>
    %208 = tpu.matmul %175, %1, %cst_47 {dimension_numbers = #tpu.dot_dimension_numbers<[1], [0], [0], [1], [0, 0, 1, 1], [], []>} : vector<8x128xbf16>, vector<128x384xbf16>, vector<8x384xf32> -> vector<8x384xf32>
    %209 = arith.addf %208, %11 : vector<8x384xf32>
    %210 = vector.extract_strided_slice %207 {offsets = [0, 0], sizes = [8, 128], strides = [1, 1]} : vector<8x384xf32> to vector<8x128xf32>
    %211 = vector.extract_strided_slice %209 {offsets = [0, 0], sizes = [8, 128], strides = [1, 1]} : vector<8x384xf32> to vector<8x128xf32>
    %212 = arith.addf %210, %211 : vector<8x128xf32>
    %213 = arith.negf %212 : vector<8x128xf32>
    %214 = math.exp %213 : vector<8x128xf32>
    %cst_48 = arith.constant 1.000000e+00 : f32
    %215 = vector.broadcast %cst_48 : f32 to vector<8x128xf32>
    %216 = arith.addf %215, %214 : vector<8x128xf32>
    %217 = arith.divf %215, %216 : vector<8x128xf32>
    %218 = vector.extract_strided_slice %207 {offsets = [0, 128], sizes = [8, 128], strides = [1, 1]} : vector<8x384xf32> to vector<8x128xf32>
    %219 = vector.extract_strided_slice %209 {offsets = [0, 128], sizes = [8, 128], strides = [1, 1]} : vector<8x384xf32> to vector<8x128xf32>
    %220 = arith.addf %218, %219 : vector<8x128xf32>
    %221 = arith.negf %220 : vector<8x128xf32>
    %222 = math.exp %221 : vector<8x128xf32>
    %cst_49 = arith.constant 1.000000e+00 : f32
    %223 = vector.broadcast %cst_49 : f32 to vector<8x128xf32>
    %224 = arith.addf %223, %222 : vector<8x128xf32>
    %225 = arith.divf %223, %224 : vector<8x128xf32>
    %226 = vector.extract_strided_slice %207 {offsets = [0, 256], sizes = [8, 128], strides = [1, 1]} : vector<8x384xf32> to vector<8x128xf32>
    %227 = vector.extract_strided_slice %209 {offsets = [0, 256], sizes = [8, 128], strides = [1, 1]} : vector<8x384xf32> to vector<8x128xf32>
    %228 = arith.mulf %217, %227 : vector<8x128xf32>
    %229 = arith.addf %226, %228 : vector<8x128xf32>
    %230 = math.tanh %229 : vector<8x128xf32>
    %cst_50 = arith.constant 1.000000e+00 : f32
    %231 = vector.broadcast %cst_50 : f32 to vector<8x128xf32>
    %232 = arith.subf %231, %225 : vector<8x128xf32>
    %233 = arith.mulf %232, %230 : vector<8x128xf32>
    %234 = arith.mulf %225, %174 : vector<8x128xf32>
    %235 = arith.addf %233, %234 : vector<8x128xf32>
    %236 = arith.truncf %235 : vector<8x128xf32> to vector<8x128xbf16>
    %cst_51 = arith.constant dense<0.000000e+00> : vector<8x384xf32>
    %237 = tpu.matmul %236, %2, %cst_51 {dimension_numbers = #tpu.dot_dimension_numbers<[1], [0], [0], [1], [0, 0, 1, 1], [], []>} : vector<8x128xbf16>, vector<128x384xbf16>, vector<8x384xf32> -> vector<8x384xf32>
    %238 = arith.addf %237, %14 : vector<8x384xf32>
    %239 = vector.extract_strided_slice %238 {offsets = [0, 0], sizes = [8, 128], strides = [1, 1]} : vector<8x384xf32> to vector<8x128xf32>
    %240 = vector.extract_strided_slice %206 {offsets = [0, 0], sizes = [8, 128], strides = [1, 1]} : vector<8x384xf32> to vector<8x128xf32>
    %241 = arith.addf %239, %240 : vector<8x128xf32>
    %242 = arith.negf %241 : vector<8x128xf32>
    %243 = math.exp %242 : vector<8x128xf32>
    %cst_52 = arith.constant 1.000000e+00 : f32
    %244 = vector.broadcast %cst_52 : f32 to vector<8x128xf32>
    %245 = arith.addf %244, %243 : vector<8x128xf32>
    %246 = arith.divf %244, %245 : vector<8x128xf32>
    %247 = vector.extract_strided_slice %238 {offsets = [0, 128], sizes = [8, 128], strides = [1, 1]} : vector<8x384xf32> to vector<8x128xf32>
    %248 = vector.extract_strided_slice %206 {offsets = [0, 128], sizes = [8, 128], strides = [1, 1]} : vector<8x384xf32> to vector<8x128xf32>
    %249 = arith.addf %247, %248 : vector<8x128xf32>
    %250 = arith.negf %249 : vector<8x128xf32>
    %251 = math.exp %250 : vector<8x128xf32>
    %cst_53 = arith.constant 1.000000e+00 : f32
    %252 = vector.broadcast %cst_53 : f32 to vector<8x128xf32>
    %253 = arith.addf %252, %251 : vector<8x128xf32>
    %254 = arith.divf %252, %253 : vector<8x128xf32>
    %255 = vector.extract_strided_slice %238 {offsets = [0, 256], sizes = [8, 128], strides = [1, 1]} : vector<8x384xf32> to vector<8x128xf32>
    %256 = vector.extract_strided_slice %206 {offsets = [0, 256], sizes = [8, 128], strides = [1, 1]} : vector<8x384xf32> to vector<8x128xf32>
    %257 = arith.mulf %246, %256 : vector<8x128xf32>
    %258 = arith.addf %255, %257 : vector<8x128xf32>
    %259 = math.tanh %258 : vector<8x128xf32>
    %cst_54 = arith.constant 1.000000e+00 : f32
    %260 = vector.broadcast %cst_54 : f32 to vector<8x128xf32>
    %261 = arith.subf %260, %254 : vector<8x128xf32>
    %262 = arith.mulf %261, %259 : vector<8x128xf32>
    %263 = arith.mulf %254, %203 : vector<8x128xf32>
    %264 = arith.addf %262, %263 : vector<8x128xf32>
    %265 = arith.truncf %264 : vector<8x128xf32> to vector<8x128xbf16>
    %cst_55 = arith.constant dense<0.000000e+00> : vector<8x384xf32>
    %266 = tpu.matmul %265, %3, %cst_55 {dimension_numbers = #tpu.dot_dimension_numbers<[1], [0], [0], [1], [0, 0, 1, 1], [], []>} : vector<8x128xbf16>, vector<128x384xbf16>, vector<8x384xf32> -> vector<8x384xf32>
    %267 = arith.addf %266, %17 : vector<8x384xf32>
    %268 = vector.extract_strided_slice %8 {offsets = [32, 0], sizes = [8, 384], strides = [1, 1]} : vector<64x384xf32> to vector<8x384xf32>
    %cst_56 = arith.constant dense<0.000000e+00> : vector<8x384xf32>
    %269 = tpu.matmul %236, %1, %cst_56 {dimension_numbers = #tpu.dot_dimension_numbers<[1], [0], [0], [1], [0, 0, 1, 1], [], []>} : vector<8x128xbf16>, vector<128x384xbf16>, vector<8x384xf32> -> vector<8x384xf32>
    %270 = arith.addf %269, %11 : vector<8x384xf32>
    %271 = vector.extract_strided_slice %268 {offsets = [0, 0], sizes = [8, 128], strides = [1, 1]} : vector<8x384xf32> to vector<8x128xf32>
    %272 = vector.extract_strided_slice %270 {offsets = [0, 0], sizes = [8, 128], strides = [1, 1]} : vector<8x384xf32> to vector<8x128xf32>
    %273 = arith.addf %271, %272 : vector<8x128xf32>
    %274 = arith.negf %273 : vector<8x128xf32>
    %275 = math.exp %274 : vector<8x128xf32>
    %cst_57 = arith.constant 1.000000e+00 : f32
    %276 = vector.broadcast %cst_57 : f32 to vector<8x128xf32>
    %277 = arith.addf %276, %275 : vector<8x128xf32>
    %278 = arith.divf %276, %277 : vector<8x128xf32>
    %279 = vector.extract_strided_slice %268 {offsets = [0, 128], sizes = [8, 128], strides = [1, 1]} : vector<8x384xf32> to vector<8x128xf32>
    %280 = vector.extract_strided_slice %270 {offsets = [0, 128], sizes = [8, 128], strides = [1, 1]} : vector<8x384xf32> to vector<8x128xf32>
    %281 = arith.addf %279, %280 : vector<8x128xf32>
    %282 = arith.negf %281 : vector<8x128xf32>
    %283 = math.exp %282 : vector<8x128xf32>
    %cst_58 = arith.constant 1.000000e+00 : f32
    %284 = vector.broadcast %cst_58 : f32 to vector<8x128xf32>
    %285 = arith.addf %284, %283 : vector<8x128xf32>
    %286 = arith.divf %284, %285 : vector<8x128xf32>
    %287 = vector.extract_strided_slice %268 {offsets = [0, 256], sizes = [8, 128], strides = [1, 1]} : vector<8x384xf32> to vector<8x128xf32>
    %288 = vector.extract_strided_slice %270 {offsets = [0, 256], sizes = [8, 128], strides = [1, 1]} : vector<8x384xf32> to vector<8x128xf32>
    %289 = arith.mulf %278, %288 : vector<8x128xf32>
    %290 = arith.addf %287, %289 : vector<8x128xf32>
    %291 = math.tanh %290 : vector<8x128xf32>
    %cst_59 = arith.constant 1.000000e+00 : f32
    %292 = vector.broadcast %cst_59 : f32 to vector<8x128xf32>
    %293 = arith.subf %292, %286 : vector<8x128xf32>
    %294 = arith.mulf %293, %291 : vector<8x128xf32>
    %295 = arith.mulf %286, %235 : vector<8x128xf32>
    %296 = arith.addf %294, %295 : vector<8x128xf32>
    %297 = arith.truncf %296 : vector<8x128xf32> to vector<8x128xbf16>
    %cst_60 = arith.constant dense<0.000000e+00> : vector<8x384xf32>
    %298 = tpu.matmul %297, %2, %cst_60 {dimension_numbers = #tpu.dot_dimension_numbers<[1], [0], [0], [1], [0, 0, 1, 1], [], []>} : vector<8x128xbf16>, vector<128x384xbf16>, vector<8x384xf32> -> vector<8x384xf32>
    %299 = arith.addf %298, %14 : vector<8x384xf32>
    %300 = vector.extract_strided_slice %299 {offsets = [0, 0], sizes = [8, 128], strides = [1, 1]} : vector<8x384xf32> to vector<8x128xf32>
    %301 = vector.extract_strided_slice %267 {offsets = [0, 0], sizes = [8, 128], strides = [1, 1]} : vector<8x384xf32> to vector<8x128xf32>
    %302 = arith.addf %300, %301 : vector<8x128xf32>
    %303 = arith.negf %302 : vector<8x128xf32>
    %304 = math.exp %303 : vector<8x128xf32>
    %cst_61 = arith.constant 1.000000e+00 : f32
    %305 = vector.broadcast %cst_61 : f32 to vector<8x128xf32>
    %306 = arith.addf %305, %304 : vector<8x128xf32>
    %307 = arith.divf %305, %306 : vector<8x128xf32>
    %308 = vector.extract_strided_slice %299 {offsets = [0, 128], sizes = [8, 128], strides = [1, 1]} : vector<8x384xf32> to vector<8x128xf32>
    %309 = vector.extract_strided_slice %267 {offsets = [0, 128], sizes = [8, 128], strides = [1, 1]} : vector<8x384xf32> to vector<8x128xf32>
    %310 = arith.addf %308, %309 : vector<8x128xf32>
    %311 = arith.negf %310 : vector<8x128xf32>
    %312 = math.exp %311 : vector<8x128xf32>
    %cst_62 = arith.constant 1.000000e+00 : f32
    %313 = vector.broadcast %cst_62 : f32 to vector<8x128xf32>
    %314 = arith.addf %313, %312 : vector<8x128xf32>
    %315 = arith.divf %313, %314 : vector<8x128xf32>
    %316 = vector.extract_strided_slice %299 {offsets = [0, 256], sizes = [8, 128], strides = [1, 1]} : vector<8x384xf32> to vector<8x128xf32>
    %317 = vector.extract_strided_slice %267 {offsets = [0, 256], sizes = [8, 128], strides = [1, 1]} : vector<8x384xf32> to vector<8x128xf32>
    %318 = arith.mulf %307, %317 : vector<8x128xf32>
    %319 = arith.addf %316, %318 : vector<8x128xf32>
    %320 = math.tanh %319 : vector<8x128xf32>
    %cst_63 = arith.constant 1.000000e+00 : f32
    %321 = vector.broadcast %cst_63 : f32 to vector<8x128xf32>
    %322 = arith.subf %321, %315 : vector<8x128xf32>
    %323 = arith.mulf %322, %320 : vector<8x128xf32>
    %324 = arith.mulf %315, %264 : vector<8x128xf32>
    %325 = arith.addf %323, %324 : vector<8x128xf32>
    %326 = arith.truncf %325 : vector<8x128xf32> to vector<8x128xbf16>
    %cst_64 = arith.constant dense<0.000000e+00> : vector<8x384xf32>
    %327 = tpu.matmul %326, %3, %cst_64 {dimension_numbers = #tpu.dot_dimension_numbers<[1], [0], [0], [1], [0, 0, 1, 1], [], []>} : vector<8x128xbf16>, vector<128x384xbf16>, vector<8x384xf32> -> vector<8x384xf32>
    %328 = arith.addf %327, %17 : vector<8x384xf32>
    %329 = vector.extract_strided_slice %8 {offsets = [40, 0], sizes = [8, 384], strides = [1, 1]} : vector<64x384xf32> to vector<8x384xf32>
    %cst_65 = arith.constant dense<0.000000e+00> : vector<8x384xf32>
    %330 = tpu.matmul %297, %1, %cst_65 {dimension_numbers = #tpu.dot_dimension_numbers<[1], [0], [0], [1], [0, 0, 1, 1], [], []>} : vector<8x128xbf16>, vector<128x384xbf16>, vector<8x384xf32> -> vector<8x384xf32>
    %331 = arith.addf %330, %11 : vector<8x384xf32>
    %332 = vector.extract_strided_slice %329 {offsets = [0, 0], sizes = [8, 128], strides = [1, 1]} : vector<8x384xf32> to vector<8x128xf32>
    %333 = vector.extract_strided_slice %331 {offsets = [0, 0], sizes = [8, 128], strides = [1, 1]} : vector<8x384xf32> to vector<8x128xf32>
    %334 = arith.addf %332, %333 : vector<8x128xf32>
    %335 = arith.negf %334 : vector<8x128xf32>
    %336 = math.exp %335 : vector<8x128xf32>
    %cst_66 = arith.constant 1.000000e+00 : f32
    %337 = vector.broadcast %cst_66 : f32 to vector<8x128xf32>
    %338 = arith.addf %337, %336 : vector<8x128xf32>
    %339 = arith.divf %337, %338 : vector<8x128xf32>
    %340 = vector.extract_strided_slice %329 {offsets = [0, 128], sizes = [8, 128], strides = [1, 1]} : vector<8x384xf32> to vector<8x128xf32>
    %341 = vector.extract_strided_slice %331 {offsets = [0, 128], sizes = [8, 128], strides = [1, 1]} : vector<8x384xf32> to vector<8x128xf32>
    %342 = arith.addf %340, %341 : vector<8x128xf32>
    %343 = arith.negf %342 : vector<8x128xf32>
    %344 = math.exp %343 : vector<8x128xf32>
    %cst_67 = arith.constant 1.000000e+00 : f32
    %345 = vector.broadcast %cst_67 : f32 to vector<8x128xf32>
    %346 = arith.addf %345, %344 : vector<8x128xf32>
    %347 = arith.divf %345, %346 : vector<8x128xf32>
    %348 = vector.extract_strided_slice %329 {offsets = [0, 256], sizes = [8, 128], strides = [1, 1]} : vector<8x384xf32> to vector<8x128xf32>
    %349 = vector.extract_strided_slice %331 {offsets = [0, 256], sizes = [8, 128], strides = [1, 1]} : vector<8x384xf32> to vector<8x128xf32>
    %350 = arith.mulf %339, %349 : vector<8x128xf32>
    %351 = arith.addf %348, %350 : vector<8x128xf32>
    %352 = math.tanh %351 : vector<8x128xf32>
    %cst_68 = arith.constant 1.000000e+00 : f32
    %353 = vector.broadcast %cst_68 : f32 to vector<8x128xf32>
    %354 = arith.subf %353, %347 : vector<8x128xf32>
    %355 = arith.mulf %354, %352 : vector<8x128xf32>
    %356 = arith.mulf %347, %296 : vector<8x128xf32>
    %357 = arith.addf %355, %356 : vector<8x128xf32>
    %358 = arith.truncf %357 : vector<8x128xf32> to vector<8x128xbf16>
    %cst_69 = arith.constant dense<0.000000e+00> : vector<8x384xf32>
    %359 = tpu.matmul %358, %2, %cst_69 {dimension_numbers = #tpu.dot_dimension_numbers<[1], [0], [0], [1], [0, 0, 1, 1], [], []>} : vector<8x128xbf16>, vector<128x384xbf16>, vector<8x384xf32> -> vector<8x384xf32>
    %360 = arith.addf %359, %14 : vector<8x384xf32>
    %361 = vector.extract_strided_slice %360 {offsets = [0, 0], sizes = [8, 128], strides = [1, 1]} : vector<8x384xf32> to vector<8x128xf32>
    %362 = vector.extract_strided_slice %328 {offsets = [0, 0], sizes = [8, 128], strides = [1, 1]} : vector<8x384xf32> to vector<8x128xf32>
    %363 = arith.addf %361, %362 : vector<8x128xf32>
    %364 = arith.negf %363 : vector<8x128xf32>
    %365 = math.exp %364 : vector<8x128xf32>
    %cst_70 = arith.constant 1.000000e+00 : f32
    %366 = vector.broadcast %cst_70 : f32 to vector<8x128xf32>
    %367 = arith.addf %366, %365 : vector<8x128xf32>
    %368 = arith.divf %366, %367 : vector<8x128xf32>
    %369 = vector.extract_strided_slice %360 {offsets = [0, 128], sizes = [8, 128], strides = [1, 1]} : vector<8x384xf32> to vector<8x128xf32>
    %370 = vector.extract_strided_slice %328 {offsets = [0, 128], sizes = [8, 128], strides = [1, 1]} : vector<8x384xf32> to vector<8x128xf32>
    %371 = arith.addf %369, %370 : vector<8x128xf32>
    %372 = arith.negf %371 : vector<8x128xf32>
    %373 = math.exp %372 : vector<8x128xf32>
    %cst_71 = arith.constant 1.000000e+00 : f32
    %374 = vector.broadcast %cst_71 : f32 to vector<8x128xf32>
    %375 = arith.addf %374, %373 : vector<8x128xf32>
    %376 = arith.divf %374, %375 : vector<8x128xf32>
    %377 = vector.extract_strided_slice %360 {offsets = [0, 256], sizes = [8, 128], strides = [1, 1]} : vector<8x384xf32> to vector<8x128xf32>
    %378 = vector.extract_strided_slice %328 {offsets = [0, 256], sizes = [8, 128], strides = [1, 1]} : vector<8x384xf32> to vector<8x128xf32>
    %379 = arith.mulf %368, %378 : vector<8x128xf32>
    %380 = arith.addf %377, %379 : vector<8x128xf32>
    %381 = math.tanh %380 : vector<8x128xf32>
    %cst_72 = arith.constant 1.000000e+00 : f32
    %382 = vector.broadcast %cst_72 : f32 to vector<8x128xf32>
    %383 = arith.subf %382, %376 : vector<8x128xf32>
    %384 = arith.mulf %383, %381 : vector<8x128xf32>
    %385 = arith.mulf %376, %325 : vector<8x128xf32>
    %386 = arith.addf %384, %385 : vector<8x128xf32>
    %387 = arith.truncf %386 : vector<8x128xf32> to vector<8x128xbf16>
    %cst_73 = arith.constant dense<0.000000e+00> : vector<8x384xf32>
    %388 = tpu.matmul %387, %3, %cst_73 {dimension_numbers = #tpu.dot_dimension_numbers<[1], [0], [0], [1], [0, 0, 1, 1], [], []>} : vector<8x128xbf16>, vector<128x384xbf16>, vector<8x384xf32> -> vector<8x384xf32>
    %389 = arith.addf %388, %17 : vector<8x384xf32>
    %390 = vector.extract_strided_slice %8 {offsets = [48, 0], sizes = [8, 384], strides = [1, 1]} : vector<64x384xf32> to vector<8x384xf32>
    %cst_74 = arith.constant dense<0.000000e+00> : vector<8x384xf32>
    %391 = tpu.matmul %358, %1, %cst_74 {dimension_numbers = #tpu.dot_dimension_numbers<[1], [0], [0], [1], [0, 0, 1, 1], [], []>} : vector<8x128xbf16>, vector<128x384xbf16>, vector<8x384xf32> -> vector<8x384xf32>
    %392 = arith.addf %391, %11 : vector<8x384xf32>
    %393 = vector.extract_strided_slice %390 {offsets = [0, 0], sizes = [8, 128], strides = [1, 1]} : vector<8x384xf32> to vector<8x128xf32>
    %394 = vector.extract_strided_slice %392 {offsets = [0, 0], sizes = [8, 128], strides = [1, 1]} : vector<8x384xf32> to vector<8x128xf32>
    %395 = arith.addf %393, %394 : vector<8x128xf32>
    %396 = arith.negf %395 : vector<8x128xf32>
    %397 = math.exp %396 : vector<8x128xf32>
    %cst_75 = arith.constant 1.000000e+00 : f32
    %398 = vector.broadcast %cst_75 : f32 to vector<8x128xf32>
    %399 = arith.addf %398, %397 : vector<8x128xf32>
    %400 = arith.divf %398, %399 : vector<8x128xf32>
    %401 = vector.extract_strided_slice %390 {offsets = [0, 128], sizes = [8, 128], strides = [1, 1]} : vector<8x384xf32> to vector<8x128xf32>
    %402 = vector.extract_strided_slice %392 {offsets = [0, 128], sizes = [8, 128], strides = [1, 1]} : vector<8x384xf32> to vector<8x128xf32>
    %403 = arith.addf %401, %402 : vector<8x128xf32>
    %404 = arith.negf %403 : vector<8x128xf32>
    %405 = math.exp %404 : vector<8x128xf32>
    %cst_76 = arith.constant 1.000000e+00 : f32
    %406 = vector.broadcast %cst_76 : f32 to vector<8x128xf32>
    %407 = arith.addf %406, %405 : vector<8x128xf32>
    %408 = arith.divf %406, %407 : vector<8x128xf32>
    %409 = vector.extract_strided_slice %390 {offsets = [0, 256], sizes = [8, 128], strides = [1, 1]} : vector<8x384xf32> to vector<8x128xf32>
    %410 = vector.extract_strided_slice %392 {offsets = [0, 256], sizes = [8, 128], strides = [1, 1]} : vector<8x384xf32> to vector<8x128xf32>
    %411 = arith.mulf %400, %410 : vector<8x128xf32>
    %412 = arith.addf %409, %411 : vector<8x128xf32>
    %413 = math.tanh %412 : vector<8x128xf32>
    %cst_77 = arith.constant 1.000000e+00 : f32
    %414 = vector.broadcast %cst_77 : f32 to vector<8x128xf32>
    %415 = arith.subf %414, %408 : vector<8x128xf32>
    %416 = arith.mulf %415, %413 : vector<8x128xf32>
    %417 = arith.mulf %408, %357 : vector<8x128xf32>
    %418 = arith.addf %416, %417 : vector<8x128xf32>
    %419 = arith.truncf %418 : vector<8x128xf32> to vector<8x128xbf16>
    %cst_78 = arith.constant dense<0.000000e+00> : vector<8x384xf32>
    %420 = tpu.matmul %419, %2, %cst_78 {dimension_numbers = #tpu.dot_dimension_numbers<[1], [0], [0], [1], [0, 0, 1, 1], [], []>} : vector<8x128xbf16>, vector<128x384xbf16>, vector<8x384xf32> -> vector<8x384xf32>
    %421 = arith.addf %420, %14 : vector<8x384xf32>
    %422 = vector.extract_strided_slice %421 {offsets = [0, 0], sizes = [8, 128], strides = [1, 1]} : vector<8x384xf32> to vector<8x128xf32>
    %423 = vector.extract_strided_slice %389 {offsets = [0, 0], sizes = [8, 128], strides = [1, 1]} : vector<8x384xf32> to vector<8x128xf32>
    %424 = arith.addf %422, %423 : vector<8x128xf32>
    %425 = arith.negf %424 : vector<8x128xf32>
    %426 = math.exp %425 : vector<8x128xf32>
    %cst_79 = arith.constant 1.000000e+00 : f32
    %427 = vector.broadcast %cst_79 : f32 to vector<8x128xf32>
    %428 = arith.addf %427, %426 : vector<8x128xf32>
    %429 = arith.divf %427, %428 : vector<8x128xf32>
    %430 = vector.extract_strided_slice %421 {offsets = [0, 128], sizes = [8, 128], strides = [1, 1]} : vector<8x384xf32> to vector<8x128xf32>
    %431 = vector.extract_strided_slice %389 {offsets = [0, 128], sizes = [8, 128], strides = [1, 1]} : vector<8x384xf32> to vector<8x128xf32>
    %432 = arith.addf %430, %431 : vector<8x128xf32>
    %433 = arith.negf %432 : vector<8x128xf32>
    %434 = math.exp %433 : vector<8x128xf32>
    %cst_80 = arith.constant 1.000000e+00 : f32
    %435 = vector.broadcast %cst_80 : f32 to vector<8x128xf32>
    %436 = arith.addf %435, %434 : vector<8x128xf32>
    %437 = arith.divf %435, %436 : vector<8x128xf32>
    %438 = vector.extract_strided_slice %421 {offsets = [0, 256], sizes = [8, 128], strides = [1, 1]} : vector<8x384xf32> to vector<8x128xf32>
    %439 = vector.extract_strided_slice %389 {offsets = [0, 256], sizes = [8, 128], strides = [1, 1]} : vector<8x384xf32> to vector<8x128xf32>
    %440 = arith.mulf %429, %439 : vector<8x128xf32>
    %441 = arith.addf %438, %440 : vector<8x128xf32>
    %442 = math.tanh %441 : vector<8x128xf32>
    %cst_81 = arith.constant 1.000000e+00 : f32
    %443 = vector.broadcast %cst_81 : f32 to vector<8x128xf32>
    %444 = arith.subf %443, %437 : vector<8x128xf32>
    %445 = arith.mulf %444, %442 : vector<8x128xf32>
    %446 = arith.mulf %437, %386 : vector<8x128xf32>
    %447 = arith.addf %445, %446 : vector<8x128xf32>
    %448 = arith.truncf %447 : vector<8x128xf32> to vector<8x128xbf16>
    %cst_82 = arith.constant dense<0.000000e+00> : vector<8x384xf32>
    %449 = tpu.matmul %448, %3, %cst_82 {dimension_numbers = #tpu.dot_dimension_numbers<[1], [0], [0], [1], [0, 0, 1, 1], [], []>} : vector<8x128xbf16>, vector<128x384xbf16>, vector<8x384xf32> -> vector<8x384xf32>
    %450 = arith.addf %449, %17 : vector<8x384xf32>
    %451 = vector.extract_strided_slice %8 {offsets = [56, 0], sizes = [8, 384], strides = [1, 1]} : vector<64x384xf32> to vector<8x384xf32>
    %cst_83 = arith.constant dense<0.000000e+00> : vector<8x384xf32>
    %452 = tpu.matmul %419, %1, %cst_83 {dimension_numbers = #tpu.dot_dimension_numbers<[1], [0], [0], [1], [0, 0, 1, 1], [], []>} : vector<8x128xbf16>, vector<128x384xbf16>, vector<8x384xf32> -> vector<8x384xf32>
    %453 = arith.addf %452, %11 : vector<8x384xf32>
    %454 = vector.extract_strided_slice %451 {offsets = [0, 0], sizes = [8, 128], strides = [1, 1]} : vector<8x384xf32> to vector<8x128xf32>
    %455 = vector.extract_strided_slice %453 {offsets = [0, 0], sizes = [8, 128], strides = [1, 1]} : vector<8x384xf32> to vector<8x128xf32>
    %456 = arith.addf %454, %455 : vector<8x128xf32>
    %457 = arith.negf %456 : vector<8x128xf32>
    %458 = math.exp %457 : vector<8x128xf32>
    %cst_84 = arith.constant 1.000000e+00 : f32
    %459 = vector.broadcast %cst_84 : f32 to vector<8x128xf32>
    %460 = arith.addf %459, %458 : vector<8x128xf32>
    %461 = arith.divf %459, %460 : vector<8x128xf32>
    %462 = vector.extract_strided_slice %451 {offsets = [0, 128], sizes = [8, 128], strides = [1, 1]} : vector<8x384xf32> to vector<8x128xf32>
    %463 = vector.extract_strided_slice %453 {offsets = [0, 128], sizes = [8, 128], strides = [1, 1]} : vector<8x384xf32> to vector<8x128xf32>
    %464 = arith.addf %462, %463 : vector<8x128xf32>
    %465 = arith.negf %464 : vector<8x128xf32>
    %466 = math.exp %465 : vector<8x128xf32>
    %cst_85 = arith.constant 1.000000e+00 : f32
    %467 = vector.broadcast %cst_85 : f32 to vector<8x128xf32>
    %468 = arith.addf %467, %466 : vector<8x128xf32>
    %469 = arith.divf %467, %468 : vector<8x128xf32>
    %470 = vector.extract_strided_slice %451 {offsets = [0, 256], sizes = [8, 128], strides = [1, 1]} : vector<8x384xf32> to vector<8x128xf32>
    %471 = vector.extract_strided_slice %453 {offsets = [0, 256], sizes = [8, 128], strides = [1, 1]} : vector<8x384xf32> to vector<8x128xf32>
    %472 = arith.mulf %461, %471 : vector<8x128xf32>
    %473 = arith.addf %470, %472 : vector<8x128xf32>
    %474 = math.tanh %473 : vector<8x128xf32>
    %cst_86 = arith.constant 1.000000e+00 : f32
    %475 = vector.broadcast %cst_86 : f32 to vector<8x128xf32>
    %476 = arith.subf %475, %469 : vector<8x128xf32>
    %477 = arith.mulf %476, %474 : vector<8x128xf32>
    %478 = arith.mulf %469, %418 : vector<8x128xf32>
    %479 = arith.addf %477, %478 : vector<8x128xf32>
    %480 = arith.truncf %479 : vector<8x128xf32> to vector<8x128xbf16>
    %cst_87 = arith.constant dense<0.000000e+00> : vector<8x384xf32>
    %481 = tpu.matmul %480, %2, %cst_87 {dimension_numbers = #tpu.dot_dimension_numbers<[1], [0], [0], [1], [0, 0, 1, 1], [], []>} : vector<8x128xbf16>, vector<128x384xbf16>, vector<8x384xf32> -> vector<8x384xf32>
    %482 = arith.addf %481, %14 : vector<8x384xf32>
    %483 = vector.extract_strided_slice %482 {offsets = [0, 0], sizes = [8, 128], strides = [1, 1]} : vector<8x384xf32> to vector<8x128xf32>
    %484 = vector.extract_strided_slice %450 {offsets = [0, 0], sizes = [8, 128], strides = [1, 1]} : vector<8x384xf32> to vector<8x128xf32>
    %485 = arith.addf %483, %484 : vector<8x128xf32>
    %486 = arith.negf %485 : vector<8x128xf32>
    %487 = math.exp %486 : vector<8x128xf32>
    %cst_88 = arith.constant 1.000000e+00 : f32
    %488 = vector.broadcast %cst_88 : f32 to vector<8x128xf32>
    %489 = arith.addf %488, %487 : vector<8x128xf32>
    %490 = arith.divf %488, %489 : vector<8x128xf32>
    %491 = vector.extract_strided_slice %482 {offsets = [0, 128], sizes = [8, 128], strides = [1, 1]} : vector<8x384xf32> to vector<8x128xf32>
    %492 = vector.extract_strided_slice %450 {offsets = [0, 128], sizes = [8, 128], strides = [1, 1]} : vector<8x384xf32> to vector<8x128xf32>
    %493 = arith.addf %491, %492 : vector<8x128xf32>
    %494 = arith.negf %493 : vector<8x128xf32>
    %495 = math.exp %494 : vector<8x128xf32>
    %cst_89 = arith.constant 1.000000e+00 : f32
    %496 = vector.broadcast %cst_89 : f32 to vector<8x128xf32>
    %497 = arith.addf %496, %495 : vector<8x128xf32>
    %498 = arith.divf %496, %497 : vector<8x128xf32>
    %499 = vector.extract_strided_slice %482 {offsets = [0, 256], sizes = [8, 128], strides = [1, 1]} : vector<8x384xf32> to vector<8x128xf32>
    %500 = vector.extract_strided_slice %450 {offsets = [0, 256], sizes = [8, 128], strides = [1, 1]} : vector<8x384xf32> to vector<8x128xf32>
    %501 = arith.mulf %490, %500 : vector<8x128xf32>
    %502 = arith.addf %499, %501 : vector<8x128xf32>
    %503 = math.tanh %502 : vector<8x128xf32>
    %cst_90 = arith.constant 1.000000e+00 : f32
    %504 = vector.broadcast %cst_90 : f32 to vector<8x128xf32>
    %505 = arith.subf %504, %498 : vector<8x128xf32>
    %506 = arith.mulf %505, %503 : vector<8x128xf32>
    %507 = arith.mulf %498, %447 : vector<8x128xf32>
    %508 = arith.addf %506, %507 : vector<8x128xf32>
    %509 = arith.truncf %508 : vector<8x128xf32> to vector<8x128xbf16>
    %c0_91 = arith.constant 0 : index
    %c0_92 = arith.constant 0 : index
    %510 = vector.load %arg9[%c0_91, %c0_92] : memref<128x128xbf16, #tpu.memory_space<vmem>>, vector<128x128xbf16>
    %cst_93 = arith.constant dense<0.000000e+00> : vector<8x128xf32>
    %511 = tpu.matmul %509, %510, %cst_93 {dimension_numbers = #tpu.dot_dimension_numbers<[1], [0], [0], [1], [0, 0, 1, 1], [], []>} : vector<8x128xbf16>, vector<128x128xbf16>, vector<8x128xf32> -> vector<8x128xf32>
    %c0_94 = arith.constant 0 : index
    %c0_95 = arith.constant 0 : index
    %512 = vector.load %arg10[%c0_94, %c0_95] : memref<1x128xf32, #tpu.memory_space<vmem>>, vector<1x128xf32>
    %513 = vector.broadcast %512 : vector<1x128xf32> to vector<8x128xf32>
    %514 = arith.addf %511, %513 : vector<8x128xf32>
    %cst_96 = arith.constant 0.000000e+00 : f32
    %515 = vector.broadcast %cst_96 : f32 to vector<8x128xf32>
    %516 = arith.maximumf %514, %515 : vector<8x128xf32>
    %517 = arith.truncf %516 : vector<8x128xf32> to vector<8x128xbf16>
    %c0_97 = arith.constant 0 : index
    %c0_98 = arith.constant 0 : index
    %518 = vector.load %arg11[%c0_97, %c0_98] : memref<128x128xbf16, #tpu.memory_space<vmem>>, vector<128x128xbf16>
    %cst_99 = arith.constant dense<0.000000e+00> : vector<8x128xf32>
    %519 = tpu.matmul %517, %518, %cst_99 {dimension_numbers = #tpu.dot_dimension_numbers<[1], [0], [0], [1], [0, 0, 1, 1], [], []>} : vector<8x128xbf16>, vector<128x128xbf16>, vector<8x128xf32> -> vector<8x128xf32>
    %c0_100 = arith.constant 0 : index
    %c0_101 = arith.constant 0 : index
    %520 = vector.load %arg12[%c0_100, %c0_101] : memref<1x128xf32, #tpu.memory_space<vmem>>, vector<1x128xf32>
    %521 = vector.broadcast %520 : vector<1x128xf32> to vector<8x128xf32>
    %522 = arith.addf %519, %521 : vector<8x128xf32>
    %c0_102 = arith.constant 0 : index
    %c0_103 = arith.constant 0 : index
    %523 = vector.load %arg13[%c0_102, %c0_103] : memref<8x128xf32, #tpu.memory_space<vmem>>, vector<8x128xf32>
    tpu.vector_store %arg13[%c0_102, %c0_103], %522 {strides = array<i32>} : memref<8x128xf32, #tpu.memory_space<vmem>>, vector<8x128xf32>,
    return
  }
}

</mosaic_0001>

<llo_original>
// kernel: gru_model_forward.1
$region0: #{gru_model_forward.1}
  #allocation0 [shape = 'u32[]', space=smem, size = 0x4, offset = 0x4, fixed_abs, tag = 'smem constant byte address 0x4 - core index']
  #allocation1 [shape = 'u32[72,128]{1,0:T(1,128)}', space=vmem, size = 0x9000, scoped, tag = 'internal scratch']
  %s0 = inlined_call_operand.vmem [shape: bf16[64,24], index: 0, kind: input, shape index: {}]
  %s1 = inlined_call_operand.vmem [shape: bf16[24,384], index: 1, kind: input, shape index: {}]
  %s2 = inlined_call_operand.vmem [shape: bf16[128,384], index: 2, kind: input, shape index: {}]
  %s3 = inlined_call_operand.vmem [shape: f32[1,384], index: 3, kind: input, shape index: {}]
  %s4 = inlined_call_operand.vmem [shape: f32[1,384], index: 4, kind: input, shape index: {}]
  %s5 = inlined_call_operand.vmem [shape: bf16[128,384], index: 5, kind: input, shape index: {}]
  %s6 = inlined_call_operand.vmem [shape: bf16[128,384], index: 6, kind: input, shape index: {}]
  %s7 = inlined_call_operand.vmem [shape: f32[1,384], index: 7, kind: input, shape index: {}]
  %s8 = inlined_call_operand.vmem [shape: f32[1,384], index: 8, kind: input, shape index: {}]
  %s9 = inlined_call_operand.vmem [shape: bf16[128,128], index: 9, kind: input, shape index: {}]
  %s10 = inlined_call_operand.vmem [shape: f32[1,128], index: 10, kind: input, shape index: {}]
  %s11 = inlined_call_operand.vmem [shape: bf16[128,128], index: 11, kind: input, shape index: {}]
  %s12 = inlined_call_operand.vmem [shape: f32[1,128], index: 12, kind: input, shape index: {}]
  %s13 = inlined_call_operand.vmem [shape: f32[8,128], index: 13, kind: output, shape index: {}]
  %s14 = sld [smem:[#allocation0]]
  $region62: #{gru_model_forward.1} parent=0
    _
  %s16 = ssub.s32 1, %s14
  %s17 = scalar_select 0, %s16, %s14
  // Predicated region
  $region2: #{gru_model_forward.1} parent=0 // pred_check
    _
  $region3: #{gru_model_forward.1} parent=0 // pred_check_branch
    %19 = sbr.rel (0) target = $region5
  $region4: #{gru_model_forward.1} parent=0 // pred_region
    _
  $region5: #{gru_model_forward.1} parent=0 // pred_fallthru
    _
  // Predicated region
  $region6: #{gru_model_forward.1} parent=0 // pred_check
    _
  $region7: #{gru_model_forward.1} parent=0 // pred_check_branch
    %21 = sbr.rel (0) target = $region9
  $region8: #{gru_model_forward.1} parent=0 // pred_region
    _
  $region9: #{gru_model_forward.1} parent=0 // pred_fallthru
    _
  // Predicated region
  $region10: #{gru_model_forward.1} parent=0 // pred_check
    _
  $region11: #{gru_model_forward.1} parent=0 // pred_check_branch
    %23 = sbr.rel (0) target = $region13
  $region12: #{gru_model_forward.1} parent=0 // pred_region
    _
  $region13: #{gru_model_forward.1} parent=0 // pred_fallthru
    _
  // Predicated region
  $region14: #{gru_model_forward.1} parent=0 // pred_check
    _
  $region15: #{gru_model_forward.1} parent=0 // pred_check_branch
    %25 = sbr.rel (0) target = $region17
  $region16: #{gru_model_forward.1} parent=0 // pred_region
    _
  $region17: #{gru_model_forward.1} parent=0 // pred_fallthru
    _
  // Predicated region
  $region18: #{gru_model_forward.1} parent=0 // pred_check
    _
  $region19: #{gru_model_forward.1} parent=0 // pred_check_branch
    %27 = sbr.rel (0) target = $region21
  $region20: #{gru_model_forward.1} parent=0 // pred_region
    _
  $region21: #{gru_model_forward.1} parent=0 // pred_fallthru
    _
  // Predicated region
  $region22: #{gru_model_forward.1} parent=0 // pred_check
    _
  $region23: #{gru_model_forward.1} parent=0 // pred_check_branch
    %29 = sbr.rel (0) target = $region25
  $region24: #{gru_model_forward.1} parent=0 // pred_region
    _
  $region25: #{gru_model_forward.1} parent=0 // pred_fallthru
    _
  // Predicated region
  $region26: #{gru_model_forward.1} parent=0 // pred_check
    _
  $region27: #{gru_model_forward.1} parent=0 // pred_check_branch
    %31 = sbr.rel (0) target = $region29
  $region28: #{gru_model_forward.1} parent=0 // pred_region
    _
  $region29: #{gru_model_forward.1} parent=0 // pred_fallthru
    _
  // Predicated region
  $region30: #{gru_model_forward.1} parent=0 // pred_check
    _
  $region31: #{gru_model_forward.1} parent=0 // pred_check_branch
    %33 = sbr.rel (0) target = $region33
  $region32: #{gru_model_forward.1} parent=0 // pred_region
    _
  $region33: #{gru_model_forward.1} parent=0 // pred_fallthru
    _
  // Predicated region
  $region34: #{gru_model_forward.1} parent=0 // pred_check
    _
  $region35: #{gru_model_forward.1} parent=0 // pred_check_branch
    %35 = sbr.rel (0) target = $region37
  $region36: #{gru_model_forward.1} parent=0 // pred_region
    _
  $region37: #{gru_model_forward.1} parent=0 // pred_fallthru
    _
  // Predicated region
  $region38: #{gru_model_forward.1} parent=0 // pred_check
    _
  $region39: #{gru_model_forward.1} parent=0 // pred_check_branch
    %37 = sbr.rel (0) target = $region41
  $region40: #{gru_model_forward.1} parent=0 // pred_region
    _
  $region41: #{gru_model_forward.1} parent=0 // pred_fallthru
    _
  // Predicated region
  $region42: #{gru_model_forward.1} parent=0 // pred_check
    _
  $region43: #{gru_model_forward.1} parent=0 // pred_check_branch
    %39 = sbr.rel (0) target = $region45
  $region44: #{gru_model_forward.1} parent=0 // pred_region
    _
  $region45: #{gru_model_forward.1} parent=0 // pred_fallthru
    _
  // Predicated region
  $region46: #{gru_model_forward.1} parent=0 // pred_check
    _
  $region47: #{gru_model_forward.1} parent=0 // pred_check_branch
    %41 = sbr.rel (0) target = $region49
  $region48: #{gru_model_forward.1} parent=0 // pred_region
    _
  $region49: #{gru_model_forward.1} parent=0 // pred_fallthru
    _
  // Predicated region
  $region50: #{gru_model_forward.1} parent=0 // pred_check
    _
  $region51: #{gru_model_forward.1} parent=0 // pred_check_branch
    %43 = sbr.rel (0) target = $region53
  $region52: #{gru_model_forward.1} parent=0 // pred_region
    _
  $region53: #{gru_model_forward.1} parent=0 // pred_fallthru
    _
  %v45 = vld [vmem:[%s0] sm:$0xf]
  %v46 = vld [vmem:[%s0 + $0x4] sm:$0xf]
  %v47 = vld [vmem:[%s0 + $0x8] sm:$0xf]
  %v48 = vld [vmem:[%s0 + $0xc] sm:$0xf]
  %v49 = vld [vmem:[%s0 + $0x10] sm:$0xf]
  %v50 = vld [vmem:[%s0 + $0x14] sm:$0xf]
  %v51 = vld [vmem:[%s0 + $0x18] sm:$0xf]
  %v52 = vld [vmem:[%s0 + $0x1c] sm:$0xf]
  %v53 = vld [vmem:[%s2] sm:$0xff]
  %v54 = vld [vmem:[%s2 + $0x8] sm:$0xf]
  %v55 = vld [vmem:[%s2 + $0xc] sm:$0xff]
  %v56 = vld [vmem:[%s2 + $0x14] sm:$0xf]
  %v57 = vld [vmem:[%s2 + $0x18] sm:$0xff]
  %v58 = vld [vmem:[%s2 + $0x20] sm:$0xf]
  %v59 = vld [vmem:[%s2 + $0x24] sm:$0xff]
  %v60 = vld [vmem:[%s2 + $0x2c] sm:$0xf]
  %v61 = vld [vmem:[%s2 + $0x30] sm:$0xff]
  %v62 = vld [vmem:[%s2 + $0x38] sm:$0xf]
  %v63 = vld [vmem:[%s2 + $0x3c] sm:$0xff]
  %v64 = vld [vmem:[%s2 + $0x44] sm:$0xf]
  %v65 = vld [vmem:[%s2 + $0x48] sm:$0xff]
  %v66 = vld [vmem:[%s2 + $0x50] sm:$0xf]
  %v67 = vld [vmem:[%s2 + $0x54] sm:$0xff]
  %v68 = vld [vmem:[%s2 + $0x5c] sm:$0xf]
  %v69 = vld [vmem:[%s2 + $0x60] sm:$0xff]
  %v70 = vld [vmem:[%s2 + $0x68] sm:$0xf]
  %v71 = vld [vmem:[%s2 + $0x6c] sm:$0xff]
  %v72 = vld [vmem:[%s2 + $0x74] sm:$0xf]
  %v73 = vld [vmem:[%s2 + $0x78] sm:$0xff]
  %v74 = vld [vmem:[%s2 + $0x80] sm:$0xf]
  %v75 = vld [vmem:[%s2 + $0x84] sm:$0xff]
  %v76 = vld [vmem:[%s2 + $0x8c] sm:$0xf]
  %v77 = vld [vmem:[%s2 + $0x90] sm:$0xff]
  %v78 = vld [vmem:[%s2 + $0x98] sm:$0xf]
  %v79 = vld [vmem:[%s2 + $0x9c] sm:$0xff]
  %v80 = vld [vmem:[%s2 + $0xa4] sm:$0xf]
  %v81 = vld [vmem:[%s2 + $0xa8] sm:$0xff]
  %v82 = vld [vmem:[%s2 + $0xb0] sm:$0xf]
  %v83 = vld [vmem:[%s2 + $0xb4] sm:$0xff]
  %v84 = vld [vmem:[%s2 + $0xbc] sm:$0xf]
  %v85 = vld [vmem:[%s5] sm:$0xff]
  %v86 = vld [vmem:[%s5 + $0x8] sm:$0xf]
  %v87 = vld [vmem:[%s5 + $0xc] sm:$0xff]
  %v88 = vld [vmem:[%s5 + $0x14] sm:$0xf]
  %v89 = vld [vmem:[%s5 + $0x18] sm:$0xff]
  %v90 = vld [vmem:[%s5 + $0x20] sm:$0xf]
  %v91 = vld [vmem:[%s5 + $0x24] sm:$0xff]
  %v92 = vld [vmem:[%s5 + $0x2c] sm:$0xf]
  %v93 = vld [vmem:[%s5 + $0x30] sm:$0xff]
  %v94 = vld [vmem:[%s5 + $0x38] sm:$0xf]
  %v95 = vld [vmem:[%s5 + $0x3c] sm:$0xff]
  %v96 = vld [vmem:[%s5 + $0x44] sm:$0xf]
  %v97 = vld [vmem:[%s5 + $0x48] sm:$0xff]
  %v98 = vld [vmem:[%s5 + $0x50] sm:$0xf]
  %v99 = vld [vmem:[%s5 + $0x54] sm:$0xff]
  %v100 = vld [vmem:[%s5 + $0x5c] sm:$0xf]
  %v101 = vld [vmem:[%s5 + $0x60] sm:$0xff]
  %v102 = vld [vmem:[%s5 + $0x68] sm:$0xf]
  %v103 = vld [vmem:[%s5 + $0x6c] sm:$0xff]
  %v104 = vld [vmem:[%s5 + $0x74] sm:$0xf]
  %v105 = vld [vmem:[%s5 + $0x78] sm:$0xff]
  %v106 = vld [vmem:[%s5 + $0x80] sm:$0xf]
  %v107 = vld [vmem:[%s5 + $0x84] sm:$0xff]
  %v108 = vld [vmem:[%s5 + $0x8c] sm:$0xf]
  %v109 = vld [vmem:[%s5 + $0x90] sm:$0xff]
  %v110 = vld [vmem:[%s5 + $0x98] sm:$0xf]
  %v111 = vld [vmem:[%s5 + $0x9c] sm:$0xff]
  %v112 = vld [vmem:[%s5 + $0xa4] sm:$0xf]
  %v113 = vld [vmem:[%s5 + $0xa8] sm:$0xff]
  %v114 = vld [vmem:[%s5 + $0xb0] sm:$0xf]
  %v115 = vld [vmem:[%s5 + $0xb4] sm:$0xff]
  %v116 = vld [vmem:[%s5 + $0xbc] sm:$0xf]
  %v117 = vld [vmem:[%s6] sm:$0xff]
  %v118 = vld [vmem:[%s6 + $0x8] sm:$0xf]
  %v119 = vld [vmem:[%s6 + $0xc] sm:$0xff]
  %v120 = vld [vmem:[%s6 + $0x14] sm:$0xf]
  %v121 = vld [vmem:[%s6 + $0x18] sm:$0xff]
  %v122 = vld [vmem:[%s6 + $0x20] sm:$0xf]
  %v123 = vld [vmem:[%s6 + $0x24] sm:$0xff]
  %v124 = vld [vmem:[%s6 + $0x2c] sm:$0xf]
  %v125 = vld [vmem:[%s6 + $0x30] sm:$0xff]
  %v126 = vld [vmem:[%s6 + $0x38] sm:$0xf]
  %v127 = vld [vmem:[%s6 + $0x3c] sm:$0xff]
  %v128 = vld [vmem:[%s6 + $0x44] sm:$0xf]
  %v129 = vld [vmem:[%s6 + $0x48] sm:$0xff]
  %v130 = vld [vmem:[%s6 + $0x50] sm:$0xf]
  %v131 = vld [vmem:[%s6 + $0x54] sm:$0xff]
  %v132 = vld [vmem:[%s6 + $0x5c] sm:$0xf]
  %v133 = vld [vmem:[%s6 + $0x60] sm:$0xff]
  %v134 = vld [vmem:[%s6 + $0x68] sm:$0xf]
  %v135 = vld [vmem:[%s6 + $0x6c] sm:$0xff]
  %v136 = vld [vmem:[%s6 + $0x74] sm:$0xf]
  %v137 = vld [vmem:[%s6 + $0x78] sm:$0xff]
  %v138 = vld [vmem:[%s6 + $0x80] sm:$0xf]
  %v139 = vld [vmem:[%s6 + $0x84] sm:$0xff]
  %v140 = vld [vmem:[%s6 + $0x8c] sm:$0xf]
  %v141 = vld [vmem:[%s6 + $0x90] sm:$0xff]
  %v142 = vld [vmem:[%s6 + $0x98] sm:$0xf]
  %v143 = vld [vmem:[%s6 + $0x9c] sm:$0xff]
  %v144 = vld [vmem:[%s6 + $0xa4] sm:$0xf]
  %v145 = vld [vmem:[%s6 + $0xa8] sm:$0xff]
  %v146 = vld [vmem:[%s6 + $0xb0] sm:$0xf]
  %v147 = vld [vmem:[%s6 + $0xb4] sm:$0xff]
  %v148 = vld [vmem:[%s6 + $0xbc] sm:$0xf]
  %v149 = vld [vmem:[%s1] sm:$0xff]
  %v150 = vld [vmem:[%s1 + $0x8] sm:$0xf]
  %v151 = vld [vmem:[%s1 + $0xc] sm:$0xff]
  %v152 = vld [vmem:[%s1 + $0x14] sm:$0xf]
  %v153 = vld [vmem:[%s1 + $0x18] sm:$0xff]
  %v154 = vld [vmem:[%s1 + $0x20] sm:$0xf]
  %v155 = vld [vmem:[%s3] sm:$0x7]
  %v157 = vperm.slane %v155, 0
  %v158 = vperm.slane %v155, 1
  %v159 = vperm.slane %v155, 2
  %v171 = vunpack.c.l.b16 %v45
  %v172 = vunpack.c.l.b16 %v46
  %v173 = vunpack.c.l.b16 %v47
  %v174 = vunpack.c.l.b16 %v48
  %v175 = vunpack.c.l.b16 %v49
  %v176 = vunpack.c.l.b16 %v50
  %v177 = vunpack.c.l.b16 %v51
  %v178 = vunpack.c.l.b16 %v52
  %v179 = vpack.c.b16 %v172, %v171
  %v180 = vpack.c.b16 %v174, %v173
  %v181 = vpack.c.b16 %v176, %v175
  %v182 = vpack.c.b16 %v178, %v177
  %v189 = vunpack.c.l.b16 %v149
  %v190 = vunpack.c.h.b16 %v149
  %v191 = vunpack.c.l.b16 %v150
  %v192 = vunpack.c.l.b16 %v151
  %v193 = vunpack.c.h.b16 %v151
  %v194 = vunpack.c.l.b16 %v152
  %v195 = vunpack.c.l.b16 %v153
  %v196 = vunpack.c.h.b16 %v153
  %v197 = vunpack.c.l.b16 %v154
  %v198 = vpack.c.b16 %v192, %v189
  %v199 = vpack.c.b16 %v193, %v190
  %v200 = vpack.c.b16 %v194, %v191
  %v201 = vpack.c.b16 %v195, %v195
  %v202 = vpack.c.b16 %v196, %v196
  %v203 = vpack.c.b16 %v197, %v197
  %vm207 = vcmask 195584
  %v209 = vsel %vm207, %v179, 0
  %v212 = vsel %vm207, %v180, 0
  %v215 = vsel %vm207, %v181, 0
  %v218 = vsel %vm207, %v182, 0
  %vm220 = vcmask 1043456
  %v222 = vsel %vm220, %v201, 0
  %v225 = vsel %vm220, %v202, 0
  %v228 = vsel %vm220, %v203, 0
  %230 = vmatpush.bf16.msra.mxu0 0
  %231 = vmatpush.bf16.msra.mxu0 0
  %232 = vmatpush.bf16.msra.mxu0 0
  %233 = vmatpush.bf16.msra.mxu0 0
  %234 = vmatpush.bf16.msra.mxu0 0
  %235 = vmatpush.bf16.msra.mxu0 0
  %236 = vmatpush.bf16.msra.mxu0 %v222
  %237 = vmatpush.bf16.msra.mxu0 %v198
  %238 = vmatmul.bf16.gmra.mxu0 %v209
  %v239 = vpop.f32.mrf.mxu0
  %v240 = vadd.f32 %v157, %v239
  %v241 = vpop.f32.mrf.mxu0
  %v242 = vadd.f32 %v157, %v241
  %243 = vmatmul.bf16.gmra.mxu0 %v212
  %v244 = vpop.f32.mrf.mxu0
  %v245 = vadd.f32 %v157, %v244
  %v246 = vpop.f32.mrf.mxu0
  %v247 = vadd.f32 %v157, %v246
  %248 = vmatmul.bf16.gmra.mxu0 %v215
  %v249 = vpop.f32.mrf.mxu0
  %v250 = vadd.f32 %v157, %v249
  %v251 = vpop.f32.mrf.mxu0
  %v252 = vadd.f32 %v157, %v251
  %253 = vmatmul.bf16.gmra.mxu0 %v218
  %v254 = vpop.f32.mrf.mxu0
  %v255 = vadd.f32 %v157, %v254
  %v256 = vpop.f32.mrf.mxu0
  %v257 = vadd.f32 %v157, %v256
  %258 = vdwg.mxu0
  %259 = vmatpush.bf16.msra.mxu0 0
  %260 = vmatpush.bf16.msra.mxu0 0
  %261 = vmatpush.bf16.msra.mxu0 0
  %262 = vmatpush.bf16.msra.mxu0 0
  %263 = vmatpush.bf16.msra.mxu0 0
  %264 = vmatpush.bf16.msra.mxu0 0
  %265 = vmatpush.bf16.msra.mxu0 %v225
  %266 = vmatpush.bf16.msra.mxu0 %v199
  %267 = vmatmul.bf16.gmra.mxu0 %v209
  %v268 = vpop.f32.mrf.mxu0
  %v269 = vadd.f32 %v158, %v268
  %v270 = vpop.f32.mrf.mxu0
  %v271 = vadd.f32 %v158, %v270
  %272 = vmatmul.bf16.gmra.mxu0 %v212
  %v273 = vpop.f32.mrf.mxu0
  %v274 = vadd.f32 %v158, %v273
  %v275 = vpop.f32.mrf.mxu0
  %v276 = vadd.f32 %v158, %v275
  %277 = vmatmul.bf16.gmra.mxu0 %v215
  %v278 = vpop.f32.mrf.mxu0
  %v279 = vadd.f32 %v158, %v278
  %v280 = vpop.f32.mrf.mxu0
  %v281 = vadd.f32 %v158, %v280
  %282 = vmatmul.bf16.gmra.mxu0 %v218
  %v283 = vpop.f32.mrf.mxu0
  %v284 = vadd.f32 %v158, %v283
  %v285 = vpop.f32.mrf.mxu0
  %v286 = vadd.f32 %v158, %v285
  %287 = vdwg.mxu0
  %288 = vmatpush.bf16.msra.mxu0 0
  %289 = vmatpush.bf16.msra.mxu0 0
  %290 = vmatpush.bf16.msra.mxu0 0
  %291 = vmatpush.bf16.msra.mxu0 0
  %292 = vmatpush.bf16.msra.mxu0 0
  %293 = vmatpush.bf16.msra.mxu0 0
  %294 = vmatpush.bf16.msra.mxu0 %v228
  %295 = vmatpush.bf16.msra.mxu0 %v200
  %296 = vmatmul.bf16.gmra.mxu0 %v209
  %v297 = vpop.f32.mrf.mxu0
  %v298 = vadd.f32 %v159, %v297
  %v299 = vpop.f32.mrf.mxu0
  %v300 = vadd.f32 %v159, %v299
  %301 = vmatmul.bf16.gmra.mxu0 %v212
  %v302 = vpop.f32.mrf.mxu0
  %v303 = vadd.f32 %v159, %v302
  %v304 = vpop.f32.mrf.mxu0
  %v305 = vadd.f32 %v159, %v304
  %306 = vmatmul.bf16.gmra.mxu0 %v215
  %v307 = vpop.f32.mrf.mxu0
  %v308 = vadd.f32 %v159, %v307
  %v309 = vpop.f32.mrf.mxu0
  %v310 = vadd.f32 %v159, %v309
  %311 = vmatmul.bf16.gmra.mxu0 %v218
  %v312 = vpop.f32.mrf.mxu0
  %v313 = vadd.f32 %v159, %v312
  %v314 = vpop.f32.mrf.mxu0
  %v315 = vadd.f32 %v159, %v314
  %316 = vdwg.mxu0
  %v317 = vld [vmem:[%s4] sm:$0x7]
  %v319 = vperm.slane %v317, 0
  %v320 = vperm.slane %v317, 1
  %v321 = vperm.slane %v317, 2
  %v325 = vld [vmem:[%s7] sm:$0x7]
  %v327 = vperm.slane %v325, 0
  %v328 = vperm.slane %v325, 1
  %v329 = vperm.slane %v325, 2
  %v333 = vld [vmem:[%s8] sm:$0x7]
  %v335 = vperm.slane %v333, 0
  %v336 = vperm.slane %v333, 1
  %v337 = vperm.slane %v333, 2
  %v373 = vunpack.c.l.b16 %v117
  %v374 = vunpack.c.h.b16 %v117
  %v375 = vunpack.c.l.b16 %v118
  %v376 = vunpack.c.l.b16 %v119
  %v377 = vunpack.c.h.b16 %v119
  %v378 = vunpack.c.l.b16 %v120
  %v379 = vunpack.c.l.b16 %v121
  %v380 = vunpack.c.h.b16 %v121
  %v381 = vunpack.c.l.b16 %v122
  %v382 = vunpack.c.l.b16 %v123
  %v383 = vunpack.c.h.b16 %v123
  %v384 = vunpack.c.l.b16 %v124
  %v385 = vunpack.c.l.b16 %v125
  %v386 = vunpack.c.h.b16 %v125
  %v387 = vunpack.c.l.b16 %v126
  %v388 = vunpack.c.l.b16 %v127
  %v389 = vunpack.c.h.b16 %v127
  %v390 = vunpack.c.l.b16 %v128
  %v391 = vunpack.c.l.b16 %v129
  %v392 = vunpack.c.h.b16 %v129
  %v393 = vunpack.c.l.b16 %v130
  %v394 = vunpack.c.l.b16 %v131
  %v395 = vunpack.c.h.b16 %v131
  %v396 = vunpack.c.l.b16 %v132
  %v397 = vunpack.c.l.b16 %v133
  %v398 = vunpack.c.h.b16 %v133
  %v399 = vunpack.c.l.b16 %v134
  %v400 = vunpack.c.l.b16 %v135
  %v401 = vunpack.c.h.b16 %v135
  %v402 = vunpack.c.l.b16 %v136
  %v403 = vunpack.c.l.b16 %v137
  %v404 = vunpack.c.h.b16 %v137
  %v405 = vunpack.c.l.b16 %v138
  %v406 = vunpack.c.l.b16 %v139
  %v407 = vunpack.c.h.b16 %v139
  %v408 = vunpack.c.l.b16 %v140
  %v409 = vunpack.c.l.b16 %v141
  %v410 = vunpack.c.h.b16 %v141
  %v411 = vunpack.c.l.b16 %v142
  %v412 = vunpack.c.l.b16 %v143
  %v413 = vunpack.c.h.b16 %v143
  %v414 = vunpack.c.l.b16 %v144
  %v415 = vunpack.c.l.b16 %v145
  %v416 = vunpack.c.h.b16 %v145
  %v417 = vunpack.c.l.b16 %v146
  %v418 = vunpack.c.l.b16 %v147
  %v419 = vunpack.c.h.b16 %v147
  %v420 = vunpack.c.l.b16 %v148
  %v421 = vpack.c.b16 %v376, %v373
  %v422 = vpack.c.b16 %v377, %v374
  %v423 = vpack.c.b16 %v378, %v375
  %v424 = vpack.c.b16 %v382, %v379
  %v425 = vpack.c.b16 %v383, %v380
  %v426 = vpack.c.b16 %v384, %v381
  %v427 = vpack.c.b16 %v388, %v385
  %v428 = vpack.c.b16 %v389, %v386
  %v429 = vpack.c.b16 %v390, %v387
  %v430 = vpack.c.b16 %v394, %v391
  %v431 = vpack.c.b16 %v395, %v392
  %v432 = vpack.c.b16 %v396, %v393
  %v433 = vpack.c.b16 %v400, %v397
  %v434 = vpack.c.b16 %v401, %v398
  %v435 = vpack.c.b16 %v402, %v399
  %v436 = vpack.c.b16 %v406, %v403
  %v437 = vpack.c.b16 %v407, %v404
  %v438 = vpack.c.b16 %v408, %v405
  %v439 = vpack.c.b16 %v412, %v409
  %v440 = vpack.c.b16 %v413, %v410
  %v441 = vpack.c.b16 %v414, %v411
  %v442 = vpack.c.b16 %v418, %v415
  %v443 = vpack.c.b16 %v419, %v416
  %v444 = vpack.c.b16 %v420, %v417
  %469 = vmatpush.bf16.msra.mxu0 %v442
  %470 = vmatpush.bf16.msra.mxu0 %v439
  %471 = vmatpush.bf16.msra.mxu0 %v436
  %472 = vmatpush.bf16.msra.mxu0 %v433
  %473 = vmatpush.bf16.msra.mxu0 %v430
  %474 = vmatpush.bf16.msra.mxu0 %v427
  %475 = vmatpush.bf16.msra.mxu0 %v424
  %476 = vmatpush.bf16.msra.mxu0 %v421
  %477 = vmatmul.bf16.gmra.mxu0 0
  %v478 = vpop.f32.mrf.mxu0
  %v479 = vadd.f32 %v335, %v478
  %v480 = vpop.f32.mrf.mxu0
  %481 = vdwg.mxu0
  %482 = vmatpush.bf16.msra.mxu0 %v443
  %483 = vmatpush.bf16.msra.mxu0 %v440
  %484 = vmatpush.bf16.msra.mxu0 %v437
  %485 = vmatpush.bf16.msra.mxu0 %v434
  %486 = vmatpush.bf16.msra.mxu0 %v431
  %487 = vmatpush.bf16.msra.mxu0 %v428
  %488 = vmatpush.bf16.msra.mxu0 %v425
  %489 = vmatpush.bf16.msra.mxu0 %v422
  %490 = vmatmul.bf16.gmra.mxu0 0
  %v491 = vpop.f32.mrf.mxu0
  %v492 = vadd.f32 %v336, %v491
  %v493 = vpop.f32.mrf.mxu0
  %494 = vdwg.mxu0
  %495 = vmatpush.bf16.msra.mxu0 %v444
  %496 = vmatpush.bf16.msra.mxu0 %v441
  %497 = vmatpush.bf16.msra.mxu0 %v438
  %498 = vmatpush.bf16.msra.mxu0 %v435
  %499 = vmatpush.bf16.msra.mxu0 %v432
  %500 = vmatpush.bf16.msra.mxu0 %v429
  %501 = vmatpush.bf16.msra.mxu0 %v426
  %502 = vmatpush.bf16.msra.mxu0 %v423
  %503 = vmatmul.bf16.gmra.mxu0 0
  %v504 = vpop.f32.mrf.mxu0
  %v505 = vadd.f32 %v337, %v504
  %v506 = vpop.f32.mrf.mxu0
  %507 = vdwg.mxu0
  %v540 = vunpack.c.l.b16 %v53
  %v541 = vunpack.c.h.b16 %v53
  %v542 = vunpack.c.l.b16 %v54
  %v543 = vunpack.c.l.b16 %v55
  %v544 = vunpack.c.h.b16 %v55
  %v545 = vunpack.c.l.b16 %v56
  %v546 = vunpack.c.l.b16 %v57
  %v547 = vunpack.c.h.b16 %v57
  %v548 = vunpack.c.l.b16 %v58
  %v549 = vunpack.c.l.b16 %v59
  %v550 = vunpack.c.h.b16 %v59
  %v551 = vunpack.c.l.b16 %v60
  %v552 = vunpack.c.l.b16 %v61
  %v553 = vunpack.c.h.b16 %v61
  %v554 = vunpack.c.l.b16 %v62
  %v555 = vunpack.c.l.b16 %v63
  %v556 = vunpack.c.h.b16 %v63
  %v557 = vunpack.c.l.b16 %v64
  %v558 = vunpack.c.l.b16 %v65
  %v559 = vunpack.c.h.b16 %v65
  %v560 = vunpack.c.l.b16 %v66
  %v561 = vunpack.c.l.b16 %v67
  %v562 = vunpack.c.h.b16 %v67
  %v563 = vunpack.c.l.b16 %v68
  %v564 = vunpack.c.l.b16 %v69
  %v565 = vunpack.c.h.b16 %v69
  %v566 = vunpack.c.l.b16 %v70
  %v567 = vunpack.c.l.b16 %v71
  %v568 = vunpack.c.h.b16 %v71
  %v569 = vunpack.c.l.b16 %v72
  %v570 = vunpack.c.l.b16 %v73
  %v571 = vunpack.c.h.b16 %v73
  %v572 = vunpack.c.l.b16 %v74
  %v573 = vunpack.c.l.b16 %v75
  %v574 = vunpack.c.h.b16 %v75
  %v575 = vunpack.c.l.b16 %v76
  %v576 = vunpack.c.l.b16 %v77
  %v577 = vunpack.c.h.b16 %v77
  %v578 = vunpack.c.l.b16 %v78
  %v579 = vunpack.c.l.b16 %v79
  %v580 = vunpack.c.h.b16 %v79
  %v581 = vunpack.c.l.b16 %v80
  %v582 = vunpack.c.l.b16 %v81
  %v583 = vunpack.c.h.b16 %v81
  %v584 = vunpack.c.l.b16 %v82
  %v585 = vunpack.c.l.b16 %v83
  %v586 = vunpack.c.h.b16 %v83
  %v587 = vunpack.c.l.b16 %v84
  %v588 = vpack.c.b16 %v543, %v540
  %v589 = vpack.c.b16 %v544, %v541
  %v590 = vpack.c.b16 %v545, %v542
  %v591 = vpack.c.b16 %v549, %v546
  %v592 = vpack.c.b16 %v550, %v547
  %v593 = vpack.c.b16 %v551, %v548
  %v594 = vpack.c.b16 %v555, %v552
  %v595 = vpack.c.b16 %v556, %v553
  %v596 = vpack.c.b16 %v557, %v554
  %v597 = vpack.c.b16 %v561, %v558
  %v598 = vpack.c.b16 %v562, %v559
  %v599 = vpack.c.b16 %v563, %v560
  %v600 = vpack.c.b16 %v567, %v564
  %v601 = vpack.c.b16 %v568, %v565
  %v602 = vpack.c.b16 %v569, %v566
  %v603 = vpack.c.b16 %v573, %v570
  %v604 = vpack.c.b16 %v574, %v571
  %v605 = vpack.c.b16 %v575, %v572
  %v606 = vpack.c.b16 %v579, %v576
  %v607 = vpack.c.b16 %v580, %v577
  %v608 = vpack.c.b16 %v581, %v578
  %v609 = vpack.c.b16 %v585, %v582
  %v610 = vpack.c.b16 %v586, %v583
  %v611 = vpack.c.b16 %v587, %v584
  %636 = vmatpush.bf16.msra.mxu0 %v609
  %637 = vmatpush.bf16.msra.mxu0 %v606
  %638 = vmatpush.bf16.msra.mxu0 %v603
  %639 = vmatpush.bf16.msra.mxu0 %v600
  %640 = vmatpush.bf16.msra.mxu0 %v597
  %641 = vmatpush.bf16.msra.mxu0 %v594
  %642 = vmatpush.bf16.msra.mxu0 %v591
  %643 = vmatpush.bf16.msra.mxu0 %v588
  %644 = vmatmul.bf16.gmra.mxu0 0
  %v645 = vpop.f32.mrf.mxu0
  %v646 = vadd.f32 %v319, %v645
  %v647 = vpop.f32.mrf.mxu0
  %648 = vdwg.mxu0
  %649 = vmatpush.bf16.msra.mxu0 %v610
  %650 = vmatpush.bf16.msra.mxu0 %v607
  %651 = vmatpush.bf16.msra.mxu0 %v604
  %652 = vmatpush.bf16.msra.mxu0 %v601
  %653 = vmatpush.bf16.msra.mxu0 %v598
  %654 = vmatpush.bf16.msra.mxu0 %v595
  %655 = vmatpush.bf16.msra.mxu0 %v592
  %656 = vmatpush.bf16.msra.mxu0 %v589
  %657 = vmatmul.bf16.gmra.mxu0 0
  %v658 = vpop.f32.mrf.mxu0
  %v659 = vadd.f32 %v320, %v658
  %v660 = vpop.f32.mrf.mxu0
  %661 = vdwg.mxu0
  %662 = vmatpush.bf16.msra.mxu0 %v611
  %663 = vmatpush.bf16.msra.mxu0 %v608
  %664 = vmatpush.bf16.msra.mxu0 %v605
  %665 = vmatpush.bf16.msra.mxu0 %v602
  %666 = vmatpush.bf16.msra.mxu0 %v599
  %667 = vmatpush.bf16.msra.mxu0 %v596
  %668 = vmatpush.bf16.msra.mxu0 %v593
  %669 = vmatpush.bf16.msra.mxu0 %v590
  %670 = vmatmul.bf16.gmra.mxu0 0
  %v671 = vpop.f32.mrf.mxu0
  %v672 = vadd.f32 %v321, %v671
  %v673 = vpop.f32.mrf.mxu0
  %674 = vdwg.mxu0
  %v675 = vadd.f32 %v240, %v646
  %v676 = vxor.u32 %v675, 2147483648
  %v677 = vmul.f32 %v676, 1.442695
  %v678 = vpow.pop %v677
  %v679 = vadd.f32 %v678, 1.0
  %v680 = vrcp.pop %v679
  %v681 = vmul.f32 %v679, %v680
  %v682 = vsub.f32 1.0, %v681
  %v683 = vmul.f32 %v680, %v682
  %v684 = vadd.f32 %v680, %v683
  %vm685 = vweird.f32 %v679
  %vm686 = vweird.f32 %v680
  %vm687 = vmor %vm685, %vm686
  %v688 = vsel %vm687, %v680, %v684
  %v689 = vand.u32 2147483647, %v679
  %vm690 = vcmp.eq.f32.partialorder %v689, 8.507059e+37
  %v691 = vand.u32 %v679, 2147483648
  %v692 = vor.u32 1.1754944e-38, %v691
  %v693 = vsel %vm690, %v692, %v688
  %v694 = vmul.f32 1.0, %v693
  %v695 = vadd.f32 %v269, %v659
  %v696 = vxor.u32 %v695, 2147483648
  %v697 = vmul.f32 %v696, 1.442695
  %v698 = vpow.pop %v697
  %v699 = vadd.f32 %v698, 1.0
  %v700 = vrcp.pop %v699
  %v701 = vmul.f32 %v699, %v700
  %v702 = vsub.f32 1.0, %v701
  %v703 = vmul.f32 %v700, %v702
  %v704 = vadd.f32 %v700, %v703
  %vm705 = vweird.f32 %v699
  %vm706 = vweird.f32 %v700
  %vm707 = vmor %vm705, %vm706
  %v708 = vsel %vm707, %v700, %v704
  %v709 = vand.u32 2147483647, %v699
  %vm710 = vcmp.eq.f32.partialorder %v709, 8.507059e+37
  %v711 = vand.u32 %v699, 2147483648
  %v712 = vor.u32 1.1754944e-38, %v711
  %v713 = vsel %vm710, %v712, %v708
  %v714 = vmul.f32 1.0, %v713
  %v715 = vmul.f32 %v694, %v672
  %v716 = vadd.f32 %v298, %v715
  %v717 = vtanh.pop %v716
  %v718 = vsub.f32 1.0, %v714
  %v719 = vmul.f32 %v718, %v717
  %v720 = vmul.f32 %v714, 0.0
  %v721 = vadd.f32 %v719, %v720
  %v722 = vpack.c.bf16 %v721, %v721
  %v755 = vunpack.c.l.b16 %v85
  %v756 = vunpack.c.h.b16 %v85
  %v757 = vunpack.c.l.b16 %v86
  %v758 = vunpack.c.l.b16 %v87
  %v759 = vunpack.c.h.b16 %v87
  %v760 = vunpack.c.l.b16 %v88
  %v761 = vunpack.c.l.b16 %v89
  %v762 = vunpack.c.h.b16 %v89
  %v763 = vunpack.c.l.b16 %v90
  %v764 = vunpack.c.l.b16 %v91
  %v765 = vunpack.c.h.b16 %v91
  %v766 = vunpack.c.l.b16 %v92
  %v767 = vunpack.c.l.b16 %v93
  %v768 = vunpack.c.h.b16 %v93
  %v769 = vunpack.c.l.b16 %v94
  %v770 = vunpack.c.l.b16 %v95
  %v771 = vunpack.c.h.b16 %v95
  %v772 = vunpack.c.l.b16 %v96
  %v773 = vunpack.c.l.b16 %v97
  %v774 = vunpack.c.h.b16 %v97
  %v775 = vunpack.c.l.b16 %v98
  %v776 = vunpack.c.l.b16 %v99
  %v777 = vunpack.c.h.b16 %v99
  %v778 = vunpack.c.l.b16 %v100
  %v779 = vunpack.c.l.b16 %v101
  %v780 = vunpack.c.h.b16 %v101
  %v781 = vunpack.c.l.b16 %v102
  %v782 = vunpack.c.l.b16 %v103
  %v783 = vunpack.c.h.b16 %v103
  %v784 = vunpack.c.l.b16 %v104
  %v785 = vunpack.c.l.b16 %v105
  %v786 = vunpack.c.h.b16 %v105
  %v787 = vunpack.c.l.b16 %v106
  %v788 = vunpack.c.l.b16 %v107
  %v789 = vunpack.c.h.b16 %v107
  %v790 = vunpack.c.l.b16 %v108
  %v791 = vunpack.c.l.b16 %v109
  %v792 = vunpack.c.h.b16 %v109
  %v793 = vunpack.c.l.b16 %v110
  %v794 = vunpack.c.l.b16 %v111
  %v795 = vunpack.c.h.b16 %v111
  %v796 = vunpack.c.l.b16 %v112
  %v797 = vunpack.c.l.b16 %v113
  %v798 = vunpack.c.h.b16 %v113
  %v799 = vunpack.c.l.b16 %v114
  %v800 = vunpack.c.l.b16 %v115
  %v801 = vunpack.c.h.b16 %v115
  %v802 = vunpack.c.l.b16 %v116
  %v803 = vpack.c.b16 %v758, %v755
  %v804 = vpack.c.b16 %v759, %v756
  %v805 = vpack.c.b16 %v760, %v757
  %v806 = vpack.c.b16 %v764, %v761
  %v807 = vpack.c.b16 %v765, %v762
  %v808 = vpack.c.b16 %v766, %v763
  %v809 = vpack.c.b16 %v770, %v767
  %v810 = vpack.c.b16 %v771, %v768
  %v811 = vpack.c.b16 %v772, %v769
  %v812 = vpack.c.b16 %v776, %v773
  %v813 = vpack.c.b16 %v777, %v774
  %v814 = vpack.c.b16 %v778, %v775
  %v815 = vpack.c.b16 %v782, %v779
  %v816 = vpack.c.b16 %v783, %v780
  %v817 = vpack.c.b16 %v784, %v781
  %v818 = vpack.c.b16 %v788, %v785
  %v819 = vpack.c.b16 %v789, %v786
  %v820 = vpack.c.b16 %v790, %v787
  %v821 = vpack.c.b16 %v794, %v791
  %v822 = vpack.c.b16 %v795, %v792
  %v823 = vpack.c.b16 %v796, %v793
  %v824 = vpack.c.b16 %v800, %v797
  %v825 = vpack.c.b16 %v801, %v798
  %v826 = vpack.c.b16 %v802, %v799
  %851 = vmatpush.bf16.msra.mxu0 %v824
  %852 = vmatpush.bf16.msra.mxu0 %v821
  %853 = vmatpush.bf16.msra.mxu0 %v818
  %854 = vmatpush.bf16.msra.mxu0 %v815
  %855 = vmatpush.bf16.msra.mxu0 %v812
  %856 = vmatpush.bf16.msra.mxu0 %v809
  %857 = vmatpush.bf16.msra.mxu0 %v806
  %858 = vmatpush.bf16.msra.mxu0 %v803
  %859 = vmatmul.bf16.gmra.mxu0 %v722
  %v860 = vpop.f32.mrf.mxu0
  %v861 = vadd.f32 %v327, %v860
  %v862 = vpop.f32.mrf.mxu0
  %863 = vdwg.mxu0
  %864 = vmatpush.bf16.msra.mxu0 %v825
  %865 = vmatpush.bf16.msra.mxu0 %v822
  %866 = vmatpush.bf16.msra.mxu0 %v819
  %867 = vmatpush.bf16.msra.mxu0 %v816
  %868 = vmatpush.bf16.msra.mxu0 %v813
  %869 = vmatpush.bf16.msra.mxu0 %v810
  %870 = vmatpush.bf16.msra.mxu0 %v807
  %871 = vmatpush.bf16.msra.mxu0 %v804
  %872 = vmatmul.bf16.gmra.mxu0 %v722
  %v873 = vpop.f32.mrf.mxu0
  %v874 = vadd.f32 %v328, %v873
  %v875 = vpop.f32.mrf.mxu0
  %876 = vdwg.mxu0
  %877 = vmatpush.bf16.msra.mxu0 %v826
  %878 = vmatpush.bf16.msra.mxu0 %v823
  %879 = vmatpush.bf16.msra.mxu0 %v820
  %880 = vmatpush.bf16.msra.mxu0 %v817
  %881 = vmatpush.bf16.msra.mxu0 %v814
  %882 = vmatpush.bf16.msra.mxu0 %v811
  %883 = vmatpush.bf16.msra.mxu0 %v808
  %884 = vmatpush.bf16.msra.mxu0 %v805
  %885 = vmatmul.bf16.gmra.mxu0 %v722
  %v886 = vpop.f32.mrf.mxu0
  %v887 = vadd.f32 %v329, %v886
  %v888 = vpop.f32.mrf.mxu0
  %889 = vdwg.mxu0
  %v890 = vadd.f32 %v861, %v479
  %v891 = vxor.u32 %v890, 2147483648
  %v892 = vmul.f32 %v891, 1.442695
  %v893 = vpow.pop %v892
  %v894 = vadd.f32 %v893, 1.0
  %v895 = vrcp.pop %v894
  %v896 = vmul.f32 %v894, %v895
  %v897 = vsub.f32 1.0, %v896
  %v898 = vmul.f32 %v895, %v897
  %v899 = vadd.f32 %v895, %v898
  %vm900 = vweird.f32 %v894
  %vm901 = vweird.f32 %v895
  %vm902 = vmor %vm900, %vm901
  %v903 = vsel %vm902, %v895, %v899
  %v904 = vand.u32 2147483647, %v894
  %vm905 = vcmp.eq.f32.partialorder %v904, 8.507059e+37
  %v906 = vand.u32 %v894, 2147483648
  %v907 = vor.u32 1.1754944e-38, %v906
  %v908 = vsel %vm905, %v907, %v903
  %v909 = vmul.f32 1.0, %v908
  %v910 = vadd.f32 %v874, %v492
  %v911 = vxor.u32 %v910, 2147483648
  %v912 = vmul.f32 %v911, 1.442695
  %v913 = vpow.pop %v912
  %v914 = vadd.f32 %v913, 1.0
  %v915 = vrcp.pop %v914
  %v916 = vmul.f32 %v914, %v915
  %v917 = vsub.f32 1.0, %v916
  %v918 = vmul.f32 %v915, %v917
  %v919 = vadd.f32 %v915, %v918
  %vm920 = vweird.f32 %v914
  %vm921 = vweird.f32 %v915
  %vm922 = vmor %vm920, %vm921
  %v923 = vsel %vm922, %v915, %v919
  %v924 = vand.u32 2147483647, %v914
  %vm925 = vcmp.eq.f32.partialorder %v924, 8.507059e+37
  %v926 = vand.u32 %v914, 2147483648
  %v927 = vor.u32 1.1754944e-38, %v926
  %v928 = vsel %vm925, %v927, %v923
  %v929 = vmul.f32 1.0, %v928
  %v930 = vmul.f32 %v909, %v505
  %v931 = vadd.f32 %v887, %v930
  %v932 = vtanh.pop %v931
  %v933 = vsub.f32 1.0, %v929
  %v934 = vmul.f32 %v933, %v932
  %v935 = vmul.f32 %v929, 0.0
  %v936 = vadd.f32 %v934, %v935
  %v937 = vpack.c.bf16 %v936, %v936
  %938 = vmatpush.bf16.msra.mxu0 %v442
  %939 = vmatpush.bf16.msra.mxu0 %v439
  %940 = vmatpush.bf16.msra.mxu0 %v436
  %941 = vmatpush.bf16.msra.mxu0 %v433
  %942 = vmatpush.bf16.msra.mxu0 %v430
  %943 = vmatpush.bf16.msra.mxu0 %v427
  %944 = vmatpush.bf16.msra.mxu0 %v424
  %945 = vmatpush.bf16.msra.mxu0 %v421
  %946 = vmatmul.bf16.gmra.mxu0 %v937
  %v947 = vpop.f32.mrf.mxu0
  %v948 = vadd.f32 %v335, %v947
  %v949 = vpop.f32.mrf.mxu0
  %950 = vdwg.mxu0
  %951 = vmatpush.bf16.msra.mxu0 %v443
  %952 = vmatpush.bf16.msra.mxu0 %v440
  %953 = vmatpush.bf16.msra.mxu0 %v437
  %954 = vmatpush.bf16.msra.mxu0 %v434
  %955 = vmatpush.bf16.msra.mxu0 %v431
  %956 = vmatpush.bf16.msra.mxu0 %v428
  %957 = vmatpush.bf16.msra.mxu0 %v425
  %958 = vmatpush.bf16.msra.mxu0 %v422
  %959 = vmatmul.bf16.gmra.mxu0 %v937
  %v960 = vpop.f32.mrf.mxu0
  %v961 = vadd.f32 %v336, %v960
  %v962 = vpop.f32.mrf.mxu0
  %963 = vdwg.mxu0
  %964 = vmatpush.bf16.msra.mxu0 %v444
  %965 = vmatpush.bf16.msra.mxu0 %v441
  %966 = vmatpush.bf16.msra.mxu0 %v438
  %967 = vmatpush.bf16.msra.mxu0 %v435
  %968 = vmatpush.bf16.msra.mxu0 %v432
  %969 = vmatpush.bf16.msra.mxu0 %v429
  %970 = vmatpush.bf16.msra.mxu0 %v426
  %971 = vmatpush.bf16.msra.mxu0 %v423
  %972 = vmatmul.bf16.gmra.mxu0 %v937
  %v973 = vpop.f32.mrf.mxu0
  %v974 = vadd.f32 %v337, %v973
  %v975 = vpop.f32.mrf.mxu0
  %976 = vdwg.mxu0
  %977 = vmatpush.bf16.msra.mxu0 %v609
  %978 = vmatpush.bf16.msra.mxu0 %v606
  %979 = vmatpush.bf16.msra.mxu0 %v603
  %980 = vmatpush.bf16.msra.mxu0 %v600
  %981 = vmatpush.bf16.msra.mxu0 %v597
  %982 = vmatpush.bf16.msra.mxu0 %v594
  %983 = vmatpush.bf16.msra.mxu0 %v591
  %984 = vmatpush.bf16.msra.mxu0 %v588
  %985 = vmatmul.bf16.gmra.mxu0 %v722
  %v986 = vpop.f32.mrf.mxu0
  %v987 = vadd.f32 %v319, %v986
  %v988 = vpop.f32.mrf.mxu0
  %989 = vdwg.mxu0
  %990 = vmatpush.bf16.msra.mxu0 %v610
  %991 = vmatpush.bf16.msra.mxu0 %v607
  %992 = vmatpush.bf16.msra.mxu0 %v604
  %993 = vmatpush.bf16.msra.mxu0 %v601
  %994 = vmatpush.bf16.msra.mxu0 %v598
  %995 = vmatpush.bf16.msra.mxu0 %v595
  %996 = vmatpush.bf16.msra.mxu0 %v592
  %997 = vmatpush.bf16.msra.mxu0 %v589
  %998 = vmatmul.bf16.gmra.mxu0 %v722
  %v999 = vpop.f32.mrf.mxu0
  %v1000 = vadd.f32 %v320, %v999
  %v1001 = vpop.f32.mrf.mxu0
  %1002 = vdwg.mxu0
  %1003 = vmatpush.bf16.msra.mxu0 %v611
  %1004 = vmatpush.bf16.msra.mxu0 %v608
  %1005 = vmatpush.bf16.msra.mxu0 %v605
  %1006 = vmatpush.bf16.msra.mxu0 %v602
  %1007 = vmatpush.bf16.msra.mxu0 %v599
  %1008 = vmatpush.bf16.msra.mxu0 %v596
  %1009 = vmatpush.bf16.msra.mxu0 %v593
  %1010 = vmatpush.bf16.msra.mxu0 %v590
  %1011 = vmatmul.bf16.gmra.mxu0 %v722
  %v1012 = vpop.f32.mrf.mxu0
  %v1013 = vadd.f32 %v321, %v1012
  %v1014 = vpop.f32.mrf.mxu0
  %1015 = vdwg.mxu0
  %v1016 = vadd.f32 %v242, %v987
  %v1017 = vxor.u32 %v1016, 2147483648
  %v1018 = vmul.f32 %v1017, 1.442695
  %v1019 = vpow.pop %v1018
  %v1020 = vadd.f32 %v1019, 1.0
  %v1021 = vrcp.pop %v1020
  %v1022 = vmul.f32 %v1020, %v1021
  %v1023 = vsub.f32 1.0, %v1022
  %v1024 = vmul.f32 %v1021, %v1023
  %v1025 = vadd.f32 %v1021, %v1024
  %vm1026 = vweird.f32 %v1020
  %vm1027 = vweird.f32 %v1021
  %vm1028 = vmor %vm1026, %vm1027
  %v1029 = vsel %vm1028, %v1021, %v1025
  %v1030 = vand.u32 2147483647, %v1020
  %vm1031 = vcmp.eq.f32.partialorder %v1030, 8.507059e+37
  %v1032 = vand.u32 %v1020, 2147483648
  %v1033 = vor.u32 1.1754944e-38, %v1032
  %v1034 = vsel %vm1031, %v1033, %v1029
  %v1035 = vmul.f32 1.0, %v1034
  %v1036 = vadd.f32 %v271, %v1000
  %v1037 = vxor.u32 %v1036, 2147483648
  %v1038 = vmul.f32 %v1037, 1.442695
  %v1039 = vpow.pop %v1038
  %v1040 = vadd.f32 %v1039, 1.0
  %v1041 = vrcp.pop %v1040
  %v1042 = vmul.f32 %v1040, %v1041
  %v1043 = vsub.f32 1.0, %v1042
  %v1044 = vmul.f32 %v1041, %v1043
  %v1045 = vadd.f32 %v1041, %v1044
  %vm1046 = vweird.f32 %v1040
  %vm1047 = vweird.f32 %v1041
  %vm1048 = vmor %vm1046, %vm1047
  %v1049 = vsel %vm1048, %v1041, %v1045
  %v1050 = vand.u32 2147483647, %v1040
  %vm1051 = vcmp.eq.f32.partialorder %v1050, 8.507059e+37
  %v1052 = vand.u32 %v1040, 2147483648
  %v1053 = vor.u32 1.1754944e-38, %v1052
  %v1054 = vsel %vm1051, %v1053, %v1049
  %v1055 = vmul.f32 1.0, %v1054
  %v1056 = vmul.f32 %v1035, %v1013
  %v1057 = vadd.f32 %v300, %v1056
  %v1058 = vtanh.pop %v1057
  %v1059 = vsub.f32 1.0, %v1055
  %v1060 = vmul.f32 %v1059, %v1058
  %v1061 = vmul.f32 %v1055, %v721
  %v1062 = vadd.f32 %v1060, %v1061
  %v1063 = vpack.c.bf16 %v1062, %v1062
  %1064 = vmatpush.bf16.msra.mxu0 %v824
  %1065 = vmatpush.bf16.msra.mxu0 %v821
  %1066 = vmatpush.bf16.msra.mxu0 %v818
  %1067 = vmatpush.bf16.msra.mxu0 %v815
  %1068 = vmatpush.bf16.msra.mxu0 %v812
  %1069 = vmatpush.bf16.msra.mxu0 %v809
  %1070 = vmatpush.bf16.msra.mxu0 %v806
  %1071 = vmatpush.bf16.msra.mxu0 %v803
  %1072 = vmatmul.bf16.gmra.mxu0 %v1063
  %v1073 = vpop.f32.mrf.mxu0
  %v1074 = vadd.f32 %v327, %v1073
  %v1075 = vpop.f32.mrf.mxu0
  %1076 = vdwg.mxu0
  %1077 = vmatpush.bf16.msra.mxu0 %v825
  %1078 = vmatpush.bf16.msra.mxu0 %v822
  %1079 = vmatpush.bf16.msra.mxu0 %v819
  %1080 = vmatpush.bf16.msra.mxu0 %v816
  %1081 = vmatpush.bf16.msra.mxu0 %v813
  %1082 = vmatpush.bf16.msra.mxu0 %v810
  %1083 = vmatpush.bf16.msra.mxu0 %v807
  %1084 = vmatpush.bf16.msra.mxu0 %v804
  %1085 = vmatmul.bf16.gmra.mxu0 %v1063
  %v1086 = vpop.f32.mrf.mxu0
  %v1087 = vadd.f32 %v328, %v1086
  %v1088 = vpop.f32.mrf.mxu0
  %1089 = vdwg.mxu0
  %1090 = vmatpush.bf16.msra.mxu0 %v826
  %1091 = vmatpush.bf16.msra.mxu0 %v823
  %1092 = vmatpush.bf16.msra.mxu0 %v820
  %1093 = vmatpush.bf16.msra.mxu0 %v817
  %1094 = vmatpush.bf16.msra.mxu0 %v814
  %1095 = vmatpush.bf16.msra.mxu0 %v811
  %1096 = vmatpush.bf16.msra.mxu0 %v808
  %1097 = vmatpush.bf16.msra.mxu0 %v805
  %1098 = vmatmul.bf16.gmra.mxu0 %v1063
  %v1099 = vpop.f32.mrf.mxu0
  %v1100 = vadd.f32 %v329, %v1099
  %v1101 = vpop.f32.mrf.mxu0
  %1102 = vdwg.mxu0
  %v1103 = vadd.f32 %v1074, %v948
  %v1104 = vxor.u32 %v1103, 2147483648
  %v1105 = vmul.f32 %v1104, 1.442695
  %v1106 = vpow.pop %v1105
  %v1107 = vadd.f32 %v1106, 1.0
  %v1108 = vrcp.pop %v1107
  %v1109 = vmul.f32 %v1107, %v1108
  %v1110 = vsub.f32 1.0, %v1109
  %v1111 = vmul.f32 %v1108, %v1110
  %v1112 = vadd.f32 %v1108, %v1111
  %vm1113 = vweird.f32 %v1107
  %vm1114 = vweird.f32 %v1108
  %vm1115 = vmor %vm1113, %vm1114
  %v1116 = vsel %vm1115, %v1108, %v1112
  %v1117 = vand.u32 2147483647, %v1107
  %vm1118 = vcmp.eq.f32.partialorder %v1117, 8.507059e+37
  %v1119 = vand.u32 %v1107, 2147483648
  %v1120 = vor.u32 1.1754944e-38, %v1119
  %v1121 = vsel %vm1118, %v1120, %v1116
  %v1122 = vmul.f32 1.0, %v1121
  %v1123 = vadd.f32 %v1087, %v961
  %v1124 = vxor.u32 %v1123, 2147483648
  %v1125 = vmul.f32 %v1124, 1.442695
  %v1126 = vpow.pop %v1125
  %v1127 = vadd.f32 %v1126, 1.0
  %v1128 = vrcp.pop %v1127
  %v1129 = vmul.f32 %v1127, %v1128
  %v1130 = vsub.f32 1.0, %v1129
  %v1131 = vmul.f32 %v1128, %v1130
  %v1132 = vadd.f32 %v1128, %v1131
  %vm1133 = vweird.f32 %v1127
  %vm1134 = vweird.f32 %v1128
  %vm1135 = vmor %vm1133, %vm1134
  %v1136 = vsel %vm1135, %v1128, %v1132
  %v1137 = vand.u32 2147483647, %v1127
  %vm1138 = vcmp.eq.f32.partialorder %v1137, 8.507059e+37
  %v1139 = vand.u32 %v1127, 2147483648
  %v1140 = vor.u32 1.1754944e-38, %v1139
  %v1141 = vsel %vm1138, %v1140, %v1136
  %v1142 = vmul.f32 1.0, %v1141
  %v1143 = vmul.f32 %v1122, %v974
  %v1144 = vadd.f32 %v1100, %v1143
  %v1145 = vtanh.pop %v1144
  %v1146 = vsub.f32 1.0, %v1142
  %v1147 = vmul.f32 %v1146, %v1145
  %v1148 = vmul.f32 %v1142, %v936
  %v1149 = vadd.f32 %v1147, %v1148
  %v1150 = vpack.c.bf16 %v1149, %v1149
  %1151 = vmatpush.bf16.msra.mxu0 %v442
  %1152 = vmatpush.bf16.msra.mxu0 %v439
  %1153 = vmatpush.bf16.msra.mxu0 %v436
  %1154 = vmatpush.bf16.msra.mxu0 %v433
  %1155 = vmatpush.bf16.msra.mxu0 %v430
  %1156 = vmatpush.bf16.msra.mxu0 %v427
  %1157 = vmatpush.bf16.msra.mxu0 %v424
  %1158 = vmatpush.bf16.msra.mxu0 %v421
  %1159 = vmatmul.bf16.gmra.mxu0 %v1150
  %v1160 = vpop.f32.mrf.mxu0
  %v1161 = vadd.f32 %v335, %v1160
  %v1162 = vpop.f32.mrf.mxu0
  %1163 = vdwg.mxu0
  %1164 = vmatpush.bf16.msra.mxu0 %v443
  %1165 = vmatpush.bf16.msra.mxu0 %v440
  %1166 = vmatpush.bf16.msra.mxu0 %v437
  %1167 = vmatpush.bf16.msra.mxu0 %v434
  %1168 = vmatpush.bf16.msra.mxu0 %v431
  %1169 = vmatpush.bf16.msra.mxu0 %v428
  %1170 = vmatpush.bf16.msra.mxu0 %v425
  %1171 = vmatpush.bf16.msra.mxu0 %v422
  %1172 = vmatmul.bf16.gmra.mxu0 %v1150
  %v1173 = vpop.f32.mrf.mxu0
  %v1174 = vadd.f32 %v336, %v1173
  %v1175 = vpop.f32.mrf.mxu0
  %1176 = vdwg.mxu0
  %1177 = vmatpush.bf16.msra.mxu0 %v444
  %1178 = vmatpush.bf16.msra.mxu0 %v441
  %1179 = vmatpush.bf16.msra.mxu0 %v438
  %1180 = vmatpush.bf16.msra.mxu0 %v435
  %1181 = vmatpush.bf16.msra.mxu0 %v432
  %1182 = vmatpush.bf16.msra.mxu0 %v429
  %1183 = vmatpush.bf16.msra.mxu0 %v426
  %1184 = vmatpush.bf16.msra.mxu0 %v423
  %1185 = vmatmul.bf16.gmra.mxu0 %v1150
  %v1186 = vpop.f32.mrf.mxu0
  %v1187 = vadd.f32 %v337, %v1186
  %v1188 = vpop.f32.mrf.mxu0
  %1189 = vdwg.mxu0
  %1190 = vmatpush.bf16.msra.mxu0 %v609
  %1191 = vmatpush.bf16.msra.mxu0 %v606
  %1192 = vmatpush.bf16.msra.mxu0 %v603
  %1193 = vmatpush.bf16.msra.mxu0 %v600
  %1194 = vmatpush.bf16.msra.mxu0 %v597
  %1195 = vmatpush.bf16.msra.mxu0 %v594
  %1196 = vmatpush.bf16.msra.mxu0 %v591
  %1197 = vmatpush.bf16.msra.mxu0 %v588
  %1198 = vmatmul.bf16.gmra.mxu0 %v1063
  %v1199 = vpop.f32.mrf.mxu0
  %v1200 = vadd.f32 %v319, %v1199
  %v1201 = vpop.f32.mrf.mxu0
  %1202 = vdwg.mxu0
  %1203 = vmatpush.bf16.msra.mxu0 %v610
  %1204 = vmatpush.bf16.msra.mxu0 %v607
  %1205 = vmatpush.bf16.msra.mxu0 %v604
  %1206 = vmatpush.bf16.msra.mxu0 %v601
  %1207 = vmatpush.bf16.msra.mxu0 %v598
  %1208 = vmatpush.bf16.msra.mxu0 %v595
  %1209 = vmatpush.bf16.msra.mxu0 %v592
  %1210 = vmatpush.bf16.msra.mxu0 %v589
  %1211 = vmatmul.bf16.gmra.mxu0 %v1063
  %v1212 = vpop.f32.mrf.mxu0
  %v1213 = vadd.f32 %v320, %v1212
  %v1214 = vpop.f32.mrf.mxu0
  %1215 = vdwg.mxu0
  %1216 = vmatpush.bf16.msra.mxu0 %v611
  %1217 = vmatpush.bf16.msra.mxu0 %v608
  %1218 = vmatpush.bf16.msra.mxu0 %v605
  %1219 = vmatpush.bf16.msra.mxu0 %v602
  %1220 = vmatpush.bf16.msra.mxu0 %v599
  %1221 = vmatpush.bf16.msra.mxu0 %v596
  %1222 = vmatpush.bf16.msra.mxu0 %v593
  %1223 = vmatpush.bf16.msra.mxu0 %v590
  %1224 = vmatmul.bf16.gmra.mxu0 %v1063
  %v1225 = vpop.f32.mrf.mxu0
  %v1226 = vadd.f32 %v321, %v1225
  %v1227 = vpop.f32.mrf.mxu0
  %1228 = vdwg.mxu0
  %v1229 = vadd.f32 %v245, %v1200
  %v1230 = vxor.u32 %v1229, 2147483648
  %v1231 = vmul.f32 %v1230, 1.442695
  %v1232 = vpow.pop %v1231
  %v1233 = vadd.f32 %v1232, 1.0
  %v1234 = vrcp.pop %v1233
  %v1235 = vmul.f32 %v1233, %v1234
  %v1236 = vsub.f32 1.0, %v1235
  %v1237 = vmul.f32 %v1234, %v1236
  %v1238 = vadd.f32 %v1234, %v1237
  %vm1239 = vweird.f32 %v1233
  %vm1240 = vweird.f32 %v1234
  %vm1241 = vmor %vm1239, %vm1240
  %v1242 = vsel %vm1241, %v1234, %v1238
  %v1243 = vand.u32 2147483647, %v1233
  %vm1244 = vcmp.eq.f32.partialorder %v1243, 8.507059e+37
  %v1245 = vand.u32 %v1233, 2147483648
  %v1246 = vor.u32 1.1754944e-38, %v1245
  %v1247 = vsel %vm1244, %v1246, %v1242
  %v1248 = vmul.f32 1.0, %v1247
  %v1249 = vadd.f32 %v274, %v1213
  %v1250 = vxor.u32 %v1249, 2147483648
  %v1251 = vmul.f32 %v1250, 1.442695
  %v1252 = vpow.pop %v1251
  %v1253 = vadd.f32 %v1252, 1.0
  %v1254 = vrcp.pop %v1253
  %v1255 = vmul.f32 %v1253, %v1254
  %v1256 = vsub.f32 1.0, %v1255
  %v1257 = vmul.f32 %v1254, %v1256
  %v1258 = vadd.f32 %v1254, %v1257
  %vm1259 = vweird.f32 %v1253
  %vm1260 = vweird.f32 %v1254
  %vm1261 = vmor %vm1259, %vm1260
  %v1262 = vsel %vm1261, %v1254, %v1258
  %v1263 = vand.u32 2147483647, %v1253
  %vm1264 = vcmp.eq.f32.partialorder %v1263, 8.507059e+37
  %v1265 = vand.u32 %v1253, 2147483648
  %v1266 = vor.u32 1.1754944e-38, %v1265
  %v1267 = vsel %vm1264, %v1266, %v1262
  %v1268 = vmul.f32 1.0, %v1267
  %v1269 = vmul.f32 %v1248, %v1226
  %v1270 = vadd.f32 %v303, %v1269
  %v1271 = vtanh.pop %v1270
  %v1272 = vsub.f32 1.0, %v1268
  %v1273 = vmul.f32 %v1272, %v1271
  %v1274 = vmul.f32 %v1268, %v1062
  %v1275 = vadd.f32 %v1273, %v1274
  %v1276 = vpack.c.bf16 %v1275, %v1275
  %1277 = vmatpush.bf16.msra.mxu0 %v824
  %1278 = vmatpush.bf16.msra.mxu0 %v821
  %1279 = vmatpush.bf16.msra.mxu0 %v818
  %1280 = vmatpush.bf16.msra.mxu0 %v815
  %1281 = vmatpush.bf16.msra.mxu0 %v812
  %1282 = vmatpush.bf16.msra.mxu0 %v809
  %1283 = vmatpush.bf16.msra.mxu0 %v806
  %1284 = vmatpush.bf16.msra.mxu0 %v803
  %1285 = vmatmul.bf16.gmra.mxu0 %v1276
  %v1286 = vpop.f32.mrf.mxu0
  %v1287 = vadd.f32 %v327, %v1286
  %v1288 = vpop.f32.mrf.mxu0
  %1289 = vdwg.mxu0
  %1290 = vmatpush.bf16.msra.mxu0 %v825
  %1291 = vmatpush.bf16.msra.mxu0 %v822
  %1292 = vmatpush.bf16.msra.mxu0 %v819
  %1293 = vmatpush.bf16.msra.mxu0 %v816
  %1294 = vmatpush.bf16.msra.mxu0 %v813
  %1295 = vmatpush.bf16.msra.mxu0 %v810
  %1296 = vmatpush.bf16.msra.mxu0 %v807
  %1297 = vmatpush.bf16.msra.mxu0 %v804
  %1298 = vmatmul.bf16.gmra.mxu0 %v1276
  %v1299 = vpop.f32.mrf.mxu0
  %v1300 = vadd.f32 %v328, %v1299
  %v1301 = vpop.f32.mrf.mxu0
  %1302 = vdwg.mxu0
  %1303 = vmatpush.bf16.msra.mxu0 %v826
  %1304 = vmatpush.bf16.msra.mxu0 %v823
  %1305 = vmatpush.bf16.msra.mxu0 %v820
  %1306 = vmatpush.bf16.msra.mxu0 %v817
  %1307 = vmatpush.bf16.msra.mxu0 %v814
  %1308 = vmatpush.bf16.msra.mxu0 %v811
  %1309 = vmatpush.bf16.msra.mxu0 %v808
  %1310 = vmatpush.bf16.msra.mxu0 %v805
  %1311 = vmatmul.bf16.gmra.mxu0 %v1276
  %v1312 = vpop.f32.mrf.mxu0
  %v1313 = vadd.f32 %v329, %v1312
  %v1314 = vpop.f32.mrf.mxu0
  %1315 = vdwg.mxu0
  %v1316 = vadd.f32 %v1287, %v1161
  %v1317 = vxor.u32 %v1316, 2147483648
  %v1318 = vmul.f32 %v1317, 1.442695
  %v1319 = vpow.pop %v1318
  %v1320 = vadd.f32 %v1319, 1.0
  %v1321 = vrcp.pop %v1320
  %v1322 = vmul.f32 %v1320, %v1321
  %v1323 = vsub.f32 1.0, %v1322
  %v1324 = vmul.f32 %v1321, %v1323
  %v1325 = vadd.f32 %v1321, %v1324
  %vm1326 = vweird.f32 %v1320
  %vm1327 = vweird.f32 %v1321
  %vm1328 = vmor %vm1326, %vm1327
  %v1329 = vsel %vm1328, %v1321, %v1325
  %v1330 = vand.u32 2147483647, %v1320
  %vm1331 = vcmp.eq.f32.partialorder %v1330, 8.507059e+37
  %v1332 = vand.u32 %v1320, 2147483648
  %v1333 = vor.u32 1.1754944e-38, %v1332
  %v1334 = vsel %vm1331, %v1333, %v1329
  %v1335 = vmul.f32 1.0, %v1334
  %v1336 = vadd.f32 %v1300, %v1174
  %v1337 = vxor.u32 %v1336, 2147483648
  %v1338 = vmul.f32 %v1337, 1.442695
  %v1339 = vpow.pop %v1338
  %v1340 = vadd.f32 %v1339, 1.0
  %v1341 = vrcp.pop %v1340
  %v1342 = vmul.f32 %v1340, %v1341
  %v1343 = vsub.f32 1.0, %v1342
  %v1344 = vmul.f32 %v1341, %v1343
  %v1345 = vadd.f32 %v1341, %v1344
  %vm1346 = vweird.f32 %v1340
  %vm1347 = vweird.f32 %v1341
  %vm1348 = vmor %vm1346, %vm1347
  %v1349 = vsel %vm1348, %v1341, %v1345
  %v1350 = vand.u32 2147483647, %v1340
  %vm1351 = vcmp.eq.f32.partialorder %v1350, 8.507059e+37
  %v1352 = vand.u32 %v1340, 2147483648
  %v1353 = vor.u32 1.1754944e-38, %v1352
  %v1354 = vsel %vm1351, %v1353, %v1349
  %v1355 = vmul.f32 1.0, %v1354
  %v1356 = vmul.f32 %v1335, %v1187
  %v1357 = vadd.f32 %v1313, %v1356
  %v1358 = vtanh.pop %v1357
  %v1359 = vsub.f32 1.0, %v1355
  %v1360 = vmul.f32 %v1359, %v1358
  %v1361 = vmul.f32 %v1355, %v1149
  %v1362 = vadd.f32 %v1360, %v1361
  %v1363 = vpack.c.bf16 %v1362, %v1362
  %1364 = vmatpush.bf16.msra.mxu0 %v442
  %1365 = vmatpush.bf16.msra.mxu0 %v439
  %1366 = vmatpush.bf16.msra.mxu0 %v436
  %1367 = vmatpush.bf16.msra.mxu0 %v433
  %1368 = vmatpush.bf16.msra.mxu0 %v430
  %1369 = vmatpush.bf16.msra.mxu0 %v427
  %1370 = vmatpush.bf16.msra.mxu0 %v424
  %1371 = vmatpush.bf16.msra.mxu0 %v421
  %1372 = vmatmul.bf16.gmra.mxu0 %v1363
  %v1373 = vpop.f32.mrf.mxu0
  %v1374 = vadd.f32 %v335, %v1373
  %v1375 = vpop.f32.mrf.mxu0
  %1376 = vdwg.mxu0
  %1377 = vmatpush.bf16.msra.mxu0 %v443
  %1378 = vmatpush.bf16.msra.mxu0 %v440
  %1379 = vmatpush.bf16.msra.mxu0 %v437
  %1380 = vmatpush.bf16.msra.mxu0 %v434
  %1381 = vmatpush.bf16.msra.mxu0 %v431
  %1382 = vmatpush.bf16.msra.mxu0 %v428
  %1383 = vmatpush.bf16.msra.mxu0 %v425
  %1384 = vmatpush.bf16.msra.mxu0 %v422
  %1385 = vmatmul.bf16.gmra.mxu0 %v1363
  %v1386 = vpop.f32.mrf.mxu0
  %v1387 = vadd.f32 %v336, %v1386
  %v1388 = vpop.f32.mrf.mxu0
  %1389 = vdwg.mxu0
  %1390 = vmatpush.bf16.msra.mxu0 %v444
  %1391 = vmatpush.bf16.msra.mxu0 %v441
  %1392 = vmatpush.bf16.msra.mxu0 %v438
  %1393 = vmatpush.bf16.msra.mxu0 %v435
  %1394 = vmatpush.bf16.msra.mxu0 %v432
  %1395 = vmatpush.bf16.msra.mxu0 %v429
  %1396 = vmatpush.bf16.msra.mxu0 %v426
  %1397 = vmatpush.bf16.msra.mxu0 %v423
  %1398 = vmatmul.bf16.gmra.mxu0 %v1363
  %v1399 = vpop.f32.mrf.mxu0
  %v1400 = vadd.f32 %v337, %v1399
  %v1401 = vpop.f32.mrf.mxu0
  %1402 = vdwg.mxu0
  %1403 = vmatpush.bf16.msra.mxu0 %v609
  %1404 = vmatpush.bf16.msra.mxu0 %v606
  %1405 = vmatpush.bf16.msra.mxu0 %v603
  %1406 = vmatpush.bf16.msra.mxu0 %v600
  %1407 = vmatpush.bf16.msra.mxu0 %v597
  %1408 = vmatpush.bf16.msra.mxu0 %v594
  %1409 = vmatpush.bf16.msra.mxu0 %v591
  %1410 = vmatpush.bf16.msra.mxu0 %v588
  %1411 = vmatmul.bf16.gmra.mxu0 %v1276
  %v1412 = vpop.f32.mrf.mxu0
  %v1413 = vadd.f32 %v319, %v1412
  %v1414 = vpop.f32.mrf.mxu0
  %1415 = vdwg.mxu0
  %1416 = vmatpush.bf16.msra.mxu0 %v610
  %1417 = vmatpush.bf16.msra.mxu0 %v607
  %1418 = vmatpush.bf16.msra.mxu0 %v604
  %1419 = vmatpush.bf16.msra.mxu0 %v601
  %1420 = vmatpush.bf16.msra.mxu0 %v598
  %1421 = vmatpush.bf16.msra.mxu0 %v595
  %1422 = vmatpush.bf16.msra.mxu0 %v592
  %1423 = vmatpush.bf16.msra.mxu0 %v589
  %1424 = vmatmul.bf16.gmra.mxu0 %v1276
  %v1425 = vpop.f32.mrf.mxu0
  %v1426 = vadd.f32 %v320, %v1425
  %v1427 = vpop.f32.mrf.mxu0
  %1428 = vdwg.mxu0
  %1429 = vmatpush.bf16.msra.mxu0 %v611
  %1430 = vmatpush.bf16.msra.mxu0 %v608
  %1431 = vmatpush.bf16.msra.mxu0 %v605
  %1432 = vmatpush.bf16.msra.mxu0 %v602
  %1433 = vmatpush.bf16.msra.mxu0 %v599
  %1434 = vmatpush.bf16.msra.mxu0 %v596
  %1435 = vmatpush.bf16.msra.mxu0 %v593
  %1436 = vmatpush.bf16.msra.mxu0 %v590
  %1437 = vmatmul.bf16.gmra.mxu0 %v1276
  %v1438 = vpop.f32.mrf.mxu0
  %v1439 = vadd.f32 %v321, %v1438
  %v1440 = vpop.f32.mrf.mxu0
  %1441 = vdwg.mxu0
  %v1442 = vadd.f32 %v247, %v1413
  %v1443 = vxor.u32 %v1442, 2147483648
  %v1444 = vmul.f32 %v1443, 1.442695
  %v1445 = vpow.pop %v1444
  %v1446 = vadd.f32 %v1445, 1.0
  %v1447 = vrcp.pop %v1446
  %v1448 = vmul.f32 %v1446, %v1447
  %v1449 = vsub.f32 1.0, %v1448
  %v1450 = vmul.f32 %v1447, %v1449
  %v1451 = vadd.f32 %v1447, %v1450
  %vm1452 = vweird.f32 %v1446
  %vm1453 = vweird.f32 %v1447
  %vm1454 = vmor %vm1452, %vm1453
  %v1455 = vsel %vm1454, %v1447, %v1451
  %v1456 = vand.u32 2147483647, %v1446
  %vm1457 = vcmp.eq.f32.partialorder %v1456, 8.507059e+37
  %v1458 = vand.u32 %v1446, 2147483648
  %v1459 = vor.u32 1.1754944e-38, %v1458
  %v1460 = vsel %vm1457, %v1459, %v1455
  %v1461 = vmul.f32 1.0, %v1460
  %v1462 = vadd.f32 %v276, %v1426
  %v1463 = vxor.u32 %v1462, 2147483648
  %v1464 = vmul.f32 %v1463, 1.442695
  %v1465 = vpow.pop %v1464
  %v1466 = vadd.f32 %v1465, 1.0
  %v1467 = vrcp.pop %v1466
  %v1468 = vmul.f32 %v1466, %v1467
  %v1469 = vsub.f32 1.0, %v1468
  %v1470 = vmul.f32 %v1467, %v1469
  %v1471 = vadd.f32 %v1467, %v1470
  %vm1472 = vweird.f32 %v1466
  %vm1473 = vweird.f32 %v1467
  %vm1474 = vmor %vm1472, %vm1473
  %v1475 = vsel %vm1474, %v1467, %v1471
  %v1476 = vand.u32 2147483647, %v1466
  %vm1477 = vcmp.eq.f32.partialorder %v1476, 8.507059e+37
  %v1478 = vand.u32 %v1466, 2147483648
  %v1479 = vor.u32 1.1754944e-38, %v1478
  %v1480 = vsel %vm1477, %v1479, %v1475
  %v1481 = vmul.f32 1.0, %v1480
  %v1482 = vmul.f32 %v1461, %v1439
  %v1483 = vadd.f32 %v305, %v1482
  %v1484 = vtanh.pop %v1483
  %v1485 = vsub.f32 1.0, %v1481
  %v1486 = vmul.f32 %v1485, %v1484
  %v1487 = vmul.f32 %v1481, %v1275
  %v1488 = vadd.f32 %v1486, %v1487
  %v1489 = vpack.c.bf16 %v1488, %v1488
  %1490 = vmatpush.bf16.msra.mxu0 %v824
  %1491 = vmatpush.bf16.msra.mxu0 %v821
  %1492 = vmatpush.bf16.msra.mxu0 %v818
  %1493 = vmatpush.bf16.msra.mxu0 %v815
  %1494 = vmatpush.bf16.msra.mxu0 %v812
  %1495 = vmatpush.bf16.msra.mxu0 %v809
  %1496 = vmatpush.bf16.msra.mxu0 %v806
  %1497 = vmatpush.bf16.msra.mxu0 %v803
  %1498 = vmatmul.bf16.gmra.mxu0 %v1489
  %v1499 = vpop.f32.mrf.mxu0
  %v1500 = vadd.f32 %v327, %v1499
  %v1501 = vpop.f32.mrf.mxu0
  %1502 = vdwg.mxu0
  %1503 = vmatpush.bf16.msra.mxu0 %v825
  %1504 = vmatpush.bf16.msra.mxu0 %v822
  %1505 = vmatpush.bf16.msra.mxu0 %v819
  %1506 = vmatpush.bf16.msra.mxu0 %v816
  %1507 = vmatpush.bf16.msra.mxu0 %v813
  %1508 = vmatpush.bf16.msra.mxu0 %v810
  %1509 = vmatpush.bf16.msra.mxu0 %v807
  %1510 = vmatpush.bf16.msra.mxu0 %v804
  %1511 = vmatmul.bf16.gmra.mxu0 %v1489
  %v1512 = vpop.f32.mrf.mxu0
  %v1513 = vadd.f32 %v328, %v1512
  %v1514 = vpop.f32.mrf.mxu0
  %1515 = vdwg.mxu0
  %1516 = vmatpush.bf16.msra.mxu0 %v826
  %1517 = vmatpush.bf16.msra.mxu0 %v823
  %1518 = vmatpush.bf16.msra.mxu0 %v820
  %1519 = vmatpush.bf16.msra.mxu0 %v817
  %1520 = vmatpush.bf16.msra.mxu0 %v814
  %1521 = vmatpush.bf16.msra.mxu0 %v811
  %1522 = vmatpush.bf16.msra.mxu0 %v808
  %1523 = vmatpush.bf16.msra.mxu0 %v805
  %1524 = vmatmul.bf16.gmra.mxu0 %v1489
  %v1525 = vpop.f32.mrf.mxu0
  %v1526 = vadd.f32 %v329, %v1525
  %v1527 = vpop.f32.mrf.mxu0
  %1528 = vdwg.mxu0
  %v1529 = vadd.f32 %v1500, %v1374
  %v1530 = vxor.u32 %v1529, 2147483648
  %v1531 = vmul.f32 %v1530, 1.442695
  %v1532 = vpow.pop %v1531
  %v1533 = vadd.f32 %v1532, 1.0
  %v1534 = vrcp.pop %v1533
  %v1535 = vmul.f32 %v1533, %v1534
  %v1536 = vsub.f32 1.0, %v1535
  %v1537 = vmul.f32 %v1534, %v1536
  %v1538 = vadd.f32 %v1534, %v1537
  %vm1539 = vweird.f32 %v1533
  %vm1540 = vweird.f32 %v1534
  %vm1541 = vmor %vm1539, %vm1540
  %v1542 = vsel %vm1541, %v1534, %v1538
  %v1543 = vand.u32 2147483647, %v1533
  %vm1544 = vcmp.eq.f32.partialorder %v1543, 8.507059e+37
  %v1545 = vand.u32 %v1533, 2147483648
  %v1546 = vor.u32 1.1754944e-38, %v1545
  %v1547 = vsel %vm1544, %v1546, %v1542
  %v1548 = vmul.f32 1.0, %v1547
  %v1549 = vadd.f32 %v1513, %v1387
  %v1550 = vxor.u32 %v1549, 2147483648
  %v1551 = vmul.f32 %v1550, 1.442695
  %v1552 = vpow.pop %v1551
  %v1553 = vadd.f32 %v1552, 1.0
  %v1554 = vrcp.pop %v1553
  %v1555 = vmul.f32 %v1553, %v1554
  %v1556 = vsub.f32 1.0, %v1555
  %v1557 = vmul.f32 %v1554, %v1556
  %v1558 = vadd.f32 %v1554, %v1557
  %vm1559 = vweird.f32 %v1553
  %vm1560 = vweird.f32 %v1554
  %vm1561 = vmor %vm1559, %vm1560
  %v1562 = vsel %vm1561, %v1554, %v1558
  %v1563 = vand.u32 2147483647, %v1553
  %vm1564 = vcmp.eq.f32.partialorder %v1563, 8.507059e+37
  %v1565 = vand.u32 %v1553, 2147483648
  %v1566 = vor.u32 1.1754944e-38, %v1565
  %v1567 = vsel %vm1564, %v1566, %v1562
  %v1568 = vmul.f32 1.0, %v1567
  %v1569 = vmul.f32 %v1548, %v1400
  %v1570 = vadd.f32 %v1526, %v1569
  %v1571 = vtanh.pop %v1570
  %v1572 = vsub.f32 1.0, %v1568
  %v1573 = vmul.f32 %v1572, %v1571
  %v1574 = vmul.f32 %v1568, %v1362
  %v1575 = vadd.f32 %v1573, %v1574
  %v1576 = vpack.c.bf16 %v1575, %v1575
  %1577 = vmatpush.bf16.msra.mxu0 %v442
  %1578 = vmatpush.bf16.msra.mxu0 %v439
  %1579 = vmatpush.bf16.msra.mxu0 %v436
  %1580 = vmatpush.bf16.msra.mxu0 %v433
  %1581 = vmatpush.bf16.msra.mxu0 %v430
  %1582 = vmatpush.bf16.msra.mxu0 %v427
  %1583 = vmatpush.bf16.msra.mxu0 %v424
  %1584 = vmatpush.bf16.msra.mxu0 %v421
  %1585 = vmatmul.bf16.gmra.mxu0 %v1576
  %v1586 = vpop.f32.mrf.mxu0
  %v1587 = vadd.f32 %v335, %v1586
  %v1588 = vpop.f32.mrf.mxu0
  %1589 = vdwg.mxu0
  %1590 = vmatpush.bf16.msra.mxu0 %v443
  %1591 = vmatpush.bf16.msra.mxu0 %v440
  %1592 = vmatpush.bf16.msra.mxu0 %v437
  %1593 = vmatpush.bf16.msra.mxu0 %v434
  %1594 = vmatpush.bf16.msra.mxu0 %v431
  %1595 = vmatpush.bf16.msra.mxu0 %v428
  %1596 = vmatpush.bf16.msra.mxu0 %v425
  %1597 = vmatpush.bf16.msra.mxu0 %v422
  %1598 = vmatmul.bf16.gmra.mxu0 %v1576
  %v1599 = vpop.f32.mrf.mxu0
  %v1600 = vadd.f32 %v336, %v1599
  %v1601 = vpop.f32.mrf.mxu0
  %1602 = vdwg.mxu0
  %1603 = vmatpush.bf16.msra.mxu0 %v444
  %1604 = vmatpush.bf16.msra.mxu0 %v441
  %1605 = vmatpush.bf16.msra.mxu0 %v438
  %1606 = vmatpush.bf16.msra.mxu0 %v435
  %1607 = vmatpush.bf16.msra.mxu0 %v432
  %1608 = vmatpush.bf16.msra.mxu0 %v429
  %1609 = vmatpush.bf16.msra.mxu0 %v426
  %1610 = vmatpush.bf16.msra.mxu0 %v423
  %1611 = vmatmul.bf16.gmra.mxu0 %v1576
  %v1612 = vpop.f32.mrf.mxu0
  %v1613 = vadd.f32 %v337, %v1612
  %v1614 = vpop.f32.mrf.mxu0
  %1615 = vdwg.mxu0
  %1616 = vmatpush.bf16.msra.mxu0 %v609
  %1617 = vmatpush.bf16.msra.mxu0 %v606
  %1618 = vmatpush.bf16.msra.mxu0 %v603
  %1619 = vmatpush.bf16.msra.mxu0 %v600
  %1620 = vmatpush.bf16.msra.mxu0 %v597
  %1621 = vmatpush.bf16.msra.mxu0 %v594
  %1622 = vmatpush.bf16.msra.mxu0 %v591
  %1623 = vmatpush.bf16.msra.mxu0 %v588
  %1624 = vmatmul.bf16.gmra.mxu0 %v1489
  %v1625 = vpop.f32.mrf.mxu0
  %v1626 = vadd.f32 %v319, %v1625
  %v1627 = vpop.f32.mrf.mxu0
  %1628 = vdwg.mxu0
  %1629 = vmatpush.bf16.msra.mxu0 %v610
  %1630 = vmatpush.bf16.msra.mxu0 %v607
  %1631 = vmatpush.bf16.msra.mxu0 %v604
  %1632 = vmatpush.bf16.msra.mxu0 %v601
  %1633 = vmatpush.bf16.msra.mxu0 %v598
  %1634 = vmatpush.bf16.msra.mxu0 %v595
  %1635 = vmatpush.bf16.msra.mxu0 %v592
  %1636 = vmatpush.bf16.msra.mxu0 %v589
  %1637 = vmatmul.bf16.gmra.mxu0 %v1489
  %v1638 = vpop.f32.mrf.mxu0
  %v1639 = vadd.f32 %v320, %v1638
  %v1640 = vpop.f32.mrf.mxu0
  %1641 = vdwg.mxu0
  %1642 = vmatpush.bf16.msra.mxu0 %v611
  %1643 = vmatpush.bf16.msra.mxu0 %v608
  %1644 = vmatpush.bf16.msra.mxu0 %v605
  %1645 = vmatpush.bf16.msra.mxu0 %v602
  %1646 = vmatpush.bf16.msra.mxu0 %v599
  %1647 = vmatpush.bf16.msra.mxu0 %v596
  %1648 = vmatpush.bf16.msra.mxu0 %v593
  %1649 = vmatpush.bf16.msra.mxu0 %v590
  %1650 = vmatmul.bf16.gmra.mxu0 %v1489
  %v1651 = vpop.f32.mrf.mxu0
  %v1652 = vadd.f32 %v321, %v1651
  %v1653 = vpop.f32.mrf.mxu0
  %1654 = vdwg.mxu0
  %v1655 = vadd.f32 %v250, %v1626
  %v1656 = vxor.u32 %v1655, 2147483648
  %v1657 = vmul.f32 %v1656, 1.442695
  %v1658 = vpow.pop %v1657
  %v1659 = vadd.f32 %v1658, 1.0
  %v1660 = vrcp.pop %v1659
  %v1661 = vmul.f32 %v1659, %v1660
  %v1662 = vsub.f32 1.0, %v1661
  %v1663 = vmul.f32 %v1660, %v1662
  %v1664 = vadd.f32 %v1660, %v1663
  %vm1665 = vweird.f32 %v1659
  %vm1666 = vweird.f32 %v1660
  %vm1667 = vmor %vm1665, %vm1666
  %v1668 = vsel %vm1667, %v1660, %v1664
  %v1669 = vand.u32 2147483647, %v1659
  %vm1670 = vcmp.eq.f32.partialorder %v1669, 8.507059e+37
  %v1671 = vand.u32 %v1659, 2147483648
  %v1672 = vor.u32 1.1754944e-38, %v1671
  %v1673 = vsel %vm1670, %v1672, %v1668
  %v1674 = vmul.f32 1.0, %v1673
  %v1675 = vadd.f32 %v279, %v1639
  %v1676 = vxor.u32 %v1675, 2147483648
  %v1677 = vmul.f32 %v1676, 1.442695
  %v1678 = vpow.pop %v1677
  %v1679 = vadd.f32 %v1678, 1.0
  %v1680 = vrcp.pop %v1679
  %v1681 = vmul.f32 %v1679, %v1680
  %v1682 = vsub.f32 1.0, %v1681
  %v1683 = vmul.f32 %v1680, %v1682
  %v1684 = vadd.f32 %v1680, %v1683
  %vm1685 = vweird.f32 %v1679
  %vm1686 = vweird.f32 %v1680
  %vm1687 = vmor %vm1685, %vm1686
  %v1688 = vsel %vm1687, %v1680, %v1684
  %v1689 = vand.u32 2147483647, %v1679
  %vm1690 = vcmp.eq.f32.partialorder %v1689, 8.507059e+37
  %v1691 = vand.u32 %v1679, 2147483648
  %v1692 = vor.u32 1.1754944e-38, %v1691
  %v1693 = vsel %vm1690, %v1692, %v1688
  %v1694 = vmul.f32 1.0, %v1693
  %v1695 = vmul.f32 %v1674, %v1652
  %v1696 = vadd.f32 %v308, %v1695
  %v1697 = vtanh.pop %v1696
  %v1698 = vsub.f32 1.0, %v1694
  %v1699 = vmul.f32 %v1698, %v1697
  %v1700 = vmul.f32 %v1694, %v1488
  %v1701 = vadd.f32 %v1699, %v1700
  %v1702 = vpack.c.bf16 %v1701, %v1701
  %1703 = vmatpush.bf16.msra.mxu0 %v824
  %1704 = vmatpush.bf16.msra.mxu0 %v821
  %1705 = vmatpush.bf16.msra.mxu0 %v818
  %1706 = vmatpush.bf16.msra.mxu0 %v815
  %1707 = vmatpush.bf16.msra.mxu0 %v812
  %1708 = vmatpush.bf16.msra.mxu0 %v809
  %1709 = vmatpush.bf16.msra.mxu0 %v806
  %1710 = vmatpush.bf16.msra.mxu0 %v803
  %1711 = vmatmul.bf16.gmra.mxu0 %v1702
  %v1712 = vpop.f32.mrf.mxu0
  %v1713 = vadd.f32 %v327, %v1712
  %v1714 = vpop.f32.mrf.mxu0
  %1715 = vdwg.mxu0
  %1716 = vmatpush.bf16.msra.mxu0 %v825
  %1717 = vmatpush.bf16.msra.mxu0 %v822
  %1718 = vmatpush.bf16.msra.mxu0 %v819
  %1719 = vmatpush.bf16.msra.mxu0 %v816
  %1720 = vmatpush.bf16.msra.mxu0 %v813
  %1721 = vmatpush.bf16.msra.mxu0 %v810
  %1722 = vmatpush.bf16.msra.mxu0 %v807
  %1723 = vmatpush.bf16.msra.mxu0 %v804
  %1724 = vmatmul.bf16.gmra.mxu0 %v1702
  %v1725 = vpop.f32.mrf.mxu0
  %v1726 = vadd.f32 %v328, %v1725
  %v1727 = vpop.f32.mrf.mxu0
  %1728 = vdwg.mxu0
  %1729 = vmatpush.bf16.msra.mxu0 %v826
  %1730 = vmatpush.bf16.msra.mxu0 %v823
  %1731 = vmatpush.bf16.msra.mxu0 %v820
  %1732 = vmatpush.bf16.msra.mxu0 %v817
  %1733 = vmatpush.bf16.msra.mxu0 %v814
  %1734 = vmatpush.bf16.msra.mxu0 %v811
  %1735 = vmatpush.bf16.msra.mxu0 %v808
  %1736 = vmatpush.bf16.msra.mxu0 %v805
  %1737 = vmatmul.bf16.gmra.mxu0 %v1702
  %v1738 = vpop.f32.mrf.mxu0
  %v1739 = vadd.f32 %v329, %v1738
  %v1740 = vpop.f32.mrf.mxu0
  %1741 = vdwg.mxu0
  %v1742 = vadd.f32 %v1713, %v1587
  %v1743 = vxor.u32 %v1742, 2147483648
  %v1744 = vmul.f32 %v1743, 1.442695
  %v1745 = vpow.pop %v1744
  %v1746 = vadd.f32 %v1745, 1.0
  %v1747 = vrcp.pop %v1746
  %v1748 = vmul.f32 %v1746, %v1747
  %v1749 = vsub.f32 1.0, %v1748
  %v1750 = vmul.f32 %v1747, %v1749
  %v1751 = vadd.f32 %v1747, %v1750
  %vm1752 = vweird.f32 %v1746
  %vm1753 = vweird.f32 %v1747
  %vm1754 = vmor %vm1752, %vm1753
  %v1755 = vsel %vm1754, %v1747, %v1751
  %v1756 = vand.u32 2147483647, %v1746
  %vm1757 = vcmp.eq.f32.partialorder %v1756, 8.507059e+37
  %v1758 = vand.u32 %v1746, 2147483648
  %v1759 = vor.u32 1.1754944e-38, %v1758
  %v1760 = vsel %vm1757, %v1759, %v1755
  %v1761 = vmul.f32 1.0, %v1760
  %v1762 = vadd.f32 %v1726, %v1600
  %v1763 = vxor.u32 %v1762, 2147483648
  %v1764 = vmul.f32 %v1763, 1.442695
  %v1765 = vpow.pop %v1764
  %v1766 = vadd.f32 %v1765, 1.0
  %v1767 = vrcp.pop %v1766
  %v1768 = vmul.f32 %v1766, %v1767
  %v1769 = vsub.f32 1.0, %v1768
  %v1770 = vmul.f32 %v1767, %v1769
  %v1771 = vadd.f32 %v1767, %v1770
  %vm1772 = vweird.f32 %v1766
  %vm1773 = vweird.f32 %v1767
  %vm1774 = vmor %vm1772, %vm1773
  %v1775 = vsel %vm1774, %v1767, %v1771
  %v1776 = vand.u32 2147483647, %v1766
  %vm1777 = vcmp.eq.f32.partialorder %v1776, 8.507059e+37
  %v1778 = vand.u32 %v1766, 2147483648
  %v1779 = vor.u32 1.1754944e-38, %v1778
  %v1780 = vsel %vm1777, %v1779, %v1775
  %v1781 = vmul.f32 1.0, %v1780
  %v1782 = vmul.f32 %v1761, %v1613
  %v1783 = vadd.f32 %v1739, %v1782
  %v1784 = vtanh.pop %v1783
  %v1785 = vsub.f32 1.0, %v1781
  %v1786 = vmul.f32 %v1785, %v1784
  %v1787 = vmul.f32 %v1781, %v1575
  %v1788 = vadd.f32 %v1786, %v1787
  %v1789 = vpack.c.bf16 %v1788, %v1788
  %1790 = vmatpush.bf16.msra.mxu0 %v442
  %1791 = vmatpush.bf16.msra.mxu0 %v439
  %1792 = vmatpush.bf16.msra.mxu0 %v436
  %1793 = vmatpush.bf16.msra.mxu0 %v433
  %1794 = vmatpush.bf16.msra.mxu0 %v430
  %1795 = vmatpush.bf16.msra.mxu0 %v427
  %1796 = vmatpush.bf16.msra.mxu0 %v424
  %1797 = vmatpush.bf16.msra.mxu0 %v421
  %1798 = vmatmul.bf16.gmra.mxu0 %v1789
  %v1799 = vpop.f32.mrf.mxu0
  %v1800 = vadd.f32 %v335, %v1799
  %v1801 = vpop.f32.mrf.mxu0
  %1802 = vdwg.mxu0
  %1803 = vmatpush.bf16.msra.mxu0 %v443
  %1804 = vmatpush.bf16.msra.mxu0 %v440
  %1805 = vmatpush.bf16.msra.mxu0 %v437
  %1806 = vmatpush.bf16.msra.mxu0 %v434
  %1807 = vmatpush.bf16.msra.mxu0 %v431
  %1808 = vmatpush.bf16.msra.mxu0 %v428
  %1809 = vmatpush.bf16.msra.mxu0 %v425
  %1810 = vmatpush.bf16.msra.mxu0 %v422
  %1811 = vmatmul.bf16.gmra.mxu0 %v1789
  %v1812 = vpop.f32.mrf.mxu0
  %v1813 = vadd.f32 %v336, %v1812
  %v1814 = vpop.f32.mrf.mxu0
  %1815 = vdwg.mxu0
  %1816 = vmatpush.bf16.msra.mxu0 %v444
  %1817 = vmatpush.bf16.msra.mxu0 %v441
  %1818 = vmatpush.bf16.msra.mxu0 %v438
  %1819 = vmatpush.bf16.msra.mxu0 %v435
  %1820 = vmatpush.bf16.msra.mxu0 %v432
  %1821 = vmatpush.bf16.msra.mxu0 %v429
  %1822 = vmatpush.bf16.msra.mxu0 %v426
  %1823 = vmatpush.bf16.msra.mxu0 %v423
  %1824 = vmatmul.bf16.gmra.mxu0 %v1789
  %v1825 = vpop.f32.mrf.mxu0
  %v1826 = vadd.f32 %v337, %v1825
  %v1827 = vpop.f32.mrf.mxu0
  %1828 = vdwg.mxu0
  %1829 = vmatpush.bf16.msra.mxu0 %v609
  %1830 = vmatpush.bf16.msra.mxu0 %v606
  %1831 = vmatpush.bf16.msra.mxu0 %v603
  %1832 = vmatpush.bf16.msra.mxu0 %v600
  %1833 = vmatpush.bf16.msra.mxu0 %v597
  %1834 = vmatpush.bf16.msra.mxu0 %v594
  %1835 = vmatpush.bf16.msra.mxu0 %v591
  %1836 = vmatpush.bf16.msra.mxu0 %v588
  %1837 = vmatmul.bf16.gmra.mxu0 %v1702
  %v1838 = vpop.f32.mrf.mxu0
  %v1839 = vadd.f32 %v319, %v1838
  %v1840 = vpop.f32.mrf.mxu0
  %1841 = vdwg.mxu0
  %1842 = vmatpush.bf16.msra.mxu0 %v610
  %1843 = vmatpush.bf16.msra.mxu0 %v607
  %1844 = vmatpush.bf16.msra.mxu0 %v604
  %1845 = vmatpush.bf16.msra.mxu0 %v601
  %1846 = vmatpush.bf16.msra.mxu0 %v598
  %1847 = vmatpush.bf16.msra.mxu0 %v595
  %1848 = vmatpush.bf16.msra.mxu0 %v592
  %1849 = vmatpush.bf16.msra.mxu0 %v589
  %1850 = vmatmul.bf16.gmra.mxu0 %v1702
  %v1851 = vpop.f32.mrf.mxu0
  %v1852 = vadd.f32 %v320, %v1851
  %v1853 = vpop.f32.mrf.mxu0
  %1854 = vdwg.mxu0
  %1855 = vmatpush.bf16.msra.mxu0 %v611
  %1856 = vmatpush.bf16.msra.mxu0 %v608
  %1857 = vmatpush.bf16.msra.mxu0 %v605
  %1858 = vmatpush.bf16.msra.mxu0 %v602
  %1859 = vmatpush.bf16.msra.mxu0 %v599
  %1860 = vmatpush.bf16.msra.mxu0 %v596
  %1861 = vmatpush.bf16.msra.mxu0 %v593
  %1862 = vmatpush.bf16.msra.mxu0 %v590
  %1863 = vmatmul.bf16.gmra.mxu0 %v1702
  %v1864 = vpop.f32.mrf.mxu0
  %v1865 = vadd.f32 %v321, %v1864
  %v1866 = vpop.f32.mrf.mxu0
  %1867 = vdwg.mxu0
  %v1868 = vadd.f32 %v252, %v1839
  %v1869 = vxor.u32 %v1868, 2147483648
  %v1870 = vmul.f32 %v1869, 1.442695
  %v1871 = vpow.pop %v1870
  %v1872 = vadd.f32 %v1871, 1.0
  %v1873 = vrcp.pop %v1872
  %v1874 = vmul.f32 %v1872, %v1873
  %v1875 = vsub.f32 1.0, %v1874
  %v1876 = vmul.f32 %v1873, %v1875
  %v1877 = vadd.f32 %v1873, %v1876
  %vm1878 = vweird.f32 %v1872
  %vm1879 = vweird.f32 %v1873
  %vm1880 = vmor %vm1878, %vm1879
  %v1881 = vsel %vm1880, %v1873, %v1877
  %v1882 = vand.u32 2147483647, %v1872
  %vm1883 = vcmp.eq.f32.partialorder %v1882, 8.507059e+37
  %v1884 = vand.u32 %v1872, 2147483648
  %v1885 = vor.u32 1.1754944e-38, %v1884
  %v1886 = vsel %vm1883, %v1885, %v1881
  %v1887 = vmul.f32 1.0, %v1886
  %v1888 = vadd.f32 %v281, %v1852
  %v1889 = vxor.u32 %v1888, 2147483648
  %v1890 = vmul.f32 %v1889, 1.442695
  %v1891 = vpow.pop %v1890
  %v1892 = vadd.f32 %v1891, 1.0
  %v1893 = vrcp.pop %v1892
  %v1894 = vmul.f32 %v1892, %v1893
  %v1895 = vsub.f32 1.0, %v1894
  %v1896 = vmul.f32 %v1893, %v1895
  %v1897 = vadd.f32 %v1893, %v1896
  %vm1898 = vweird.f32 %v1892
  %vm1899 = vweird.f32 %v1893
  %vm1900 = vmor %vm1898, %vm1899
  %v1901 = vsel %vm1900, %v1893, %v1897
  %v1902 = vand.u32 2147483647, %v1892
  %vm1903 = vcmp.eq.f32.partialorder %v1902, 8.507059e+37
  %v1904 = vand.u32 %v1892, 2147483648
  %v1905 = vor.u32 1.1754944e-38, %v1904
  %v1906 = vsel %vm1903, %v1905, %v1901
  %v1907 = vmul.f32 1.0, %v1906
  %v1908 = vmul.f32 %v1887, %v1865
  %v1909 = vadd.f32 %v310, %v1908
  %v1910 = vtanh.pop %v1909
  %v1911 = vsub.f32 1.0, %v1907
  %v1912 = vmul.f32 %v1911, %v1910
  %v1913 = vmul.f32 %v1907, %v1701
  %v1914 = vadd.f32 %v1912, %v1913
  %v1915 = vpack.c.bf16 %v1914, %v1914
  %1916 = vmatpush.bf16.msra.mxu0 %v824
  %1917 = vmatpush.bf16.msra.mxu0 %v821
  %1918 = vmatpush.bf16.msra.mxu0 %v818
  %1919 = vmatpush.bf16.msra.mxu0 %v815
  %1920 = vmatpush.bf16.msra.mxu0 %v812
  %1921 = vmatpush.bf16.msra.mxu0 %v809
  %1922 = vmatpush.bf16.msra.mxu0 %v806
  %1923 = vmatpush.bf16.msra.mxu0 %v803
  %1924 = vmatmul.bf16.gmra.mxu0 %v1915
  %v1925 = vpop.f32.mrf.mxu0
  %v1926 = vadd.f32 %v327, %v1925
  %v1927 = vpop.f32.mrf.mxu0
  %1928 = vdwg.mxu0
  %1929 = vmatpush.bf16.msra.mxu0 %v825
  %1930 = vmatpush.bf16.msra.mxu0 %v822
  %1931 = vmatpush.bf16.msra.mxu0 %v819
  %1932 = vmatpush.bf16.msra.mxu0 %v816
  %1933 = vmatpush.bf16.msra.mxu0 %v813
  %1934 = vmatpush.bf16.msra.mxu0 %v810
  %1935 = vmatpush.bf16.msra.mxu0 %v807
  %1936 = vmatpush.bf16.msra.mxu0 %v804
  %1937 = vmatmul.bf16.gmra.mxu0 %v1915
  %v1938 = vpop.f32.mrf.mxu0
  %v1939 = vadd.f32 %v328, %v1938
  %v1940 = vpop.f32.mrf.mxu0
  %1941 = vdwg.mxu0
  %1942 = vmatpush.bf16.msra.mxu0 %v826
  %1943 = vmatpush.bf16.msra.mxu0 %v823
  %1944 = vmatpush.bf16.msra.mxu0 %v820
  %1945 = vmatpush.bf16.msra.mxu0 %v817
  %1946 = vmatpush.bf16.msra.mxu0 %v814
  %1947 = vmatpush.bf16.msra.mxu0 %v811
  %1948 = vmatpush.bf16.msra.mxu0 %v808
  %1949 = vmatpush.bf16.msra.mxu0 %v805
  %1950 = vmatmul.bf16.gmra.mxu0 %v1915
  %v1951 = vpop.f32.mrf.mxu0
  %v1952 = vadd.f32 %v329, %v1951
  %v1953 = vpop.f32.mrf.mxu0
  %1954 = vdwg.mxu0
  %v1955 = vadd.f32 %v1926, %v1800
  %v1956 = vxor.u32 %v1955, 2147483648
  %v1957 = vmul.f32 %v1956, 1.442695
  %v1958 = vpow.pop %v1957
  %v1959 = vadd.f32 %v1958, 1.0
  %v1960 = vrcp.pop %v1959
  %v1961 = vmul.f32 %v1959, %v1960
  %v1962 = vsub.f32 1.0, %v1961
  %v1963 = vmul.f32 %v1960, %v1962
  %v1964 = vadd.f32 %v1960, %v1963
  %vm1965 = vweird.f32 %v1959
  %vm1966 = vweird.f32 %v1960
  %vm1967 = vmor %vm1965, %vm1966
  %v1968 = vsel %vm1967, %v1960, %v1964
  %v1969 = vand.u32 2147483647, %v1959
  %vm1970 = vcmp.eq.f32.partialorder %v1969, 8.507059e+37
  %v1971 = vand.u32 %v1959, 2147483648
  %v1972 = vor.u32 1.1754944e-38, %v1971
  %v1973 = vsel %vm1970, %v1972, %v1968
  %v1974 = vmul.f32 1.0, %v1973
  %v1975 = vadd.f32 %v1939, %v1813
  %v1976 = vxor.u32 %v1975, 2147483648
  %v1977 = vmul.f32 %v1976, 1.442695
  %v1978 = vpow.pop %v1977
  %v1979 = vadd.f32 %v1978, 1.0
  %v1980 = vrcp.pop %v1979
  %v1981 = vmul.f32 %v1979, %v1980
  %v1982 = vsub.f32 1.0, %v1981
  %v1983 = vmul.f32 %v1980, %v1982
  %v1984 = vadd.f32 %v1980, %v1983
  %vm1985 = vweird.f32 %v1979
  %vm1986 = vweird.f32 %v1980
  %vm1987 = vmor %vm1985, %vm1986
  %v1988 = vsel %vm1987, %v1980, %v1984
  %v1989 = vand.u32 2147483647, %v1979
  %vm1990 = vcmp.eq.f32.partialorder %v1989, 8.507059e+37
  %v1991 = vand.u32 %v1979, 2147483648
  %v1992 = vor.u32 1.1754944e-38, %v1991
  %v1993 = vsel %vm1990, %v1992, %v1988
  %v1994 = vmul.f32 1.0, %v1993
  %v1995 = vmul.f32 %v1974, %v1826
  %v1996 = vadd.f32 %v1952, %v1995
  %v1997 = vtanh.pop %v1996
  %v1998 = vsub.f32 1.0, %v1994
  %v1999 = vmul.f32 %v1998, %v1997
  %v2000 = vmul.f32 %v1994, %v1788
  %v2001 = vadd.f32 %v1999, %v2000
  %v2002 = vpack.c.bf16 %v2001, %v2001
  %2003 = vmatpush.bf16.msra.mxu0 %v442
  %2004 = vmatpush.bf16.msra.mxu0 %v439
  %2005 = vmatpush.bf16.msra.mxu0 %v436
  %2006 = vmatpush.bf16.msra.mxu0 %v433
  %2007 = vmatpush.bf16.msra.mxu0 %v430
  %2008 = vmatpush.bf16.msra.mxu0 %v427
  %2009 = vmatpush.bf16.msra.mxu0 %v424
  %2010 = vmatpush.bf16.msra.mxu0 %v421
  %2011 = vmatmul.bf16.gmra.mxu0 %v2002
  %v2012 = vpop.f32.mrf.mxu0
  %v2013 = vadd.f32 %v335, %v2012
  %v2014 = vpop.f32.mrf.mxu0
  %2015 = vdwg.mxu0
  %2016 = vmatpush.bf16.msra.mxu0 %v443
  %2017 = vmatpush.bf16.msra.mxu0 %v440
  %2018 = vmatpush.bf16.msra.mxu0 %v437
  %2019 = vmatpush.bf16.msra.mxu0 %v434
  %2020 = vmatpush.bf16.msra.mxu0 %v431
  %2021 = vmatpush.bf16.msra.mxu0 %v428
  %2022 = vmatpush.bf16.msra.mxu0 %v425
  %2023 = vmatpush.bf16.msra.mxu0 %v422
  %2024 = vmatmul.bf16.gmra.mxu0 %v2002
  %v2025 = vpop.f32.mrf.mxu0
  %v2026 = vadd.f32 %v336, %v2025
  %v2027 = vpop.f32.mrf.mxu0
  %2028 = vdwg.mxu0
  %2029 = vmatpush.bf16.msra.mxu0 %v444
  %2030 = vmatpush.bf16.msra.mxu0 %v441
  %2031 = vmatpush.bf16.msra.mxu0 %v438
  %2032 = vmatpush.bf16.msra.mxu0 %v435
  %2033 = vmatpush.bf16.msra.mxu0 %v432
  %2034 = vmatpush.bf16.msra.mxu0 %v429
  %2035 = vmatpush.bf16.msra.mxu0 %v426
  %2036 = vmatpush.bf16.msra.mxu0 %v423
  %2037 = vmatmul.bf16.gmra.mxu0 %v2002
  %v2038 = vpop.f32.mrf.mxu0
  %v2039 = vadd.f32 %v337, %v2038
  %v2040 = vpop.f32.mrf.mxu0
  %2041 = vdwg.mxu0
  %2042 = vmatpush.bf16.msra.mxu0 %v609
  %2043 = vmatpush.bf16.msra.mxu0 %v606
  %2044 = vmatpush.bf16.msra.mxu0 %v603
  %2045 = vmatpush.bf16.msra.mxu0 %v600
  %2046 = vmatpush.bf16.msra.mxu0 %v597
  %2047 = vmatpush.bf16.msra.mxu0 %v594
  %2048 = vmatpush.bf16.msra.mxu0 %v591
  %2049 = vmatpush.bf16.msra.mxu0 %v588
  %2050 = vmatmul.bf16.gmra.mxu0 %v1915
  %v2051 = vpop.f32.mrf.mxu0
  %v2052 = vadd.f32 %v319, %v2051
  %v2053 = vpop.f32.mrf.mxu0
  %2054 = vdwg.mxu0
  %2055 = vmatpush.bf16.msra.mxu0 %v610
  %2056 = vmatpush.bf16.msra.mxu0 %v607
  %2057 = vmatpush.bf16.msra.mxu0 %v604
  %2058 = vmatpush.bf16.msra.mxu0 %v601
  %2059 = vmatpush.bf16.msra.mxu0 %v598
  %2060 = vmatpush.bf16.msra.mxu0 %v595
  %2061 = vmatpush.bf16.msra.mxu0 %v592
  %2062 = vmatpush.bf16.msra.mxu0 %v589
  %2063 = vmatmul.bf16.gmra.mxu0 %v1915
  %v2064 = vpop.f32.mrf.mxu0
  %v2065 = vadd.f32 %v320, %v2064
  %v2066 = vpop.f32.mrf.mxu0
  %2067 = vdwg.mxu0
  %2068 = vmatpush.bf16.msra.mxu0 %v611
  %2069 = vmatpush.bf16.msra.mxu0 %v608
  %2070 = vmatpush.bf16.msra.mxu0 %v605
  %2071 = vmatpush.bf16.msra.mxu0 %v602
  %2072 = vmatpush.bf16.msra.mxu0 %v599
  %2073 = vmatpush.bf16.msra.mxu0 %v596
  %2074 = vmatpush.bf16.msra.mxu0 %v593
  %2075 = vmatpush.bf16.msra.mxu0 %v590
  %2076 = vmatmul.bf16.gmra.mxu0 %v1915
  %v2077 = vpop.f32.mrf.mxu0
  %v2078 = vadd.f32 %v321, %v2077
  %v2079 = vpop.f32.mrf.mxu0
  %2080 = vdwg.mxu0
  %v2081 = vadd.f32 %v255, %v2052
  %v2082 = vxor.u32 %v2081, 2147483648
  %v2083 = vmul.f32 %v2082, 1.442695
  %v2084 = vpow.pop %v2083
  %v2085 = vadd.f32 %v2084, 1.0
  %v2086 = vrcp.pop %v2085
  %v2087 = vmul.f32 %v2085, %v2086
  %v2088 = vsub.f32 1.0, %v2087
  %v2089 = vmul.f32 %v2086, %v2088
  %v2090 = vadd.f32 %v2086, %v2089
  %vm2091 = vweird.f32 %v2085
  %vm2092 = vweird.f32 %v2086
  %vm2093 = vmor %vm2091, %vm2092
  %v2094 = vsel %vm2093, %v2086, %v2090
  %v2095 = vand.u32 2147483647, %v2085
  %vm2096 = vcmp.eq.f32.partialorder %v2095, 8.507059e+37
  %v2097 = vand.u32 %v2085, 2147483648
  %v2098 = vor.u32 1.1754944e-38, %v2097
  %v2099 = vsel %vm2096, %v2098, %v2094
  %v2100 = vmul.f32 1.0, %v2099
  %v2101 = vadd.f32 %v284, %v2065
  %v2102 = vxor.u32 %v2101, 2147483648
  %v2103 = vmul.f32 %v2102, 1.442695
  %v2104 = vpow.pop %v2103
  %v2105 = vadd.f32 %v2104, 1.0
  %v2106 = vrcp.pop %v2105
  %v2107 = vmul.f32 %v2105, %v2106
  %v2108 = vsub.f32 1.0, %v2107
  %v2109 = vmul.f32 %v2106, %v2108
  %v2110 = vadd.f32 %v2106, %v2109
  %vm2111 = vweird.f32 %v2105
  %vm2112 = vweird.f32 %v2106
  %vm2113 = vmor %vm2111, %vm2112
  %v2114 = vsel %vm2113, %v2106, %v2110
  %v2115 = vand.u32 2147483647, %v2105
  %vm2116 = vcmp.eq.f32.partialorder %v2115, 8.507059e+37
  %v2117 = vand.u32 %v2105, 2147483648
  %v2118 = vor.u32 1.1754944e-38, %v2117
  %v2119 = vsel %vm2116, %v2118, %v2114
  %v2120 = vmul.f32 1.0, %v2119
  %v2121 = vmul.f32 %v2100, %v2078
  %v2122 = vadd.f32 %v313, %v2121
  %v2123 = vtanh.pop %v2122
  %v2124 = vsub.f32 1.0, %v2120
  %v2125 = vmul.f32 %v2124, %v2123
  %v2126 = vmul.f32 %v2120, %v1914
  %v2127 = vadd.f32 %v2125, %v2126
  %v2128 = vpack.c.bf16 %v2127, %v2127
  %2129 = vmatpush.bf16.msra.mxu0 %v824
  %2130 = vmatpush.bf16.msra.mxu0 %v821
  %2131 = vmatpush.bf16.msra.mxu0 %v818
  %2132 = vmatpush.bf16.msra.mxu0 %v815
  %2133 = vmatpush.bf16.msra.mxu0 %v812
  %2134 = vmatpush.bf16.msra.mxu0 %v809
  %2135 = vmatpush.bf16.msra.mxu0 %v806
  %2136 = vmatpush.bf16.msra.mxu0 %v803
  %2137 = vmatmul.bf16.gmra.mxu0 %v2128
  %v2138 = vpop.f32.mrf.mxu0
  %v2139 = vadd.f32 %v327, %v2138
  %v2140 = vpop.f32.mrf.mxu0
  %2141 = vdwg.mxu0
  %2142 = vmatpush.bf16.msra.mxu0 %v825
  %2143 = vmatpush.bf16.msra.mxu0 %v822
  %2144 = vmatpush.bf16.msra.mxu0 %v819
  %2145 = vmatpush.bf16.msra.mxu0 %v816
  %2146 = vmatpush.bf16.msra.mxu0 %v813
  %2147 = vmatpush.bf16.msra.mxu0 %v810
  %2148 = vmatpush.bf16.msra.mxu0 %v807
  %2149 = vmatpush.bf16.msra.mxu0 %v804
  %2150 = vmatmul.bf16.gmra.mxu0 %v2128
  %v2151 = vpop.f32.mrf.mxu0
  %v2152 = vadd.f32 %v328, %v2151
  %v2153 = vpop.f32.mrf.mxu0
  %2154 = vdwg.mxu0
  %2155 = vmatpush.bf16.msra.mxu0 %v826
  %2156 = vmatpush.bf16.msra.mxu0 %v823
  %2157 = vmatpush.bf16.msra.mxu0 %v820
  %2158 = vmatpush.bf16.msra.mxu0 %v817
  %2159 = vmatpush.bf16.msra.mxu0 %v814
  %2160 = vmatpush.bf16.msra.mxu0 %v811
  %2161 = vmatpush.bf16.msra.mxu0 %v808
  %2162 = vmatpush.bf16.msra.mxu0 %v805
  %2163 = vmatmul.bf16.gmra.mxu0 %v2128
  %v2164 = vpop.f32.mrf.mxu0
  %v2165 = vadd.f32 %v329, %v2164
  %v2166 = vpop.f32.mrf.mxu0
  %2167 = vdwg.mxu0
  %v2168 = vadd.f32 %v2139, %v2013
  %v2169 = vxor.u32 %v2168, 2147483648
  %v2170 = vmul.f32 %v2169, 1.442695
  %v2171 = vpow.pop %v2170
  %v2172 = vadd.f32 %v2171, 1.0
  %v2173 = vrcp.pop %v2172
  %v2174 = vmul.f32 %v2172, %v2173
  %v2175 = vsub.f32 1.0, %v2174
  %v2176 = vmul.f32 %v2173, %v2175
  %v2177 = vadd.f32 %v2173, %v2176
  %vm2178 = vweird.f32 %v2172
  %vm2179 = vweird.f32 %v2173
  %vm2180 = vmor %vm2178, %vm2179
  %v2181 = vsel %vm2180, %v2173, %v2177
  %v2182 = vand.u32 2147483647, %v2172
  %vm2183 = vcmp.eq.f32.partialorder %v2182, 8.507059e+37
  %v2184 = vand.u32 %v2172, 2147483648
  %v2185 = vor.u32 1.1754944e-38, %v2184
  %v2186 = vsel %vm2183, %v2185, %v2181
  %v2187 = vmul.f32 1.0, %v2186
  %v2188 = vadd.f32 %v2152, %v2026
  %v2189 = vxor.u32 %v2188, 2147483648
  %v2190 = vmul.f32 %v2189, 1.442695
  %v2191 = vpow.pop %v2190
  %v2192 = vadd.f32 %v2191, 1.0
  %v2193 = vrcp.pop %v2192
  %v2194 = vmul.f32 %v2192, %v2193
  %v2195 = vsub.f32 1.0, %v2194
  %v2196 = vmul.f32 %v2193, %v2195
  %v2197 = vadd.f32 %v2193, %v2196
  %vm2198 = vweird.f32 %v2192
  %vm2199 = vweird.f32 %v2193
  %vm2200 = vmor %vm2198, %vm2199
  %v2201 = vsel %vm2200, %v2193, %v2197
  %v2202 = vand.u32 2147483647, %v2192
  %vm2203 = vcmp.eq.f32.partialorder %v2202, 8.507059e+37
  %v2204 = vand.u32 %v2192, 2147483648
  %v2205 = vor.u32 1.1754944e-38, %v2204
  %v2206 = vsel %vm2203, %v2205, %v2201
  %v2207 = vmul.f32 1.0, %v2206
  %v2208 = vmul.f32 %v2187, %v2039
  %v2209 = vadd.f32 %v2165, %v2208
  %v2210 = vtanh.pop %v2209
  %v2211 = vsub.f32 1.0, %v2207
  %v2212 = vmul.f32 %v2211, %v2210
  %v2213 = vmul.f32 %v2207, %v2001
  %v2214 = vadd.f32 %v2212, %v2213
  %v2215 = vpack.c.bf16 %v2214, %v2214
  %2216 = vmatpush.bf16.msra.mxu0 %v442
  %2217 = vmatpush.bf16.msra.mxu0 %v439
  %2218 = vmatpush.bf16.msra.mxu0 %v436
  %2219 = vmatpush.bf16.msra.mxu0 %v433
  %2220 = vmatpush.bf16.msra.mxu0 %v430
  %2221 = vmatpush.bf16.msra.mxu0 %v427
  %2222 = vmatpush.bf16.msra.mxu0 %v424
  %2223 = vmatpush.bf16.msra.mxu0 %v421
  %2224 = vmatmul.bf16.gmra.mxu0 %v2215
  %v2225 = vpop.f32.mrf.mxu0
  %v2226 = vadd.f32 %v335, %v2225
  %v2227 = vpop.f32.mrf.mxu0
  %2228 = vdwg.mxu0
  %2229 = vmatpush.bf16.msra.mxu0 %v443
  %2230 = vmatpush.bf16.msra.mxu0 %v440
  %2231 = vmatpush.bf16.msra.mxu0 %v437
  %2232 = vmatpush.bf16.msra.mxu0 %v434
  %2233 = vmatpush.bf16.msra.mxu0 %v431
  %2234 = vmatpush.bf16.msra.mxu0 %v428
  %2235 = vmatpush.bf16.msra.mxu0 %v425
  %2236 = vmatpush.bf16.msra.mxu0 %v422
  %2237 = vmatmul.bf16.gmra.mxu0 %v2215
  %v2238 = vpop.f32.mrf.mxu0
  %v2239 = vadd.f32 %v336, %v2238
  %v2240 = vpop.f32.mrf.mxu0
  %2241 = vdwg.mxu0
  %2242 = vmatpush.bf16.msra.mxu0 %v444
  %2243 = vmatpush.bf16.msra.mxu0 %v441
  %2244 = vmatpush.bf16.msra.mxu0 %v438
  %2245 = vmatpush.bf16.msra.mxu0 %v435
  %2246 = vmatpush.bf16.msra.mxu0 %v432
  %2247 = vmatpush.bf16.msra.mxu0 %v429
  %2248 = vmatpush.bf16.msra.mxu0 %v426
  %2249 = vmatpush.bf16.msra.mxu0 %v423
  %2250 = vmatmul.bf16.gmra.mxu0 %v2215
  %v2251 = vpop.f32.mrf.mxu0
  %v2252 = vadd.f32 %v337, %v2251
  %v2253 = vpop.f32.mrf.mxu0
  %2254 = vdwg.mxu0
  %2255 = vmatpush.bf16.msra.mxu0 %v609
  %2256 = vmatpush.bf16.msra.mxu0 %v606
  %2257 = vmatpush.bf16.msra.mxu0 %v603
  %2258 = vmatpush.bf16.msra.mxu0 %v600
  %2259 = vmatpush.bf16.msra.mxu0 %v597
  %2260 = vmatpush.bf16.msra.mxu0 %v594
  %2261 = vmatpush.bf16.msra.mxu0 %v591
  %2262 = vmatpush.bf16.msra.mxu0 %v588
  %2263 = vmatmul.bf16.gmra.mxu0 %v2128
  %v2264 = vpop.f32.mrf.mxu0
  %v2265 = vadd.f32 %v319, %v2264
  %v2266 = vpop.f32.mrf.mxu0
  %2267 = vdwg.mxu0
  %2268 = vmatpush.bf16.msra.mxu0 %v610
  %2269 = vmatpush.bf16.msra.mxu0 %v607
  %2270 = vmatpush.bf16.msra.mxu0 %v604
  %2271 = vmatpush.bf16.msra.mxu0 %v601
  %2272 = vmatpush.bf16.msra.mxu0 %v598
  %2273 = vmatpush.bf16.msra.mxu0 %v595
  %2274 = vmatpush.bf16.msra.mxu0 %v592
  %2275 = vmatpush.bf16.msra.mxu0 %v589
  %2276 = vmatmul.bf16.gmra.mxu0 %v2128
  %v2277 = vpop.f32.mrf.mxu0
  %v2278 = vadd.f32 %v320, %v2277
  %v2279 = vpop.f32.mrf.mxu0
  %2280 = vdwg.mxu0
  %2281 = vmatpush.bf16.msra.mxu0 %v611
  %2282 = vmatpush.bf16.msra.mxu0 %v608
  %2283 = vmatpush.bf16.msra.mxu0 %v605
  %2284 = vmatpush.bf16.msra.mxu0 %v602
  %2285 = vmatpush.bf16.msra.mxu0 %v599
  %2286 = vmatpush.bf16.msra.mxu0 %v596
  %2287 = vmatpush.bf16.msra.mxu0 %v593
  %2288 = vmatpush.bf16.msra.mxu0 %v590
  %2289 = vmatmul.bf16.gmra.mxu0 %v2128
  %v2290 = vpop.f32.mrf.mxu0
  %v2291 = vadd.f32 %v321, %v2290
  %v2292 = vpop.f32.mrf.mxu0
  %2293 = vdwg.mxu0
  %v2294 = vadd.f32 %v257, %v2265
  %v2295 = vxor.u32 %v2294, 2147483648
  %v2296 = vmul.f32 %v2295, 1.442695
  %v2297 = vpow.pop %v2296
  %v2298 = vadd.f32 %v2297, 1.0
  %v2299 = vrcp.pop %v2298
  %v2300 = vmul.f32 %v2298, %v2299
  %v2301 = vsub.f32 1.0, %v2300
  %v2302 = vmul.f32 %v2299, %v2301
  %v2303 = vadd.f32 %v2299, %v2302
  %vm2304 = vweird.f32 %v2298
  %vm2305 = vweird.f32 %v2299
  %vm2306 = vmor %vm2304, %vm2305
  %v2307 = vsel %vm2306, %v2299, %v2303
  %v2308 = vand.u32 2147483647, %v2298
  %vm2309 = vcmp.eq.f32.partialorder %v2308, 8.507059e+37
  %v2310 = vand.u32 %v2298, 2147483648
  %v2311 = vor.u32 1.1754944e-38, %v2310
  %v2312 = vsel %vm2309, %v2311, %v2307
  %v2313 = vmul.f32 1.0, %v2312
  %v2314 = vadd.f32 %v286, %v2278
  %v2315 = vxor.u32 %v2314, 2147483648
  %v2316 = vmul.f32 %v2315, 1.442695
  %v2317 = vpow.pop %v2316
  %v2318 = vadd.f32 %v2317, 1.0
  %v2319 = vrcp.pop %v2318
  %v2320 = vmul.f32 %v2318, %v2319
  %v2321 = vsub.f32 1.0, %v2320
  %v2322 = vmul.f32 %v2319, %v2321
  %v2323 = vadd.f32 %v2319, %v2322
  %vm2324 = vweird.f32 %v2318
  %vm2325 = vweird.f32 %v2319
  %vm2326 = vmor %vm2324, %vm2325
  %v2327 = vsel %vm2326, %v2319, %v2323
  %v2328 = vand.u32 2147483647, %v2318
  %vm2329 = vcmp.eq.f32.partialorder %v2328, 8.507059e+37
  %v2330 = vand.u32 %v2318, 2147483648
  %v2331 = vor.u32 1.1754944e-38, %v2330
  %v2332 = vsel %vm2329, %v2331, %v2327
  %v2333 = vmul.f32 1.0, %v2332
  %v2334 = vmul.f32 %v2313, %v2291
  %v2335 = vadd.f32 %v315, %v2334
  %v2336 = vtanh.pop %v2335
  %v2337 = vsub.f32 1.0, %v2333
  %v2338 = vmul.f32 %v2337, %v2336
  %v2339 = vmul.f32 %v2333, %v2127
  %v2340 = vadd.f32 %v2338, %v2339
  %v2341 = vpack.c.bf16 %v2340, %v2340
  %2342 = vmatpush.bf16.msra.mxu0 %v824
  %2343 = vmatpush.bf16.msra.mxu0 %v821
  %2344 = vmatpush.bf16.msra.mxu0 %v818
  %2345 = vmatpush.bf16.msra.mxu0 %v815
  %2346 = vmatpush.bf16.msra.mxu0 %v812
  %2347 = vmatpush.bf16.msra.mxu0 %v809
  %2348 = vmatpush.bf16.msra.mxu0 %v806
  %2349 = vmatpush.bf16.msra.mxu0 %v803
  %2350 = vmatmul.bf16.gmra.mxu0 %v2341
  %v2351 = vpop.f32.mrf.mxu0
  %v2352 = vadd.f32 %v327, %v2351
  %v2353 = vpop.f32.mrf.mxu0
  %2354 = vdwg.mxu0
  %2355 = vmatpush.bf16.msra.mxu0 %v825
  %2356 = vmatpush.bf16.msra.mxu0 %v822
  %2357 = vmatpush.bf16.msra.mxu0 %v819
  %2358 = vmatpush.bf16.msra.mxu0 %v816
  %2359 = vmatpush.bf16.msra.mxu0 %v813
  %2360 = vmatpush.bf16.msra.mxu0 %v810
  %2361 = vmatpush.bf16.msra.mxu0 %v807
  %2362 = vmatpush.bf16.msra.mxu0 %v804
  %2363 = vmatmul.bf16.gmra.mxu0 %v2341
  %v2364 = vpop.f32.mrf.mxu0
  %v2365 = vadd.f32 %v328, %v2364
  %v2366 = vpop.f32.mrf.mxu0
  %2367 = vdwg.mxu0
  %2368 = vmatpush.bf16.msra.mxu0 %v826
  %2369 = vmatpush.bf16.msra.mxu0 %v823
  %2370 = vmatpush.bf16.msra.mxu0 %v820
  %2371 = vmatpush.bf16.msra.mxu0 %v817
  %2372 = vmatpush.bf16.msra.mxu0 %v814
  %2373 = vmatpush.bf16.msra.mxu0 %v811
  %2374 = vmatpush.bf16.msra.mxu0 %v808
  %2375 = vmatpush.bf16.msra.mxu0 %v805
  %2376 = vmatmul.bf16.gmra.mxu0 %v2341
  %v2377 = vpop.f32.mrf.mxu0
  %v2378 = vadd.f32 %v329, %v2377
  %v2379 = vpop.f32.mrf.mxu0
  %2380 = vdwg.mxu0
  %v2381 = vadd.f32 %v2352, %v2226
  %v2382 = vxor.u32 %v2381, 2147483648
  %v2383 = vmul.f32 %v2382, 1.442695
  %v2384 = vpow.pop %v2383
  %v2385 = vadd.f32 %v2384, 1.0
  %v2386 = vrcp.pop %v2385
  %v2387 = vmul.f32 %v2385, %v2386
  %v2388 = vsub.f32 1.0, %v2387
  %v2389 = vmul.f32 %v2386, %v2388
  %v2390 = vadd.f32 %v2386, %v2389
  %vm2391 = vweird.f32 %v2385
  %vm2392 = vweird.f32 %v2386
  %vm2393 = vmor %vm2391, %vm2392
  %v2394 = vsel %vm2393, %v2386, %v2390
  %v2395 = vand.u32 2147483647, %v2385
  %vm2396 = vcmp.eq.f32.partialorder %v2395, 8.507059e+37
  %v2397 = vand.u32 %v2385, 2147483648
  %v2398 = vor.u32 1.1754944e-38, %v2397
  %v2399 = vsel %vm2396, %v2398, %v2394
  %v2400 = vmul.f32 1.0, %v2399
  %v2401 = vadd.f32 %v2365, %v2239
  %v2402 = vxor.u32 %v2401, 2147483648
  %v2403 = vmul.f32 %v2402, 1.442695
  %v2404 = vpow.pop %v2403
  %v2405 = vadd.f32 %v2404, 1.0
  %v2406 = vrcp.pop %v2405
  %v2407 = vmul.f32 %v2405, %v2406
  %v2408 = vsub.f32 1.0, %v2407
  %v2409 = vmul.f32 %v2406, %v2408
  %v2410 = vadd.f32 %v2406, %v2409
  %vm2411 = vweird.f32 %v2405
  %vm2412 = vweird.f32 %v2406
  %vm2413 = vmor %vm2411, %vm2412
  %v2414 = vsel %vm2413, %v2406, %v2410
  %v2415 = vand.u32 2147483647, %v2405
  %vm2416 = vcmp.eq.f32.partialorder %v2415, 8.507059e+37
  %v2417 = vand.u32 %v2405, 2147483648
  %v2418 = vor.u32 1.1754944e-38, %v2417
  %v2419 = vsel %vm2416, %v2418, %v2414
  %v2420 = vmul.f32 1.0, %v2419
  %v2421 = vmul.f32 %v2400, %v2252
  %v2422 = vadd.f32 %v2378, %v2421
  %v2423 = vtanh.pop %v2422
  %v2424 = vsub.f32 1.0, %v2420
  %v2425 = vmul.f32 %v2424, %v2423
  %v2426 = vmul.f32 %v2420, %v2214
  %v2427 = vadd.f32 %v2425, %v2426
  %v2428 = vpack.c.bf16 %v2427, %v2427
  %v2429 = vld [vmem:[%s9] sm:$0xf]
  %v2430 = vld [vmem:[%s9 + $0x4] sm:$0xf]
  %v2431 = vld [vmem:[%s9 + $0x8] sm:$0xf]
  %v2432 = vld [vmem:[%s9 + $0xc] sm:$0xf]
  %v2433 = vld [vmem:[%s9 + $0x10] sm:$0xf]
  %v2434 = vld [vmem:[%s9 + $0x14] sm:$0xf]
  %v2435 = vld [vmem:[%s9 + $0x18] sm:$0xf]
  %v2436 = vld [vmem:[%s9 + $0x1c] sm:$0xf]
  %v2437 = vld [vmem:[%s9 + $0x20] sm:$0xf]
  %v2438 = vld [vmem:[%s9 + $0x24] sm:$0xf]
  %v2439 = vld [vmem:[%s9 + $0x28] sm:$0xf]
  %v2440 = vld [vmem:[%s9 + $0x2c] sm:$0xf]
  %v2441 = vld [vmem:[%s9 + $0x30] sm:$0xf]
  %v2442 = vld [vmem:[%s9 + $0x34] sm:$0xf]
  %v2443 = vld [vmem:[%s9 + $0x38] sm:$0xf]
  %v2444 = vld [vmem:[%s9 + $0x3c] sm:$0xf]
  %v2445 = vld [vmem:[%s10] sm:$0x1]
  %v2447 = vperm.slane %v2445, 0
  %v2465 = vunpack.c.l.b16 %v2429
  %v2466 = vunpack.c.l.b16 %v2430
  %v2467 = vunpack.c.l.b16 %v2431
  %v2468 = vunpack.c.l.b16 %v2432
  %v2469 = vunpack.c.l.b16 %v2433
  %v2470 = vunpack.c.l.b16 %v2434
  %v2471 = vunpack.c.l.b16 %v2435
  %v2472 = vunpack.c.l.b16 %v2436
  %v2473 = vunpack.c.l.b16 %v2437
  %v2474 = vunpack.c.l.b16 %v2438
  %v2475 = vunpack.c.l.b16 %v2439
  %v2476 = vunpack.c.l.b16 %v2440
  %v2477 = vunpack.c.l.b16 %v2441
  %v2478 = vunpack.c.l.b16 %v2442
  %v2479 = vunpack.c.l.b16 %v2443
  %v2480 = vunpack.c.l.b16 %v2444
  %v2481 = vpack.c.b16 %v2466, %v2465
  %v2482 = vpack.c.b16 %v2468, %v2467
  %v2483 = vpack.c.b16 %v2470, %v2469
  %v2484 = vpack.c.b16 %v2472, %v2471
  %v2485 = vpack.c.b16 %v2474, %v2473
  %v2486 = vpack.c.b16 %v2476, %v2475
  %v2487 = vpack.c.b16 %v2478, %v2477
  %v2488 = vpack.c.b16 %v2480, %v2479
  %2497 = vmatpush.bf16.msra.mxu0 %v2488
  %2498 = vmatpush.bf16.msra.mxu0 %v2487
  %2499 = vmatpush.bf16.msra.mxu0 %v2486
  %2500 = vmatpush.bf16.msra.mxu0 %v2485
  %2501 = vmatpush.bf16.msra.mxu0 %v2484
  %2502 = vmatpush.bf16.msra.mxu0 %v2483
  %2503 = vmatpush.bf16.msra.mxu0 %v2482
  %2504 = vmatpush.bf16.msra.mxu0 %v2481
  %2505 = vmatmul.bf16.gmra.mxu0 %v2428
  %v2506 = vpop.f32.mrf.mxu0
  %v2507 = vadd.f32 %v2447, %v2506
  %v2508 = vpop.f32.mrf.mxu0
  %2509 = vdwg.mxu0
  %v2510 = vmax.f32 %v2507, 0.0
  %v2511 = vpack.c.bf16 %v2510, %v2510
  %v2512 = vld [vmem:[%s11] sm:$0xf]
  %v2513 = vld [vmem:[%s11 + $0x4] sm:$0xf]
  %v2514 = vld [vmem:[%s11 + $0x8] sm:$0xf]
  %v2515 = vld [vmem:[%s11 + $0xc] sm:$0xf]
  %v2516 = vld [vmem:[%s11 + $0x10] sm:$0xf]
  %v2517 = vld [vmem:[%s11 + $0x14] sm:$0xf]
  %v2518 = vld [vmem:[%s11 + $0x18] sm:$0xf]
  %v2519 = vld [vmem:[%s11 + $0x1c] sm:$0xf]
  %v2520 = vld [vmem:[%s11 + $0x20] sm:$0xf]
  %v2521 = vld [vmem:[%s11 + $0x24] sm:$0xf]
  %v2522 = vld [vmem:[%s11 + $0x28] sm:$0xf]
  %v2523 = vld [vmem:[%s11 + $0x2c] sm:$0xf]
  %v2524 = vld [vmem:[%s11 + $0x30] sm:$0xf]
  %v2525 = vld [vmem:[%s11 + $0x34] sm:$0xf]
  %v2526 = vld [vmem:[%s11 + $0x38] sm:$0xf]
  %v2527 = vld [vmem:[%s11 + $0x3c] sm:$0xf]
  %v2528 = vld [vmem:[%s12] sm:$0x1]
  %v2530 = vperm.slane %v2528, 0
  %v2548 = vunpack.c.l.b16 %v2512
  %v2549 = vunpack.c.l.b16 %v2513
  %v2550 = vunpack.c.l.b16 %v2514
  %v2551 = vunpack.c.l.b16 %v2515
  %v2552 = vunpack.c.l.b16 %v2516
  %v2553 = vunpack.c.l.b16 %v2517
  %v2554 = vunpack.c.l.b16 %v2518
  %v2555 = vunpack.c.l.b16 %v2519
  %v2556 = vunpack.c.l.b16 %v2520
  %v2557 = vunpack.c.l.b16 %v2521
  %v2558 = vunpack.c.l.b16 %v2522
  %v2559 = vunpack.c.l.b16 %v2523
  %v2560 = vunpack.c.l.b16 %v2524
  %v2561 = vunpack.c.l.b16 %v2525
  %v2562 = vunpack.c.l.b16 %v2526
  %v2563 = vunpack.c.l.b16 %v2527
  %v2564 = vpack.c.b16 %v2549, %v2548
  %v2565 = vpack.c.b16 %v2551, %v2550
  %v2566 = vpack.c.b16 %v2553, %v2552
  %v2567 = vpack.c.b16 %v2555, %v2554
  %v2568 = vpack.c.b16 %v2557, %v2556
  %v2569 = vpack.c.b16 %v2559, %v2558
  %v2570 = vpack.c.b16 %v2561, %v2560
  %v2571 = vpack.c.b16 %v2563, %v2562
  %2580 = vmatpush.bf16.msra.mxu0 %v2571
  %2581 = vmatpush.bf16.msra.mxu0 %v2570
  %2582 = vmatpush.bf16.msra.mxu0 %v2569
  %2583 = vmatpush.bf16.msra.mxu0 %v2568
  %2584 = vmatpush.bf16.msra.mxu0 %v2567
  %2585 = vmatpush.bf16.msra.mxu0 %v2566
  %2586 = vmatpush.bf16.msra.mxu0 %v2565
  %2587 = vmatpush.bf16.msra.mxu0 %v2564
  %2588 = vmatmul.bf16.gmra.mxu0 %v2511
  %v2589 = vpop.f32.mrf.mxu0
  %v2590 = vadd.f32 %v2530, %v2589
  %v2591 = vpop.f32.mrf.mxu0
  %2592 = vdwg.mxu0
  %2593 = vst [vmem:[%s13] sm:$0xff] %v2590
  // Predicated region
  $region54: #{gru_model_forward.1} parent=0 // pred_check
    _
  $region55: #{gru_model_forward.1} parent=0 // pred_check_branch
    %2595 = sbr.rel (0) target = $region57
  $region56: #{gru_model_forward.1} parent=0 // pred_region
    _
  $region57: #{gru_model_forward.1} parent=0 // pred_fallthru
    _
  // Predicated region
  $region58: #{gru_model_forward.1} parent=0 // pred_check
    _
  $region59: #{gru_model_forward.1} parent=0 // pred_check_branch
    %2597 = sbr.rel (0) target = $region61
  $region60: #{gru_model_forward.1} parent=0 // pred_region
    _
  $region61: #{gru_model_forward.1} parent=0 // pred_fallthru
    _

</llo_original>
